<compile_context>
chip_gen: v5e
topology: v5e:2x2
jax: 0.10.0
libtpu: 0.0.40
codegen_flags: <defaults>
</compile_context>

<pallas_src>
import functools

import jax
import jax.numpy as jnp
from jax import lax
from jax.experimental import pallas as pl
from jax.experimental.pallas import tpu as pltpu
import numpy as np

LANE = 128      # f32 lane tile
SUBLANE = 8     # f32 sublane tile


def _round_up(x, m):
    return ((x + m - 1) // m) * m


def _cdiv(a, b):
    return -(-a // b)


# ----------------------------------------------------------------------------
# Fused multi-layer GRU + FC kernel
# ----------------------------------------------------------------------------
def make_fused_kernel(L, Tc, B_blk, H_pad, O_pad, T_total, needs_mask, unroll):
    H3 = 3 * H_pad

    def kernel(x_ref, wih0_ref, wihr_ref, whh_ref, bihc_ref, bhhn_ref,
               wfc_ref, bfc_ref, out_ref, hfin_ref, h_scr, gx_scr, hchunk_scr):
        # Grid: (batch_block [parallel], time_chunk [arbitrary/sequential]).
        chunk = pl.program_id(1)

        @pl.when(chunk == 0)
        def _():
            h_scr[...] = jnp.zeros_like(h_scr)       # zero all layer carries

        for l in range(L):                            # static layer loop
            # ---- hoisted input projection for the whole chunk (MXU, bf16) --
            if l == 0:
                d_in = x_ref.shape[-1]
                xin = x_ref[...].reshape(Tc * B_blk, d_in).astype(jnp.bfloat16)
                w_in = wih0_ref[...]
            else:
                xin = hchunk_scr[...].reshape(Tc * B_blk, H_pad)
                xin = xin.astype(jnp.bfloat16)
                w_in = wihr_ref[l - 1]
            gx = jnp.dot(xin, w_in, preferred_element_type=jnp.float32)
            # b_ih (+ folded b_hh r/z slices) added once per chunk.
            gx_scr[...] = (gx + bihc_ref[l]).reshape(Tc, B_blk, H3)

            whh_l = whh_ref[l]            # (H_pad, 3H_pad) bf16, once / chunk
            bhn_l = bhhn_ref[l]           # (1, H_pad) f32 (n-gate b_hh slice)

            # ---- sequential recurrence: only h @ W_hh + gate math ----------
            def step(t, carry, l=l, whh_l=whh_l, bhn_l=bhn_l):
                h_prev = h_scr[l]                                # (B_blk, H_pad)
                gx_t = gx_scr[t]                                 # (B_blk, 3H_pad)
                gh = jnp.dot(h_prev.astype(jnp.bfloat16), whh_l,
                             preferred_element_type=jnp.float32)
                r = jax.nn.sigmoid(gx_t[:, 0:H_pad] + gh[:, 0:H_pad])
                z = jax.nn.sigmoid(gx_t[:, H_pad:2 * H_pad]
                                   + gh[:, H_pad:2 * H_pad])
                n = jnp.tanh(gx_t[:, 2 * H_pad:H3]
                             + r * (gh[:, 2 * H_pad:H3] + bhn_l))
                h_new = (1.0 - z) * n + z * h_prev
                if needs_mask:
                    # Padded tail time steps must not advance the carry.
                    h_new = jnp.where(chunk * Tc + t < T_total, h_new, h_prev)
                h_scr[l] = h_new
                hchunk_scr[t] = h_new
                return carry

            lax.fori_loop(0, Tc, step, 0, unroll=unroll)

        # Final hidden states written back once, on the last chunk only.
        @pl.when(chunk == pl.num_programs(1) - 1)
        def _():
            hfin_ref[...] = h_scr[...]

        # ---- fused FC + sigmoid epilogue on the whole chunk ----------------
        h2d = hchunk_scr[...].reshape(Tc * B_blk, H_pad).astype(jnp.bfloat16)
        logits = jnp.dot(h2d, wfc_ref[...],
                         preferred_element_type=jnp.float32) + bfc_ref[...]
        out_ref[...] = jax.nn.sigmoid(logits).reshape(Tc, B_blk, O_pad)

    return kernel


# ----------------------------------------------------------------------------
# Generation-aware VMEM budgeting for the time-chunk length Tc
# ----------------------------------------------------------------------------
def _vmem_capacity_bytes():
    try:
        info = pltpu.get_tpu_info()
        cap = getattr(info, "vmem_capacity_bytes", None)
        if cap:
            return int(cap)
    except Exception:
        pass
    return 64 * 1024 * 1024          # conservative (v7x-sized) fallback


def _choose_tc(T, B_blk, D0_pad, H_pad, O_pad, L, vmem_limit):
    H3 = 3 * H_pad
    Lr = max(L - 1, 1)
    # bf16 weights (default double-buffered by the pipeline) + f32 biases.
    w_bytes = 2 * (D0_pad * H3 + Lr * H_pad * H3 + L * H_pad * H3
                   + H_pad * O_pad)
    b_bytes = 4 * (L * H3 + L * H_pad + O_pad)
    fixed = 2 * (w_bytes + b_bytes)
    fixed += 4 * L * B_blk * H_pad * 2          # h_scr + hfin block
    fixed += 1 << 20                            # misc headroom
    # Per-time-step VMEM: x block (f32, 2 buf) + out block (f32, 2 buf)
    # + gx scratch (f32) + hchunk scratch (f32).
    per_t = B_blk * (2 * 4 * D0_pad + 2 * 4 * O_pad + 4 * H3 + 4 * H_pad)
    budget = int(vmem_limit * 0.8) - fixed
    tc = budget // per_t if per_t > 0 else max(T, 1)
    return int(max(1, min(tc, 1024, max(T, 1))))


# ----------------------------------------------------------------------------
# Parameter preparation (transpose + gate-major pad + bf16, off the hot path)
# ----------------------------------------------------------------------------
def prepare_params(params, input_size, hidden_dim, output_size):
    H = hidden_dim
    H_pad = _round_up(H, LANE)
    O_pad = _round_up(output_size, LANE)
    D0_pad = _round_up(input_size, LANE)
    L = len(params["gru_layers"])
    H3 = 3 * H_pad

    def pad_gate_cols(w_t, rows_pad):
        # w_t: (rows, 3H) -> (rows_pad, 3*H_pad), gate-major lane blocks.
        rows = w_t.shape[0]
        out = jnp.zeros((rows_pad, H3), jnp.float32)
        for g in range(3):
            out = out.at[:rows, g * H_pad:g * H_pad + H].set(
                w_t[:, g * H:(g + 1) * H])
        return out

    def pad_gate_vec(v):
        out = jnp.zeros((1, H3), jnp.float32)
        for g in range(3):
            out = out.at[0, g * H_pad:g * H_pad + H].set(v[g * H:(g + 1) * H])
        return out

    w_ih0 = None
    w_ihr, w_hh, b_ihc, b_hhn = [], [], [], []
    for l, lp in enumerate(params["gru_layers"]):
        rows_pad = D0_pad if l == 0 else H_pad
        w_ih_p = pad_gate_cols(jnp.transpose(lp["w_ih"]), rows_pad)
        if l == 0:
            w_ih0 = w_ih_p.astype(jnp.bfloat16)
        else:
            w_ihr.append(w_ih_p.astype(jnp.bfloat16))
        w_hh.append(pad_gate_cols(jnp.transpose(lp["w_hh"]),
                                  H_pad).astype(jnp.bfloat16))
        # Fold b_hh's r/z slices into b_ih; keep the n-gate slice separate
        # (it lives inside r * (W_hn h + b_hn)).
        b_comb = lp["b_ih"] + jnp.concatenate(
            [lp["b_hh"][:2 * H], jnp.zeros((H,), jnp.float32)])
        b_ihc.append(pad_gate_vec(b_comb))
        bn = jnp.zeros((1, H_pad), jnp.float32).at[0, :H].set(lp["b_hh"][2 * H:])
        b_hhn.append(bn)

    if L > 1:
        w_ihr = jnp.stack(w_ihr, 0)
    else:
        w_ihr = jnp.zeros((1, H_pad, H3), jnp.bfloat16)   # unused dummy
    w_hh = jnp.stack(w_hh, 0)            # (L, H_pad, 3H_pad) bf16
    b_ihc = jnp.stack(b_ihc, 0)          # (L, 1, 3H_pad)   f32
    b_hhn = jnp.stack(b_hhn, 0)          # (L, 1, H_pad)    f32

    w_fc = jnp.zeros((H_pad, O_pad), jnp.float32)
    w_fc = w_fc.at[:H, :output_size].set(
        jnp.transpose(params["w_fc"])).astype(jnp.bfloat16)
    b_fc = jnp.zeros((1, O_pad), jnp.float32)
    b_fc = b_fc.at[0, :output_size].set(params["b_fc"])

    return {"w_ih0": w_ih0, "w_ihr": w_ihr, "w_hh": w_hh,
            "b_ihc": b_ihc, "b_hhn": b_hhn, "w_fc": w_fc, "b_fc": b_fc,
            "hidden_dim": H, "output_size": output_size, "num_layers": L,
            "H_pad": H_pad, "O_pad": O_pad, "D0_pad": D0_pad}


# ----------------------------------------------------------------------------
# Forward pass (eval semantics of Time_GAN_module with rnn_type='gru')
# ----------------------------------------------------------------------------
def time_gan_module_forward(x, prepared):
    """x: (B, T, input_size) batch_first f32.

    Returns (out, hidden):
      out    : (B*T, output_size) sigmoid activations
      hidden : (num_layers, B, hidden_dim) final hidden states
    """
    # TODO(synk): nn.GRU dropout=0.5 between layers is train-mode only; this
    # reproduces eval/inference semantics (no dropout).
    B, T, D = x.shape
    H = prepared["hidden_dim"]
    O = prepared["output_size"]
    L = prepared["num_layers"]
    H_pad, O_pad, D0_pad = prepared["H_pad"], prepared["O_pad"], prepared["D0_pad"]
    H3 = 3 * H_pad

    # Batch padding + optional batch split ("parallel" axis for v7x's 2 TCs).
    B_pad = _round_up(max(B, SUBLANE), SUBLANE)
    nb = 2 if (B_pad >= 2 * SUBLANE and B_pad % (2 * SUBLANE) == 0) else 1
    B_blk = B_pad // nb

    # Generation-aware VMEM limit and Tc budget; balanced time chunking.
    vmem_cap = _vmem_capacity_bytes()
    vmem_limit = max(32 * 2**20, min(int(vmem_cap * 0.75), 100 * 2**20))
    Tc_max = _choose_tc(T, B_blk, D0_pad, H_pad, O_pad, L, vmem_limit)
    n_chunks = _cdiv(T, Tc_max)
    Tc = _cdiv(T, n_chunks)
    T_pad = Tc * n_chunks
    needs_mask = (T_pad != T)
    unroll = True if Tc <= 16 else 8

    # batch_first -> time-major, zero-padded to TPU-friendly tiles (f32;
    # cast to bf16 at the matmul inside the kernel).
    x_tm = jnp.transpose(x, (1, 0, 2)).astype(jnp.float32)
    x_pad = jnp.zeros((T_pad, B_pad, D0_pad), jnp.float32)
    x_pad = x_pad.at[:T, :B, :D].set(x_tm)

    Lr = max(L - 1, 1)
    cost = pl.CostEstimate(
        flops=int(2 * T_pad * B_pad * (D0_pad * H3 + (L - 1) * H_pad * H3
                                       + L * H_pad * H3 + H_pad * O_pad)),
        transcendentals=int(T_pad * B_pad * (3 * L * H_pad + O_pad)),
        bytes_accessed=int(4 * T_pad * B_pad * (D0_pad + O_pad)
                           + 2 * (D0_pad * H3 + Lr * H_pad * H3
                                  + L * H_pad * H3 + H_pad * O_pad)
                           + 4 * L * B_pad * H_pad))

    kernel = make_fused_kernel(L, Tc, B_blk, H_pad, O_pad, T, needs_mask,
                               unroll)

    out_pad, hfin = pl.pallas_call(
        kernel,
        out_shape=(jax.ShapeDtypeStruct((T_pad, B_pad, O_pad), jnp.float32),
                   jax.ShapeDtypeStruct((L, B_pad, H_pad), jnp.float32)),
        grid=(nb, n_chunks),
        in_specs=[
            pl.BlockSpec((Tc, B_blk, D0_pad), lambda b, c: (c, b, 0)),
            pl.BlockSpec((D0_pad, H3), lambda b, c: (0, 0)),
            pl.BlockSpec((Lr, H_pad, H3), lambda b, c: (0, 0, 0)),
            pl.BlockSpec((L, H_pad, H3), lambda b, c: (0, 0, 0)),
            pl.BlockSpec((L, 1, H3), lambda b, c: (0, 0, 0)),
            pl.BlockSpec((L, 1, H_pad), lambda b, c: (0, 0, 0)),
            pl.BlockSpec((H_pad, O_pad), lambda b, c: (0, 0)),
            pl.BlockSpec((1, O_pad), lambda b, c: (0, 0)),
        ],
        out_specs=(
            pl.BlockSpec((Tc, B_blk, O_pad), lambda b, c: (c, b, 0)),
            pl.BlockSpec((L, B_blk, H_pad), lambda b, c: (0, b, 0)),
        ),
        scratch_shapes=[
            pltpu.VMEM((L, B_blk, H_pad), jnp.float32),   # per-layer carry
            pltpu.VMEM((Tc, B_blk, H3), jnp.float32),     # hoisted x @ W_ih
            pltpu.VMEM((Tc, B_blk, H_pad), jnp.float32),  # chunk hidden seq
        ],
        compiler_params=pltpu.CompilerParams(
            dimension_semantics=("parallel", "arbitrary"),
            vmem_limit_bytes=int(vmem_limit)),
        cost_estimate=cost,
    )(x_pad, prepared["w_ih0"], prepared["w_ihr"], prepared["w_hh"],
      prepared["b_ihc"], prepared["b_hhn"], prepared["w_fc"], prepared["b_fc"])

    hidden = hfin[:, :B, :H]                                  # (L, B, H)
    # out.contiguous().view(-1, hidden_dim) with batch_first (B, T, *) order.
    out = jnp.transpose(out_pad[:T, :B, :O], (1, 0, 2)).reshape(B * T, O)
    return out, hidden


# ----------------------------------------------------------------------------
# Deterministic parameter construction (matches nn.GRU / nn.Linear shapes)
# ----------------------------------------------------------------------------
def init_params(key, input_size, hidden_dim, output_size, num_layers):
    k = 1.0 / np.sqrt(hidden_dim)
    layers = []
    for l in range(num_layers):
        d_in = input_size if l == 0 else hidden_dim
        key, k1, k2, k3, k4 = jax.random.split(key, 5)
        layers.append({
            "w_ih": jax.random.uniform(k1, (3 * hidden_dim, d_in),
                                       jnp.float32, -k, k),
            "w_hh": jax.random.uniform(k2, (3 * hidden_dim, hidden_dim),
                                       jnp.float32, -k, k),
            "b_ih": jax.random.uniform(k3, (3 * hidden_dim,),
                                       jnp.float32, -k, k),
            "b_hh": jax.random.uniform(k4, (3 * hidden_dim,),
                                       jnp.float32, -k, k),
        })
    key, k5, k6 = jax.random.split(key, 3)
    kf = 1.0 / np.sqrt(hidden_dim)
    return {
        "gru_layers": layers,
        "w_fc": jax.random.uniform(k5, (output_size, hidden_dim),
                                   jnp.float32, -kf, kf),
        "b_fc": jax.random.uniform(k6, (output_size,),
                                   jnp.float32, -kf, kf),
    }


# ----------------------------------------------------------------------------
# Pure-JAX f32 reference (for verification of the Pallas kernel)
# ----------------------------------------------------------------------------
def reference_forward(x, params):
    B, T, _ = x.shape
    seq = jnp.transpose(x, (1, 0, 2))
    finals = []
    for lp in params["gru_layers"]:
        H = lp["w_hh"].shape[1]
        wih_t, whh_t = lp["w_ih"].T, lp["w_hh"].T

        def step(h, x_t, wih_t=wih_t, whh_t=whh_t, lp=lp, H=H):
            gx = x_t @ wih_t + lp["b_ih"]
            gh = h @ whh_t + lp["b_hh"]
            r = jax.nn.sigmoid(gx[:, :H] + gh[:, :H])
            z = jax.nn.sigmoid(gx[:, H:2 * H] + gh[:, H:2 * H])
            n = jnp.tanh(gx[:, 2 * H:] + r * gh[:, 2 * H:])
            h_new = (1 - z) * n + z * h
            return h_new, h_new

        h0 = jnp.zeros((B, H), jnp.float32)
        hfin, seq = lax.scan(step, h0, seq)
        finals.append(hfin)
    hidden = jnp.stack(finals, 0)
    out_flat = jnp.transpose(seq, (1, 0, 2)).reshape(B * T, -1)
    out = jax.nn.sigmoid(out_flat @ params["w_fc"].T + params["b_fc"])
    return out, hidden


# ----------------------------------------------------------------------------
if __name__ == "__main__":
    B, T = 2, 8
    input_size, hidden_dim, output_size, num_layers = 4, 32, 4, 2

    key = jax.random.PRNGKey(0)
    key, kx = jax.random.split(key)
    x = jax.random.normal(kx, (B, T, input_size), jnp.float32)

    params = init_params(key, input_size, hidden_dim, output_size, num_layers)
    prepared = prepare_params(params, input_size, hidden_dim, output_size)

    fwd = jax.jit(functools.partial(time_gan_module_forward, prepared=prepared))
    out, hidden = fwd(x)
    jax.block_until_ready((out, hidden))

    out_ref, hidden_ref = reference_forward(x, params)
    assert out.shape == (B * T, output_size)
    assert hidden.shape == (num_layers, B, hidden_dim)
    # Tolerance loosened for bf16 matmul operands (f32 accumulation/gate math).
    np.testing.assert_allclose(np.asarray(out), np.asarray(out_ref),
                               rtol=3e-2, atol=3e-2)
    np.testing.assert_allclose(np.asarray(hidden), np.asarray(hidden_ref),
                               rtol=3e-2, atol=3e-2)

    print("KERNEL_OK")
</pallas_src>

<mosaic_0001>
module attributes {stable_mosaic.version = 11 : i64} {
  func.func @kernel(%arg0: i32, %arg1: i32, %arg2: memref<8x8x128xf32, #tpu.memory_space<vmem>>, %arg3: memref<128x384xbf16, #tpu.memory_space<vmem>>, %arg4: memref<1x128x384xbf16, #tpu.memory_space<vmem>>, %arg5: memref<2x128x384xbf16, #tpu.memory_space<vmem>>, %arg6: memref<2x1x384xf32, #tpu.memory_space<vmem>>, %arg7: memref<2x1x128xf32, #tpu.memory_space<vmem>>, %arg8: memref<128x128xbf16, #tpu.memory_space<vmem>>, %arg9: memref<1x128xf32, #tpu.memory_space<vmem>>, %arg10: memref<8x8x128xf32, #tpu.memory_space<vmem>>, %arg11: memref<2x8x128xf32, #tpu.memory_space<vmem>>, %arg12: memref<2x8x128xf32, #tpu.memory_space<vmem>>, %arg13: memref<8x8x384xf32, #tpu.memory_space<vmem>>, %arg14: memref<8x8x128xf32, #tpu.memory_space<vmem>>) attributes {dimension_semantics = [#tpu.dimension_semantics<parallel>, #tpu.dimension_semantics<arbitrary>], iteration_bounds = array<i64: 1, 1>, scalar_prefetch = 0 : i64, scratch_operands = 3 : i64, tpu.core_type = #tpu.core_type<tc>, window_params = [{transform_indices = @transform_0, window_bounds = array<i64: 8, 8, 128>}, {pipeline_mode = #tpu.pipeline_mode<synchronous>, transform_indices = @transform_1, window_bounds = array<i64: 128, 384>}, {pipeline_mode = #tpu.pipeline_mode<synchronous>, transform_indices = @transform_2, window_bounds = array<i64: 1, 128, 384>}, {pipeline_mode = #tpu.pipeline_mode<synchronous>, transform_indices = @transform_3, window_bounds = array<i64: 2, 128, 384>}, {pipeline_mode = #tpu.pipeline_mode<synchronous>, transform_indices = @transform_4, window_bounds = array<i64: 2, 1, 384>}, {pipeline_mode = #tpu.pipeline_mode<synchronous>, transform_indices = @transform_5, window_bounds = array<i64: 2, 1, 128>}, {pipeline_mode = #tpu.pipeline_mode<synchronous>, transform_indices = @transform_6, window_bounds = array<i64: 128, 128>}, {pipeline_mode = #tpu.pipeline_mode<synchronous>, transform_indices = @transform_7, window_bounds = array<i64: 1, 128>}, {transform_indices = @transform_8, window_bounds = array<i64: 8, 8, 128>}, {transform_indices = @transform_9, window_bounds = array<i64: 2, 8, 128>}]} {
    %c0_i32 = arith.constant 0 : i32
    %0 = arith.cmpi eq, %arg1, %c0_i32 : i32
    %1 = arith.extui %0 : i1 to i32
    %c0_i32_0 = arith.constant 0 : i32
    %2 = arith.cmpi ne, %1, %c0_i32_0 : i32
    scf.if %2 {
      %cst_283 = arith.constant 0.000000e+00 : f32
      %724 = vector.broadcast %cst_283 : f32 to vector<2x8x128xf32>
      %c0_284 = arith.constant 0 : index
      %c0_285 = arith.constant 0 : index
      %c0_286 = arith.constant 0 : index
      %725 = vector.load %arg12[%c0_284, %c0_285, %c0_286] : memref<2x8x128xf32, #tpu.memory_space<vmem>>, vector<2x8x128xf32>
      tpu.vector_store %arg12[%c0_284, %c0_285, %c0_286], %724 {strides = array<i32>} : memref<2x8x128xf32, #tpu.memory_space<vmem>>, vector<2x8x128xf32>,
    } else {
    }
    %c0 = arith.constant 0 : index
    %c0_1 = arith.constant 0 : index
    %c0_2 = arith.constant 0 : index
    %3 = vector.load %arg2[%c0, %c0_1, %c0_2] : memref<8x8x128xf32, #tpu.memory_space<vmem>>, vector<8x8x128xf32>
    %4 = vector.shape_cast %3 : vector<8x8x128xf32> to vector<64x128xf32>
    %5 = arith.truncf %4 : vector<64x128xf32> to vector<64x128xbf16>
    %c0_3 = arith.constant 0 : index
    %c0_4 = arith.constant 0 : index
    %6 = vector.load %arg3[%c0_3, %c0_4] : memref<128x384xbf16, #tpu.memory_space<vmem>>, vector<128x384xbf16>
    %cst = arith.constant dense<0.000000e+00> : vector<64x384xf32>
    %7 = tpu.matmul %5, %6, %cst {dimension_numbers = #tpu.dot_dimension_numbers<[1], [0], [0], [1], [0, 0, 1, 1], [], []>} : vector<64x128xbf16>, vector<128x384xbf16>, vector<64x384xf32> -> vector<64x384xf32>
    %c0_5 = arith.constant 0 : index
    %c0_6 = arith.constant 0 : index
    %c0_7 = arith.constant 0 : index
    %8 = vector.load %arg6[%c0_5, %c0_6, %c0_7] : memref<2x1x384xf32, #tpu.memory_space<vmem>>, vector<1x1x384xf32>
    %9 = vector.shape_cast %8 : vector<1x1x384xf32> to vector<1x384xf32>
    %10 = vector.broadcast %9 : vector<1x384xf32> to vector<64x384xf32>
    %11 = arith.addf %7, %10 : vector<64x384xf32>
    %12 = vector.shape_cast %11 : vector<64x384xf32> to vector<8x8x384xf32>
    %c0_8 = arith.constant 0 : index
    %c0_9 = arith.constant 0 : index
    %c0_10 = arith.constant 0 : index
    %13 = vector.load %arg13[%c0_8, %c0_9, %c0_10] : memref<8x8x384xf32, #tpu.memory_space<vmem>>, vector<8x8x384xf32>
    tpu.vector_store %arg13[%c0_8, %c0_9, %c0_10], %12 {strides = array<i32>} : memref<8x8x384xf32, #tpu.memory_space<vmem>>, vector<8x8x384xf32>,
    %c0_11 = arith.constant 0 : index
    %c0_12 = arith.constant 0 : index
    %c0_13 = arith.constant 0 : index
    %14 = vector.load %arg5[%c0_11, %c0_12, %c0_13] : memref<2x128x384xbf16, #tpu.memory_space<vmem>>, vector<1x128x384xbf16>
    %15 = vector.shape_cast %14 : vector<1x128x384xbf16> to vector<128x384xbf16>
    %c0_14 = arith.constant 0 : index
    %c0_15 = arith.constant 0 : index
    %c0_16 = arith.constant 0 : index
    %16 = vector.load %arg7[%c0_14, %c0_15, %c0_16] : memref<2x1x128xf32, #tpu.memory_space<vmem>>, vector<1x1x128xf32>
    %17 = vector.shape_cast %16 : vector<1x1x128xf32> to vector<1x128xf32>
    %c0_i32_17 = arith.constant 0 : i32
    %c0_18 = arith.constant 0 : index
    %c0_19 = arith.constant 0 : index
    %c0_20 = arith.constant 0 : index
    %18 = vector.load %arg12[%c0_18, %c0_19, %c0_20] : memref<2x8x128xf32, #tpu.memory_space<vmem>>, vector<1x8x128xf32>
    %19 = vector.shape_cast %18 : vector<1x8x128xf32> to vector<8x128xf32>
    %20 = arith.index_cast %c0_i32_17 : i32 to index
    %c0_21 = arith.constant 0 : index
    %c0_22 = arith.constant 0 : index
    %21 = vector.load %arg13[%20, %c0_21, %c0_22] : memref<8x8x384xf32, #tpu.memory_space<vmem>>, vector<1x8x384xf32>
    %22 = vector.shape_cast %21 : vector<1x8x384xf32> to vector<8x384xf32>
    %23 = arith.truncf %19 : vector<8x128xf32> to vector<8x128xbf16>
    %cst_23 = arith.constant dense<0.000000e+00> : vector<8x384xf32>
    %24 = tpu.matmul %23, %15, %cst_23 {dimension_numbers = #tpu.dot_dimension_numbers<[1], [0], [0], [1], [0, 0, 1, 1], [], []>} : vector<8x128xbf16>, vector<128x384xbf16>, vector<8x384xf32> -> vector<8x384xf32>
    %25 = vector.extract_strided_slice %22 {offsets = [0, 0], sizes = [8, 128], strides = [1, 1]} : vector<8x384xf32> to vector<8x128xf32>
    %26 = vector.extract_strided_slice %24 {offsets = [0, 0], sizes = [8, 128], strides = [1, 1]} : vector<8x384xf32> to vector<8x128xf32>
    %27 = arith.addf %25, %26 : vector<8x128xf32>
    %28 = arith.negf %27 : vector<8x128xf32>
    %29 = math.exp %28 : vector<8x128xf32>
    %cst_24 = arith.constant 1.000000e+00 : f32
    %30 = vector.broadcast %cst_24 : f32 to vector<8x128xf32>
    %31 = arith.addf %30, %29 : vector<8x128xf32>
    %32 = arith.divf %30, %31 : vector<8x128xf32>
    %33 = vector.extract_strided_slice %22 {offsets = [0, 128], sizes = [8, 128], strides = [1, 1]} : vector<8x384xf32> to vector<8x128xf32>
    %34 = vector.extract_strided_slice %24 {offsets = [0, 128], sizes = [8, 128], strides = [1, 1]} : vector<8x384xf32> to vector<8x128xf32>
    %35 = arith.addf %33, %34 : vector<8x128xf32>
    %36 = arith.negf %35 : vector<8x128xf32>
    %37 = math.exp %36 : vector<8x128xf32>
    %cst_25 = arith.constant 1.000000e+00 : f32
    %38 = vector.broadcast %cst_25 : f32 to vector<8x128xf32>
    %39 = arith.addf %38, %37 : vector<8x128xf32>
    %40 = arith.divf %38, %39 : vector<8x128xf32>
    %41 = vector.extract_strided_slice %22 {offsets = [0, 256], sizes = [8, 128], strides = [1, 1]} : vector<8x384xf32> to vector<8x128xf32>
    %42 = vector.extract_strided_slice %24 {offsets = [0, 256], sizes = [8, 128], strides = [1, 1]} : vector<8x384xf32> to vector<8x128xf32>
    %43 = vector.broadcast %17 : vector<1x128xf32> to vector<8x128xf32>
    %44 = arith.addf %42, %43 : vector<8x128xf32>
    %45 = arith.mulf %32, %44 : vector<8x128xf32>
    %46 = arith.addf %41, %45 : vector<8x128xf32>
    %47 = math.tanh %46 : vector<8x128xf32>
    %cst_26 = arith.constant 1.000000e+00 : f32
    %48 = vector.broadcast %cst_26 : f32 to vector<8x128xf32>
    %49 = arith.subf %48, %40 : vector<8x128xf32>
    %50 = arith.mulf %49, %47 : vector<8x128xf32>
    %51 = arith.mulf %40, %19 : vector<8x128xf32>
    %52 = arith.addf %50, %51 : vector<8x128xf32>
    %c0_27 = arith.constant 0 : index
    %c0_28 = arith.constant 0 : index
    %c0_29 = arith.constant 0 : index
    %53 = vector.load %arg12[%c0_27, %c0_28, %c0_29] : memref<2x8x128xf32, #tpu.memory_space<vmem>>, vector<1x8x128xf32>
    %54 = vector.shape_cast %53 : vector<1x8x128xf32> to vector<8x128xf32>
    %55 = vector.shape_cast %52 : vector<8x128xf32> to vector<1x8x128xf32>
    tpu.vector_store %arg12[%c0_27, %c0_28, %c0_29], %55 {strides = array<i32>} : memref<2x8x128xf32, #tpu.memory_space<vmem>>, vector<1x8x128xf32>,
    %56 = arith.index_cast %c0_i32_17 : i32 to index
    %c0_30 = arith.constant 0 : index
    %c0_31 = arith.constant 0 : index
    %57 = vector.load %arg14[%56, %c0_30, %c0_31] : memref<8x8x128xf32, #tpu.memory_space<vmem>>, vector<1x8x128xf32>
    %58 = vector.shape_cast %57 : vector<1x8x128xf32> to vector<8x128xf32>
    %59 = vector.shape_cast %52 : vector<8x128xf32> to vector<1x8x128xf32>
    tpu.vector_store %arg14[%56, %c0_30, %c0_31], %59 {strides = array<i32>} : memref<8x8x128xf32, #tpu.memory_space<vmem>>, vector<1x8x128xf32>,
    %c1_i32 = arith.constant 1 : i32
    %c0_32 = arith.constant 0 : index
    %c0_33 = arith.constant 0 : index
    %c0_34 = arith.constant 0 : index
    %60 = vector.load %arg12[%c0_32, %c0_33, %c0_34] : memref<2x8x128xf32, #tpu.memory_space<vmem>>, vector<1x8x128xf32>
    %61 = vector.shape_cast %60 : vector<1x8x128xf32> to vector<8x128xf32>
    %62 = arith.index_cast %c1_i32 : i32 to index
    %c0_35 = arith.constant 0 : index
    %c0_36 = arith.constant 0 : index
    %63 = vector.load %arg13[%62, %c0_35, %c0_36] : memref<8x8x384xf32, #tpu.memory_space<vmem>>, vector<1x8x384xf32>
    %64 = vector.shape_cast %63 : vector<1x8x384xf32> to vector<8x384xf32>
    %65 = arith.truncf %61 : vector<8x128xf32> to vector<8x128xbf16>
    %cst_37 = arith.constant dense<0.000000e+00> : vector<8x384xf32>
    %66 = tpu.matmul %65, %15, %cst_37 {dimension_numbers = #tpu.dot_dimension_numbers<[1], [0], [0], [1], [0, 0, 1, 1], [], []>} : vector<8x128xbf16>, vector<128x384xbf16>, vector<8x384xf32> -> vector<8x384xf32>
    %67 = vector.extract_strided_slice %64 {offsets = [0, 0], sizes = [8, 128], strides = [1, 1]} : vector<8x384xf32> to vector<8x128xf32>
    %68 = vector.extract_strided_slice %66 {offsets = [0, 0], sizes = [8, 128], strides = [1, 1]} : vector<8x384xf32> to vector<8x128xf32>
    %69 = arith.addf %67, %68 : vector<8x128xf32>
    %70 = arith.negf %69 : vector<8x128xf32>
    %71 = math.exp %70 : vector<8x128xf32>
    %cst_38 = arith.constant 1.000000e+00 : f32
    %72 = vector.broadcast %cst_38 : f32 to vector<8x128xf32>
    %73 = arith.addf %72, %71 : vector<8x128xf32>
    %74 = arith.divf %72, %73 : vector<8x128xf32>
    %75 = vector.extract_strided_slice %64 {offsets = [0, 128], sizes = [8, 128], strides = [1, 1]} : vector<8x384xf32> to vector<8x128xf32>
    %76 = vector.extract_strided_slice %66 {offsets = [0, 128], sizes = [8, 128], strides = [1, 1]} : vector<8x384xf32> to vector<8x128xf32>
    %77 = arith.addf %75, %76 : vector<8x128xf32>
    %78 = arith.negf %77 : vector<8x128xf32>
    %79 = math.exp %78 : vector<8x128xf32>
    %cst_39 = arith.constant 1.000000e+00 : f32
    %80 = vector.broadcast %cst_39 : f32 to vector<8x128xf32>
    %81 = arith.addf %80, %79 : vector<8x128xf32>
    %82 = arith.divf %80, %81 : vector<8x128xf32>
    %83 = vector.extract_strided_slice %64 {offsets = [0, 256], sizes = [8, 128], strides = [1, 1]} : vector<8x384xf32> to vector<8x128xf32>
    %84 = vector.extract_strided_slice %66 {offsets = [0, 256], sizes = [8, 128], strides = [1, 1]} : vector<8x384xf32> to vector<8x128xf32>
    %85 = vector.broadcast %17 : vector<1x128xf32> to vector<8x128xf32>
    %86 = arith.addf %84, %85 : vector<8x128xf32>
    %87 = arith.mulf %74, %86 : vector<8x128xf32>
    %88 = arith.addf %83, %87 : vector<8x128xf32>
    %89 = math.tanh %88 : vector<8x128xf32>
    %cst_40 = arith.constant 1.000000e+00 : f32
    %90 = vector.broadcast %cst_40 : f32 to vector<8x128xf32>
    %91 = arith.subf %90, %82 : vector<8x128xf32>
    %92 = arith.mulf %91, %89 : vector<8x128xf32>
    %93 = arith.mulf %82, %61 : vector<8x128xf32>
    %94 = arith.addf %92, %93 : vector<8x128xf32>
    %c0_41 = arith.constant 0 : index
    %c0_42 = arith.constant 0 : index
    %c0_43 = arith.constant 0 : index
    %95 = vector.load %arg12[%c0_41, %c0_42, %c0_43] : memref<2x8x128xf32, #tpu.memory_space<vmem>>, vector<1x8x128xf32>
    %96 = vector.shape_cast %95 : vector<1x8x128xf32> to vector<8x128xf32>
    %97 = vector.shape_cast %94 : vector<8x128xf32> to vector<1x8x128xf32>
    tpu.vector_store %arg12[%c0_41, %c0_42, %c0_43], %97 {strides = array<i32>} : memref<2x8x128xf32, #tpu.memory_space<vmem>>, vector<1x8x128xf32>,
    %98 = arith.index_cast %c1_i32 : i32 to index
    %c0_44 = arith.constant 0 : index
    %c0_45 = arith.constant 0 : index
    %99 = vector.load %arg14[%98, %c0_44, %c0_45] : memref<8x8x128xf32, #tpu.memory_space<vmem>>, vector<1x8x128xf32>
    %100 = vector.shape_cast %99 : vector<1x8x128xf32> to vector<8x128xf32>
    %101 = vector.shape_cast %94 : vector<8x128xf32> to vector<1x8x128xf32>
    tpu.vector_store %arg14[%98, %c0_44, %c0_45], %101 {strides = array<i32>} : memref<8x8x128xf32, #tpu.memory_space<vmem>>, vector<1x8x128xf32>,
    %c2_i32 = arith.constant 2 : i32
    %c0_46 = arith.constant 0 : index
    %c0_47 = arith.constant 0 : index
    %c0_48 = arith.constant 0 : index
    %102 = vector.load %arg12[%c0_46, %c0_47, %c0_48] : memref<2x8x128xf32, #tpu.memory_space<vmem>>, vector<1x8x128xf32>
    %103 = vector.shape_cast %102 : vector<1x8x128xf32> to vector<8x128xf32>
    %104 = arith.index_cast %c2_i32 : i32 to index
    %c0_49 = arith.constant 0 : index
    %c0_50 = arith.constant 0 : index
    %105 = vector.load %arg13[%104, %c0_49, %c0_50] : memref<8x8x384xf32, #tpu.memory_space<vmem>>, vector<1x8x384xf32>
    %106 = vector.shape_cast %105 : vector<1x8x384xf32> to vector<8x384xf32>
    %107 = arith.truncf %103 : vector<8x128xf32> to vector<8x128xbf16>
    %cst_51 = arith.constant dense<0.000000e+00> : vector<8x384xf32>
    %108 = tpu.matmul %107, %15, %cst_51 {dimension_numbers = #tpu.dot_dimension_numbers<[1], [0], [0], [1], [0, 0, 1, 1], [], []>} : vector<8x128xbf16>, vector<128x384xbf16>, vector<8x384xf32> -> vector<8x384xf32>
    %109 = vector.extract_strided_slice %106 {offsets = [0, 0], sizes = [8, 128], strides = [1, 1]} : vector<8x384xf32> to vector<8x128xf32>
    %110 = vector.extract_strided_slice %108 {offsets = [0, 0], sizes = [8, 128], strides = [1, 1]} : vector<8x384xf32> to vector<8x128xf32>
    %111 = arith.addf %109, %110 : vector<8x128xf32>
    %112 = arith.negf %111 : vector<8x128xf32>
    %113 = math.exp %112 : vector<8x128xf32>
    %cst_52 = arith.constant 1.000000e+00 : f32
    %114 = vector.broadcast %cst_52 : f32 to vector<8x128xf32>
    %115 = arith.addf %114, %113 : vector<8x128xf32>
    %116 = arith.divf %114, %115 : vector<8x128xf32>
    %117 = vector.extract_strided_slice %106 {offsets = [0, 128], sizes = [8, 128], strides = [1, 1]} : vector<8x384xf32> to vector<8x128xf32>
    %118 = vector.extract_strided_slice %108 {offsets = [0, 128], sizes = [8, 128], strides = [1, 1]} : vector<8x384xf32> to vector<8x128xf32>
    %119 = arith.addf %117, %118 : vector<8x128xf32>
    %120 = arith.negf %119 : vector<8x128xf32>
    %121 = math.exp %120 : vector<8x128xf32>
    %cst_53 = arith.constant 1.000000e+00 : f32
    %122 = vector.broadcast %cst_53 : f32 to vector<8x128xf32>
    %123 = arith.addf %122, %121 : vector<8x128xf32>
    %124 = arith.divf %122, %123 : vector<8x128xf32>
    %125 = vector.extract_strided_slice %106 {offsets = [0, 256], sizes = [8, 128], strides = [1, 1]} : vector<8x384xf32> to vector<8x128xf32>
    %126 = vector.extract_strided_slice %108 {offsets = [0, 256], sizes = [8, 128], strides = [1, 1]} : vector<8x384xf32> to vector<8x128xf32>
    %127 = vector.broadcast %17 : vector<1x128xf32> to vector<8x128xf32>
    %128 = arith.addf %126, %127 : vector<8x128xf32>
    %129 = arith.mulf %116, %128 : vector<8x128xf32>
    %130 = arith.addf %125, %129 : vector<8x128xf32>
    %131 = math.tanh %130 : vector<8x128xf32>
    %cst_54 = arith.constant 1.000000e+00 : f32
    %132 = vector.broadcast %cst_54 : f32 to vector<8x128xf32>
    %133 = arith.subf %132, %124 : vector<8x128xf32>
    %134 = arith.mulf %133, %131 : vector<8x128xf32>
    %135 = arith.mulf %124, %103 : vector<8x128xf32>
    %136 = arith.addf %134, %135 : vector<8x128xf32>
    %c0_55 = arith.constant 0 : index
    %c0_56 = arith.constant 0 : index
    %c0_57 = arith.constant 0 : index
    %137 = vector.load %arg12[%c0_55, %c0_56, %c0_57] : memref<2x8x128xf32, #tpu.memory_space<vmem>>, vector<1x8x128xf32>
    %138 = vector.shape_cast %137 : vector<1x8x128xf32> to vector<8x128xf32>
    %139 = vector.shape_cast %136 : vector<8x128xf32> to vector<1x8x128xf32>
    tpu.vector_store %arg12[%c0_55, %c0_56, %c0_57], %139 {strides = array<i32>} : memref<2x8x128xf32, #tpu.memory_space<vmem>>, vector<1x8x128xf32>,
    %140 = arith.index_cast %c2_i32 : i32 to index
    %c0_58 = arith.constant 0 : index
    %c0_59 = arith.constant 0 : index
    %141 = vector.load %arg14[%140, %c0_58, %c0_59] : memref<8x8x128xf32, #tpu.memory_space<vmem>>, vector<1x8x128xf32>
    %142 = vector.shape_cast %141 : vector<1x8x128xf32> to vector<8x128xf32>
    %143 = vector.shape_cast %136 : vector<8x128xf32> to vector<1x8x128xf32>
    tpu.vector_store %arg14[%140, %c0_58, %c0_59], %143 {strides = array<i32>} : memref<8x8x128xf32, #tpu.memory_space<vmem>>, vector<1x8x128xf32>,
    %c3_i32 = arith.constant 3 : i32
    %c0_60 = arith.constant 0 : index
    %c0_61 = arith.constant 0 : index
    %c0_62 = arith.constant 0 : index
    %144 = vector.load %arg12[%c0_60, %c0_61, %c0_62] : memref<2x8x128xf32, #tpu.memory_space<vmem>>, vector<1x8x128xf32>
    %145 = vector.shape_cast %144 : vector<1x8x128xf32> to vector<8x128xf32>
    %146 = arith.index_cast %c3_i32 : i32 to index
    %c0_63 = arith.constant 0 : index
    %c0_64 = arith.constant 0 : index
    %147 = vector.load %arg13[%146, %c0_63, %c0_64] : memref<8x8x384xf32, #tpu.memory_space<vmem>>, vector<1x8x384xf32>
    %148 = vector.shape_cast %147 : vector<1x8x384xf32> to vector<8x384xf32>
    %149 = arith.truncf %145 : vector<8x128xf32> to vector<8x128xbf16>
    %cst_65 = arith.constant dense<0.000000e+00> : vector<8x384xf32>
    %150 = tpu.matmul %149, %15, %cst_65 {dimension_numbers = #tpu.dot_dimension_numbers<[1], [0], [0], [1], [0, 0, 1, 1], [], []>} : vector<8x128xbf16>, vector<128x384xbf16>, vector<8x384xf32> -> vector<8x384xf32>
    %151 = vector.extract_strided_slice %148 {offsets = [0, 0], sizes = [8, 128], strides = [1, 1]} : vector<8x384xf32> to vector<8x128xf32>
    %152 = vector.extract_strided_slice %150 {offsets = [0, 0], sizes = [8, 128], strides = [1, 1]} : vector<8x384xf32> to vector<8x128xf32>
    %153 = arith.addf %151, %152 : vector<8x128xf32>
    %154 = arith.negf %153 : vector<8x128xf32>
    %155 = math.exp %154 : vector<8x128xf32>
    %cst_66 = arith.constant 1.000000e+00 : f32
    %156 = vector.broadcast %cst_66 : f32 to vector<8x128xf32>
    %157 = arith.addf %156, %155 : vector<8x128xf32>
    %158 = arith.divf %156, %157 : vector<8x128xf32>
    %159 = vector.extract_strided_slice %148 {offsets = [0, 128], sizes = [8, 128], strides = [1, 1]} : vector<8x384xf32> to vector<8x128xf32>
    %160 = vector.extract_strided_slice %150 {offsets = [0, 128], sizes = [8, 128], strides = [1, 1]} : vector<8x384xf32> to vector<8x128xf32>
    %161 = arith.addf %159, %160 : vector<8x128xf32>
    %162 = arith.negf %161 : vector<8x128xf32>
    %163 = math.exp %162 : vector<8x128xf32>
    %cst_67 = arith.constant 1.000000e+00 : f32
    %164 = vector.broadcast %cst_67 : f32 to vector<8x128xf32>
    %165 = arith.addf %164, %163 : vector<8x128xf32>
    %166 = arith.divf %164, %165 : vector<8x128xf32>
    %167 = vector.extract_strided_slice %148 {offsets = [0, 256], sizes = [8, 128], strides = [1, 1]} : vector<8x384xf32> to vector<8x128xf32>
    %168 = vector.extract_strided_slice %150 {offsets = [0, 256], sizes = [8, 128], strides = [1, 1]} : vector<8x384xf32> to vector<8x128xf32>
    %169 = vector.broadcast %17 : vector<1x128xf32> to vector<8x128xf32>
    %170 = arith.addf %168, %169 : vector<8x128xf32>
    %171 = arith.mulf %158, %170 : vector<8x128xf32>
    %172 = arith.addf %167, %171 : vector<8x128xf32>
    %173 = math.tanh %172 : vector<8x128xf32>
    %cst_68 = arith.constant 1.000000e+00 : f32
    %174 = vector.broadcast %cst_68 : f32 to vector<8x128xf32>
    %175 = arith.subf %174, %166 : vector<8x128xf32>
    %176 = arith.mulf %175, %173 : vector<8x128xf32>
    %177 = arith.mulf %166, %145 : vector<8x128xf32>
    %178 = arith.addf %176, %177 : vector<8x128xf32>
    %c0_69 = arith.constant 0 : index
    %c0_70 = arith.constant 0 : index
    %c0_71 = arith.constant 0 : index
    %179 = vector.load %arg12[%c0_69, %c0_70, %c0_71] : memref<2x8x128xf32, #tpu.memory_space<vmem>>, vector<1x8x128xf32>
    %180 = vector.shape_cast %179 : vector<1x8x128xf32> to vector<8x128xf32>
    %181 = vector.shape_cast %178 : vector<8x128xf32> to vector<1x8x128xf32>
    tpu.vector_store %arg12[%c0_69, %c0_70, %c0_71], %181 {strides = array<i32>} : memref<2x8x128xf32, #tpu.memory_space<vmem>>, vector<1x8x128xf32>,
    %182 = arith.index_cast %c3_i32 : i32 to index
    %c0_72 = arith.constant 0 : index
    %c0_73 = arith.constant 0 : index
    %183 = vector.load %arg14[%182, %c0_72, %c0_73] : memref<8x8x128xf32, #tpu.memory_space<vmem>>, vector<1x8x128xf32>
    %184 = vector.shape_cast %183 : vector<1x8x128xf32> to vector<8x128xf32>
    %185 = vector.shape_cast %178 : vector<8x128xf32> to vector<1x8x128xf32>
    tpu.vector_store %arg14[%182, %c0_72, %c0_73], %185 {strides = array<i32>} : memref<8x8x128xf32, #tpu.memory_space<vmem>>, vector<1x8x128xf32>,
    %c4_i32 = arith.constant 4 : i32
    %c0_74 = arith.constant 0 : index
    %c0_75 = arith.constant 0 : index
    %c0_76 = arith.constant 0 : index
    %186 = vector.load %arg12[%c0_74, %c0_75, %c0_76] : memref<2x8x128xf32, #tpu.memory_space<vmem>>, vector<1x8x128xf32>
    %187 = vector.shape_cast %186 : vector<1x8x128xf32> to vector<8x128xf32>
    %188 = arith.index_cast %c4_i32 : i32 to index
    %c0_77 = arith.constant 0 : index
    %c0_78 = arith.constant 0 : index
    %189 = vector.load %arg13[%188, %c0_77, %c0_78] : memref<8x8x384xf32, #tpu.memory_space<vmem>>, vector<1x8x384xf32>
    %190 = vector.shape_cast %189 : vector<1x8x384xf32> to vector<8x384xf32>
    %191 = arith.truncf %187 : vector<8x128xf32> to vector<8x128xbf16>
    %cst_79 = arith.constant dense<0.000000e+00> : vector<8x384xf32>
    %192 = tpu.matmul %191, %15, %cst_79 {dimension_numbers = #tpu.dot_dimension_numbers<[1], [0], [0], [1], [0, 0, 1, 1], [], []>} : vector<8x128xbf16>, vector<128x384xbf16>, vector<8x384xf32> -> vector<8x384xf32>
    %193 = vector.extract_strided_slice %190 {offsets = [0, 0], sizes = [8, 128], strides = [1, 1]} : vector<8x384xf32> to vector<8x128xf32>
    %194 = vector.extract_strided_slice %192 {offsets = [0, 0], sizes = [8, 128], strides = [1, 1]} : vector<8x384xf32> to vector<8x128xf32>
    %195 = arith.addf %193, %194 : vector<8x128xf32>
    %196 = arith.negf %195 : vector<8x128xf32>
    %197 = math.exp %196 : vector<8x128xf32>
    %cst_80 = arith.constant 1.000000e+00 : f32
    %198 = vector.broadcast %cst_80 : f32 to vector<8x128xf32>
    %199 = arith.addf %198, %197 : vector<8x128xf32>
    %200 = arith.divf %198, %199 : vector<8x128xf32>
    %201 = vector.extract_strided_slice %190 {offsets = [0, 128], sizes = [8, 128], strides = [1, 1]} : vector<8x384xf32> to vector<8x128xf32>
    %202 = vector.extract_strided_slice %192 {offsets = [0, 128], sizes = [8, 128], strides = [1, 1]} : vector<8x384xf32> to vector<8x128xf32>
    %203 = arith.addf %201, %202 : vector<8x128xf32>
    %204 = arith.negf %203 : vector<8x128xf32>
    %205 = math.exp %204 : vector<8x128xf32>
    %cst_81 = arith.constant 1.000000e+00 : f32
    %206 = vector.broadcast %cst_81 : f32 to vector<8x128xf32>
    %207 = arith.addf %206, %205 : vector<8x128xf32>
    %208 = arith.divf %206, %207 : vector<8x128xf32>
    %209 = vector.extract_strided_slice %190 {offsets = [0, 256], sizes = [8, 128], strides = [1, 1]} : vector<8x384xf32> to vector<8x128xf32>
    %210 = vector.extract_strided_slice %192 {offsets = [0, 256], sizes = [8, 128], strides = [1, 1]} : vector<8x384xf32> to vector<8x128xf32>
    %211 = vector.broadcast %17 : vector<1x128xf32> to vector<8x128xf32>
    %212 = arith.addf %210, %211 : vector<8x128xf32>
    %213 = arith.mulf %200, %212 : vector<8x128xf32>
    %214 = arith.addf %209, %213 : vector<8x128xf32>
    %215 = math.tanh %214 : vector<8x128xf32>
    %cst_82 = arith.constant 1.000000e+00 : f32
    %216 = vector.broadcast %cst_82 : f32 to vector<8x128xf32>
    %217 = arith.subf %216, %208 : vector<8x128xf32>
    %218 = arith.mulf %217, %215 : vector<8x128xf32>
    %219 = arith.mulf %208, %187 : vector<8x128xf32>
    %220 = arith.addf %218, %219 : vector<8x128xf32>
    %c0_83 = arith.constant 0 : index
    %c0_84 = arith.constant 0 : index
    %c0_85 = arith.constant 0 : index
    %221 = vector.load %arg12[%c0_83, %c0_84, %c0_85] : memref<2x8x128xf32, #tpu.memory_space<vmem>>, vector<1x8x128xf32>
    %222 = vector.shape_cast %221 : vector<1x8x128xf32> to vector<8x128xf32>
    %223 = vector.shape_cast %220 : vector<8x128xf32> to vector<1x8x128xf32>
    tpu.vector_store %arg12[%c0_83, %c0_84, %c0_85], %223 {strides = array<i32>} : memref<2x8x128xf32, #tpu.memory_space<vmem>>, vector<1x8x128xf32>,
    %224 = arith.index_cast %c4_i32 : i32 to index
    %c0_86 = arith.constant 0 : index
    %c0_87 = arith.constant 0 : index
    %225 = vector.load %arg14[%224, %c0_86, %c0_87] : memref<8x8x128xf32, #tpu.memory_space<vmem>>, vector<1x8x128xf32>
    %226 = vector.shape_cast %225 : vector<1x8x128xf32> to vector<8x128xf32>
    %227 = vector.shape_cast %220 : vector<8x128xf32> to vector<1x8x128xf32>
    tpu.vector_store %arg14[%224, %c0_86, %c0_87], %227 {strides = array<i32>} : memref<8x8x128xf32, #tpu.memory_space<vmem>>, vector<1x8x128xf32>,
    %c5_i32 = arith.constant 5 : i32
    %c0_88 = arith.constant 0 : index
    %c0_89 = arith.constant 0 : index
    %c0_90 = arith.constant 0 : index
    %228 = vector.load %arg12[%c0_88, %c0_89, %c0_90] : memref<2x8x128xf32, #tpu.memory_space<vmem>>, vector<1x8x128xf32>
    %229 = vector.shape_cast %228 : vector<1x8x128xf32> to vector<8x128xf32>
    %230 = arith.index_cast %c5_i32 : i32 to index
    %c0_91 = arith.constant 0 : index
    %c0_92 = arith.constant 0 : index
    %231 = vector.load %arg13[%230, %c0_91, %c0_92] : memref<8x8x384xf32, #tpu.memory_space<vmem>>, vector<1x8x384xf32>
    %232 = vector.shape_cast %231 : vector<1x8x384xf32> to vector<8x384xf32>
    %233 = arith.truncf %229 : vector<8x128xf32> to vector<8x128xbf16>
    %cst_93 = arith.constant dense<0.000000e+00> : vector<8x384xf32>
    %234 = tpu.matmul %233, %15, %cst_93 {dimension_numbers = #tpu.dot_dimension_numbers<[1], [0], [0], [1], [0, 0, 1, 1], [], []>} : vector<8x128xbf16>, vector<128x384xbf16>, vector<8x384xf32> -> vector<8x384xf32>
    %235 = vector.extract_strided_slice %232 {offsets = [0, 0], sizes = [8, 128], strides = [1, 1]} : vector<8x384xf32> to vector<8x128xf32>
    %236 = vector.extract_strided_slice %234 {offsets = [0, 0], sizes = [8, 128], strides = [1, 1]} : vector<8x384xf32> to vector<8x128xf32>
    %237 = arith.addf %235, %236 : vector<8x128xf32>
    %238 = arith.negf %237 : vector<8x128xf32>
    %239 = math.exp %238 : vector<8x128xf32>
    %cst_94 = arith.constant 1.000000e+00 : f32
    %240 = vector.broadcast %cst_94 : f32 to vector<8x128xf32>
    %241 = arith.addf %240, %239 : vector<8x128xf32>
    %242 = arith.divf %240, %241 : vector<8x128xf32>
    %243 = vector.extract_strided_slice %232 {offsets = [0, 128], sizes = [8, 128], strides = [1, 1]} : vector<8x384xf32> to vector<8x128xf32>
    %244 = vector.extract_strided_slice %234 {offsets = [0, 128], sizes = [8, 128], strides = [1, 1]} : vector<8x384xf32> to vector<8x128xf32>
    %245 = arith.addf %243, %244 : vector<8x128xf32>
    %246 = arith.negf %245 : vector<8x128xf32>
    %247 = math.exp %246 : vector<8x128xf32>
    %cst_95 = arith.constant 1.000000e+00 : f32
    %248 = vector.broadcast %cst_95 : f32 to vector<8x128xf32>
    %249 = arith.addf %248, %247 : vector<8x128xf32>
    %250 = arith.divf %248, %249 : vector<8x128xf32>
    %251 = vector.extract_strided_slice %232 {offsets = [0, 256], sizes = [8, 128], strides = [1, 1]} : vector<8x384xf32> to vector<8x128xf32>
    %252 = vector.extract_strided_slice %234 {offsets = [0, 256], sizes = [8, 128], strides = [1, 1]} : vector<8x384xf32> to vector<8x128xf32>
    %253 = vector.broadcast %17 : vector<1x128xf32> to vector<8x128xf32>
    %254 = arith.addf %252, %253 : vector<8x128xf32>
    %255 = arith.mulf %242, %254 : vector<8x128xf32>
    %256 = arith.addf %251, %255 : vector<8x128xf32>
    %257 = math.tanh %256 : vector<8x128xf32>
    %cst_96 = arith.constant 1.000000e+00 : f32
    %258 = vector.broadcast %cst_96 : f32 to vector<8x128xf32>
    %259 = arith.subf %258, %250 : vector<8x128xf32>
    %260 = arith.mulf %259, %257 : vector<8x128xf32>
    %261 = arith.mulf %250, %229 : vector<8x128xf32>
    %262 = arith.addf %260, %261 : vector<8x128xf32>
    %c0_97 = arith.constant 0 : index
    %c0_98 = arith.constant 0 : index
    %c0_99 = arith.constant 0 : index
    %263 = vector.load %arg12[%c0_97, %c0_98, %c0_99] : memref<2x8x128xf32, #tpu.memory_space<vmem>>, vector<1x8x128xf32>
    %264 = vector.shape_cast %263 : vector<1x8x128xf32> to vector<8x128xf32>
    %265 = vector.shape_cast %262 : vector<8x128xf32> to vector<1x8x128xf32>
    tpu.vector_store %arg12[%c0_97, %c0_98, %c0_99], %265 {strides = array<i32>} : memref<2x8x128xf32, #tpu.memory_space<vmem>>, vector<1x8x128xf32>,
    %266 = arith.index_cast %c5_i32 : i32 to index
    %c0_100 = arith.constant 0 : index
    %c0_101 = arith.constant 0 : index
    %267 = vector.load %arg14[%266, %c0_100, %c0_101] : memref<8x8x128xf32, #tpu.memory_space<vmem>>, vector<1x8x128xf32>
    %268 = vector.shape_cast %267 : vector<1x8x128xf32> to vector<8x128xf32>
    %269 = vector.shape_cast %262 : vector<8x128xf32> to vector<1x8x128xf32>
    tpu.vector_store %arg14[%266, %c0_100, %c0_101], %269 {strides = array<i32>} : memref<8x8x128xf32, #tpu.memory_space<vmem>>, vector<1x8x128xf32>,
    %c6_i32 = arith.constant 6 : i32
    %c0_102 = arith.constant 0 : index
    %c0_103 = arith.constant 0 : index
    %c0_104 = arith.constant 0 : index
    %270 = vector.load %arg12[%c0_102, %c0_103, %c0_104] : memref<2x8x128xf32, #tpu.memory_space<vmem>>, vector<1x8x128xf32>
    %271 = vector.shape_cast %270 : vector<1x8x128xf32> to vector<8x128xf32>
    %272 = arith.index_cast %c6_i32 : i32 to index
    %c0_105 = arith.constant 0 : index
    %c0_106 = arith.constant 0 : index
    %273 = vector.load %arg13[%272, %c0_105, %c0_106] : memref<8x8x384xf32, #tpu.memory_space<vmem>>, vector<1x8x384xf32>
    %274 = vector.shape_cast %273 : vector<1x8x384xf32> to vector<8x384xf32>
    %275 = arith.truncf %271 : vector<8x128xf32> to vector<8x128xbf16>
    %cst_107 = arith.constant dense<0.000000e+00> : vector<8x384xf32>
    %276 = tpu.matmul %275, %15, %cst_107 {dimension_numbers = #tpu.dot_dimension_numbers<[1], [0], [0], [1], [0, 0, 1, 1], [], []>} : vector<8x128xbf16>, vector<128x384xbf16>, vector<8x384xf32> -> vector<8x384xf32>
    %277 = vector.extract_strided_slice %274 {offsets = [0, 0], sizes = [8, 128], strides = [1, 1]} : vector<8x384xf32> to vector<8x128xf32>
    %278 = vector.extract_strided_slice %276 {offsets = [0, 0], sizes = [8, 128], strides = [1, 1]} : vector<8x384xf32> to vector<8x128xf32>
    %279 = arith.addf %277, %278 : vector<8x128xf32>
    %280 = arith.negf %279 : vector<8x128xf32>
    %281 = math.exp %280 : vector<8x128xf32>
    %cst_108 = arith.constant 1.000000e+00 : f32
    %282 = vector.broadcast %cst_108 : f32 to vector<8x128xf32>
    %283 = arith.addf %282, %281 : vector<8x128xf32>
    %284 = arith.divf %282, %283 : vector<8x128xf32>
    %285 = vector.extract_strided_slice %274 {offsets = [0, 128], sizes = [8, 128], strides = [1, 1]} : vector<8x384xf32> to vector<8x128xf32>
    %286 = vector.extract_strided_slice %276 {offsets = [0, 128], sizes = [8, 128], strides = [1, 1]} : vector<8x384xf32> to vector<8x128xf32>
    %287 = arith.addf %285, %286 : vector<8x128xf32>
    %288 = arith.negf %287 : vector<8x128xf32>
    %289 = math.exp %288 : vector<8x128xf32>
    %cst_109 = arith.constant 1.000000e+00 : f32
    %290 = vector.broadcast %cst_109 : f32 to vector<8x128xf32>
    %291 = arith.addf %290, %289 : vector<8x128xf32>
    %292 = arith.divf %290, %291 : vector<8x128xf32>
    %293 = vector.extract_strided_slice %274 {offsets = [0, 256], sizes = [8, 128], strides = [1, 1]} : vector<8x384xf32> to vector<8x128xf32>
    %294 = vector.extract_strided_slice %276 {offsets = [0, 256], sizes = [8, 128], strides = [1, 1]} : vector<8x384xf32> to vector<8x128xf32>
    %295 = vector.broadcast %17 : vector<1x128xf32> to vector<8x128xf32>
    %296 = arith.addf %294, %295 : vector<8x128xf32>
    %297 = arith.mulf %284, %296 : vector<8x128xf32>
    %298 = arith.addf %293, %297 : vector<8x128xf32>
    %299 = math.tanh %298 : vector<8x128xf32>
    %cst_110 = arith.constant 1.000000e+00 : f32
    %300 = vector.broadcast %cst_110 : f32 to vector<8x128xf32>
    %301 = arith.subf %300, %292 : vector<8x128xf32>
    %302 = arith.mulf %301, %299 : vector<8x128xf32>
    %303 = arith.mulf %292, %271 : vector<8x128xf32>
    %304 = arith.addf %302, %303 : vector<8x128xf32>
    %c0_111 = arith.constant 0 : index
    %c0_112 = arith.constant 0 : index
    %c0_113 = arith.constant 0 : index
    %305 = vector.load %arg12[%c0_111, %c0_112, %c0_113] : memref<2x8x128xf32, #tpu.memory_space<vmem>>, vector<1x8x128xf32>
    %306 = vector.shape_cast %305 : vector<1x8x128xf32> to vector<8x128xf32>
    %307 = vector.shape_cast %304 : vector<8x128xf32> to vector<1x8x128xf32>
    tpu.vector_store %arg12[%c0_111, %c0_112, %c0_113], %307 {strides = array<i32>} : memref<2x8x128xf32, #tpu.memory_space<vmem>>, vector<1x8x128xf32>,
    %308 = arith.index_cast %c6_i32 : i32 to index
    %c0_114 = arith.constant 0 : index
    %c0_115 = arith.constant 0 : index
    %309 = vector.load %arg14[%308, %c0_114, %c0_115] : memref<8x8x128xf32, #tpu.memory_space<vmem>>, vector<1x8x128xf32>
    %310 = vector.shape_cast %309 : vector<1x8x128xf32> to vector<8x128xf32>
    %311 = vector.shape_cast %304 : vector<8x128xf32> to vector<1x8x128xf32>
    tpu.vector_store %arg14[%308, %c0_114, %c0_115], %311 {strides = array<i32>} : memref<8x8x128xf32, #tpu.memory_space<vmem>>, vector<1x8x128xf32>,
    %c7_i32 = arith.constant 7 : i32
    %c0_116 = arith.constant 0 : index
    %c0_117 = arith.constant 0 : index
    %c0_118 = arith.constant 0 : index
    %312 = vector.load %arg12[%c0_116, %c0_117, %c0_118] : memref<2x8x128xf32, #tpu.memory_space<vmem>>, vector<1x8x128xf32>
    %313 = vector.shape_cast %312 : vector<1x8x128xf32> to vector<8x128xf32>
    %314 = arith.index_cast %c7_i32 : i32 to index
    %c0_119 = arith.constant 0 : index
    %c0_120 = arith.constant 0 : index
    %315 = vector.load %arg13[%314, %c0_119, %c0_120] : memref<8x8x384xf32, #tpu.memory_space<vmem>>, vector<1x8x384xf32>
    %316 = vector.shape_cast %315 : vector<1x8x384xf32> to vector<8x384xf32>
    %317 = arith.truncf %313 : vector<8x128xf32> to vector<8x128xbf16>
    %cst_121 = arith.constant dense<0.000000e+00> : vector<8x384xf32>
    %318 = tpu.matmul %317, %15, %cst_121 {dimension_numbers = #tpu.dot_dimension_numbers<[1], [0], [0], [1], [0, 0, 1, 1], [], []>} : vector<8x128xbf16>, vector<128x384xbf16>, vector<8x384xf32> -> vector<8x384xf32>
    %319 = vector.extract_strided_slice %316 {offsets = [0, 0], sizes = [8, 128], strides = [1, 1]} : vector<8x384xf32> to vector<8x128xf32>
    %320 = vector.extract_strided_slice %318 {offsets = [0, 0], sizes = [8, 128], strides = [1, 1]} : vector<8x384xf32> to vector<8x128xf32>
    %321 = arith.addf %319, %320 : vector<8x128xf32>
    %322 = arith.negf %321 : vector<8x128xf32>
    %323 = math.exp %322 : vector<8x128xf32>
    %cst_122 = arith.constant 1.000000e+00 : f32
    %324 = vector.broadcast %cst_122 : f32 to vector<8x128xf32>
    %325 = arith.addf %324, %323 : vector<8x128xf32>
    %326 = arith.divf %324, %325 : vector<8x128xf32>
    %327 = vector.extract_strided_slice %316 {offsets = [0, 128], sizes = [8, 128], strides = [1, 1]} : vector<8x384xf32> to vector<8x128xf32>
    %328 = vector.extract_strided_slice %318 {offsets = [0, 128], sizes = [8, 128], strides = [1, 1]} : vector<8x384xf32> to vector<8x128xf32>
    %329 = arith.addf %327, %328 : vector<8x128xf32>
    %330 = arith.negf %329 : vector<8x128xf32>
    %331 = math.exp %330 : vector<8x128xf32>
    %cst_123 = arith.constant 1.000000e+00 : f32
    %332 = vector.broadcast %cst_123 : f32 to vector<8x128xf32>
    %333 = arith.addf %332, %331 : vector<8x128xf32>
    %334 = arith.divf %332, %333 : vector<8x128xf32>
    %335 = vector.extract_strided_slice %316 {offsets = [0, 256], sizes = [8, 128], strides = [1, 1]} : vector<8x384xf32> to vector<8x128xf32>
    %336 = vector.extract_strided_slice %318 {offsets = [0, 256], sizes = [8, 128], strides = [1, 1]} : vector<8x384xf32> to vector<8x128xf32>
    %337 = vector.broadcast %17 : vector<1x128xf32> to vector<8x128xf32>
    %338 = arith.addf %336, %337 : vector<8x128xf32>
    %339 = arith.mulf %326, %338 : vector<8x128xf32>
    %340 = arith.addf %335, %339 : vector<8x128xf32>
    %341 = math.tanh %340 : vector<8x128xf32>
    %cst_124 = arith.constant 1.000000e+00 : f32
    %342 = vector.broadcast %cst_124 : f32 to vector<8x128xf32>
    %343 = arith.subf %342, %334 : vector<8x128xf32>
    %344 = arith.mulf %343, %341 : vector<8x128xf32>
    %345 = arith.mulf %334, %313 : vector<8x128xf32>
    %346 = arith.addf %344, %345 : vector<8x128xf32>
    %c0_125 = arith.constant 0 : index
    %c0_126 = arith.constant 0 : index
    %c0_127 = arith.constant 0 : index
    %347 = vector.load %arg12[%c0_125, %c0_126, %c0_127] : memref<2x8x128xf32, #tpu.memory_space<vmem>>, vector<1x8x128xf32>
    %348 = vector.shape_cast %347 : vector<1x8x128xf32> to vector<8x128xf32>
    %349 = vector.shape_cast %346 : vector<8x128xf32> to vector<1x8x128xf32>
    tpu.vector_store %arg12[%c0_125, %c0_126, %c0_127], %349 {strides = array<i32>} : memref<2x8x128xf32, #tpu.memory_space<vmem>>, vector<1x8x128xf32>,
    %350 = arith.index_cast %c7_i32 : i32 to index
    %c0_128 = arith.constant 0 : index
    %c0_129 = arith.constant 0 : index
    %351 = vector.load %arg14[%350, %c0_128, %c0_129] : memref<8x8x128xf32, #tpu.memory_space<vmem>>, vector<1x8x128xf32>
    %352 = vector.shape_cast %351 : vector<1x8x128xf32> to vector<8x128xf32>
    %353 = vector.shape_cast %346 : vector<8x128xf32> to vector<1x8x128xf32>
    tpu.vector_store %arg14[%350, %c0_128, %c0_129], %353 {strides = array<i32>} : memref<8x8x128xf32, #tpu.memory_space<vmem>>, vector<1x8x128xf32>,
    %c8_i32 = arith.constant 8 : i32
    %c0_130 = arith.constant 0 : index
    %c0_131 = arith.constant 0 : index
    %c0_132 = arith.constant 0 : index
    %354 = vector.load %arg14[%c0_130, %c0_131, %c0_132] : memref<8x8x128xf32, #tpu.memory_space<vmem>>, vector<8x8x128xf32>
    %355 = vector.shape_cast %354 : vector<8x8x128xf32> to vector<64x128xf32>
    %356 = arith.truncf %355 : vector<64x128xf32> to vector<64x128xbf16>
    %c0_133 = arith.constant 0 : index
    %c0_134 = arith.constant 0 : index
    %c0_135 = arith.constant 0 : index
    %357 = vector.load %arg4[%c0_133, %c0_134, %c0_135] : memref<1x128x384xbf16, #tpu.memory_space<vmem>>, vector<1x128x384xbf16>
    %358 = vector.shape_cast %357 : vector<1x128x384xbf16> to vector<128x384xbf16>
    %cst_136 = arith.constant dense<0.000000e+00> : vector<64x384xf32>
    %359 = tpu.matmul %356, %358, %cst_136 {dimension_numbers = #tpu.dot_dimension_numbers<[1], [0], [0], [1], [0, 0, 1, 1], [], []>} : vector<64x128xbf16>, vector<128x384xbf16>, vector<64x384xf32> -> vector<64x384xf32>
    %c1 = arith.constant 1 : index
    %c0_137 = arith.constant 0 : index
    %c0_138 = arith.constant 0 : index
    %360 = vector.load %arg6[%c1, %c0_137, %c0_138] : memref<2x1x384xf32, #tpu.memory_space<vmem>>, vector<1x1x384xf32>
    %361 = vector.shape_cast %360 : vector<1x1x384xf32> to vector<1x384xf32>
    %362 = vector.broadcast %361 : vector<1x384xf32> to vector<64x384xf32>
    %363 = arith.addf %359, %362 : vector<64x384xf32>
    %364 = vector.shape_cast %363 : vector<64x384xf32> to vector<8x8x384xf32>
    %c0_139 = arith.constant 0 : index
    %c0_140 = arith.constant 0 : index
    %c0_141 = arith.constant 0 : index
    %365 = vector.load %arg13[%c0_139, %c0_140, %c0_141] : memref<8x8x384xf32, #tpu.memory_space<vmem>>, vector<8x8x384xf32>
    tpu.vector_store %arg13[%c0_139, %c0_140, %c0_141], %364 {strides = array<i32>} : memref<8x8x384xf32, #tpu.memory_space<vmem>>, vector<8x8x384xf32>,
    %c1_142 = arith.constant 1 : index
    %c0_143 = arith.constant 0 : index
    %c0_144 = arith.constant 0 : index
    %366 = vector.load %arg5[%c1_142, %c0_143, %c0_144] : memref<2x128x384xbf16, #tpu.memory_space<vmem>>, vector<1x128x384xbf16>
    %367 = vector.shape_cast %366 : vector<1x128x384xbf16> to vector<128x384xbf16>
    %c1_145 = arith.constant 1 : index
    %c0_146 = arith.constant 0 : index
    %c0_147 = arith.constant 0 : index
    %368 = vector.load %arg7[%c1_145, %c0_146, %c0_147] : memref<2x1x128xf32, #tpu.memory_space<vmem>>, vector<1x1x128xf32>
    %369 = vector.shape_cast %368 : vector<1x1x128xf32> to vector<1x128xf32>
    %c0_i32_148 = arith.constant 0 : i32
    %c1_149 = arith.constant 1 : index
    %c0_150 = arith.constant 0 : index
    %c0_151 = arith.constant 0 : index
    %370 = vector.load %arg12[%c1_149, %c0_150, %c0_151] : memref<2x8x128xf32, #tpu.memory_space<vmem>>, vector<1x8x128xf32>
    %371 = vector.shape_cast %370 : vector<1x8x128xf32> to vector<8x128xf32>
    %372 = arith.index_cast %c0_i32_148 : i32 to index
    %c0_152 = arith.constant 0 : index
    %c0_153 = arith.constant 0 : index
    %373 = vector.load %arg13[%372, %c0_152, %c0_153] : memref<8x8x384xf32, #tpu.memory_space<vmem>>, vector<1x8x384xf32>
    %374 = vector.shape_cast %373 : vector<1x8x384xf32> to vector<8x384xf32>
    %375 = arith.truncf %371 : vector<8x128xf32> to vector<8x128xbf16>
    %cst_154 = arith.constant dense<0.000000e+00> : vector<8x384xf32>
    %376 = tpu.matmul %375, %367, %cst_154 {dimension_numbers = #tpu.dot_dimension_numbers<[1], [0], [0], [1], [0, 0, 1, 1], [], []>} : vector<8x128xbf16>, vector<128x384xbf16>, vector<8x384xf32> -> vector<8x384xf32>
    %377 = vector.extract_strided_slice %374 {offsets = [0, 0], sizes = [8, 128], strides = [1, 1]} : vector<8x384xf32> to vector<8x128xf32>
    %378 = vector.extract_strided_slice %376 {offsets = [0, 0], sizes = [8, 128], strides = [1, 1]} : vector<8x384xf32> to vector<8x128xf32>
    %379 = arith.addf %377, %378 : vector<8x128xf32>
    %380 = arith.negf %379 : vector<8x128xf32>
    %381 = math.exp %380 : vector<8x128xf32>
    %cst_155 = arith.constant 1.000000e+00 : f32
    %382 = vector.broadcast %cst_155 : f32 to vector<8x128xf32>
    %383 = arith.addf %382, %381 : vector<8x128xf32>
    %384 = arith.divf %382, %383 : vector<8x128xf32>
    %385 = vector.extract_strided_slice %374 {offsets = [0, 128], sizes = [8, 128], strides = [1, 1]} : vector<8x384xf32> to vector<8x128xf32>
    %386 = vector.extract_strided_slice %376 {offsets = [0, 128], sizes = [8, 128], strides = [1, 1]} : vector<8x384xf32> to vector<8x128xf32>
    %387 = arith.addf %385, %386 : vector<8x128xf32>
    %388 = arith.negf %387 : vector<8x128xf32>
    %389 = math.exp %388 : vector<8x128xf32>
    %cst_156 = arith.constant 1.000000e+00 : f32
    %390 = vector.broadcast %cst_156 : f32 to vector<8x128xf32>
    %391 = arith.addf %390, %389 : vector<8x128xf32>
    %392 = arith.divf %390, %391 : vector<8x128xf32>
    %393 = vector.extract_strided_slice %374 {offsets = [0, 256], sizes = [8, 128], strides = [1, 1]} : vector<8x384xf32> to vector<8x128xf32>
    %394 = vector.extract_strided_slice %376 {offsets = [0, 256], sizes = [8, 128], strides = [1, 1]} : vector<8x384xf32> to vector<8x128xf32>
    %395 = vector.broadcast %369 : vector<1x128xf32> to vector<8x128xf32>
    %396 = arith.addf %394, %395 : vector<8x128xf32>
    %397 = arith.mulf %384, %396 : vector<8x128xf32>
    %398 = arith.addf %393, %397 : vector<8x128xf32>
    %399 = math.tanh %398 : vector<8x128xf32>
    %cst_157 = arith.constant 1.000000e+00 : f32
    %400 = vector.broadcast %cst_157 : f32 to vector<8x128xf32>
    %401 = arith.subf %400, %392 : vector<8x128xf32>
    %402 = arith.mulf %401, %399 : vector<8x128xf32>
    %403 = arith.mulf %392, %371 : vector<8x128xf32>
    %404 = arith.addf %402, %403 : vector<8x128xf32>
    %c1_158 = arith.constant 1 : index
    %c0_159 = arith.constant 0 : index
    %c0_160 = arith.constant 0 : index
    %405 = vector.load %arg12[%c1_158, %c0_159, %c0_160] : memref<2x8x128xf32, #tpu.memory_space<vmem>>, vector<1x8x128xf32>
    %406 = vector.shape_cast %405 : vector<1x8x128xf32> to vector<8x128xf32>
    %407 = vector.shape_cast %404 : vector<8x128xf32> to vector<1x8x128xf32>
    tpu.vector_store %arg12[%c1_158, %c0_159, %c0_160], %407 {strides = array<i32>} : memref<2x8x128xf32, #tpu.memory_space<vmem>>, vector<1x8x128xf32>,
    %408 = arith.index_cast %c0_i32_148 : i32 to index
    %c0_161 = arith.constant 0 : index
    %c0_162 = arith.constant 0 : index
    %409 = vector.load %arg14[%408, %c0_161, %c0_162] : memref<8x8x128xf32, #tpu.memory_space<vmem>>, vector<1x8x128xf32>
    %410 = vector.shape_cast %409 : vector<1x8x128xf32> to vector<8x128xf32>
    %411 = vector.shape_cast %404 : vector<8x128xf32> to vector<1x8x128xf32>
    tpu.vector_store %arg14[%408, %c0_161, %c0_162], %411 {strides = array<i32>} : memref<8x8x128xf32, #tpu.memory_space<vmem>>, vector<1x8x128xf32>,
    %c1_i32_163 = arith.constant 1 : i32
    %c1_164 = arith.constant 1 : index
    %c0_165 = arith.constant 0 : index
    %c0_166 = arith.constant 0 : index
    %412 = vector.load %arg12[%c1_164, %c0_165, %c0_166] : memref<2x8x128xf32, #tpu.memory_space<vmem>>, vector<1x8x128xf32>
    %413 = vector.shape_cast %412 : vector<1x8x128xf32> to vector<8x128xf32>
    %414 = arith.index_cast %c1_i32_163 : i32 to index
    %c0_167 = arith.constant 0 : index
    %c0_168 = arith.constant 0 : index
    %415 = vector.load %arg13[%414, %c0_167, %c0_168] : memref<8x8x384xf32, #tpu.memory_space<vmem>>, vector<1x8x384xf32>
    %416 = vector.shape_cast %415 : vector<1x8x384xf32> to vector<8x384xf32>
    %417 = arith.truncf %413 : vector<8x128xf32> to vector<8x128xbf16>
    %cst_169 = arith.constant dense<0.000000e+00> : vector<8x384xf32>
    %418 = tpu.matmul %417, %367, %cst_169 {dimension_numbers = #tpu.dot_dimension_numbers<[1], [0], [0], [1], [0, 0, 1, 1], [], []>} : vector<8x128xbf16>, vector<128x384xbf16>, vector<8x384xf32> -> vector<8x384xf32>
    %419 = vector.extract_strided_slice %416 {offsets = [0, 0], sizes = [8, 128], strides = [1, 1]} : vector<8x384xf32> to vector<8x128xf32>
    %420 = vector.extract_strided_slice %418 {offsets = [0, 0], sizes = [8, 128], strides = [1, 1]} : vector<8x384xf32> to vector<8x128xf32>
    %421 = arith.addf %419, %420 : vector<8x128xf32>
    %422 = arith.negf %421 : vector<8x128xf32>
    %423 = math.exp %422 : vector<8x128xf32>
    %cst_170 = arith.constant 1.000000e+00 : f32
    %424 = vector.broadcast %cst_170 : f32 to vector<8x128xf32>
    %425 = arith.addf %424, %423 : vector<8x128xf32>
    %426 = arith.divf %424, %425 : vector<8x128xf32>
    %427 = vector.extract_strided_slice %416 {offsets = [0, 128], sizes = [8, 128], strides = [1, 1]} : vector<8x384xf32> to vector<8x128xf32>
    %428 = vector.extract_strided_slice %418 {offsets = [0, 128], sizes = [8, 128], strides = [1, 1]} : vector<8x384xf32> to vector<8x128xf32>
    %429 = arith.addf %427, %428 : vector<8x128xf32>
    %430 = arith.negf %429 : vector<8x128xf32>
    %431 = math.exp %430 : vector<8x128xf32>
    %cst_171 = arith.constant 1.000000e+00 : f32
    %432 = vector.broadcast %cst_171 : f32 to vector<8x128xf32>
    %433 = arith.addf %432, %431 : vector<8x128xf32>
    %434 = arith.divf %432, %433 : vector<8x128xf32>
    %435 = vector.extract_strided_slice %416 {offsets = [0, 256], sizes = [8, 128], strides = [1, 1]} : vector<8x384xf32> to vector<8x128xf32>
    %436 = vector.extract_strided_slice %418 {offsets = [0, 256], sizes = [8, 128], strides = [1, 1]} : vector<8x384xf32> to vector<8x128xf32>
    %437 = vector.broadcast %369 : vector<1x128xf32> to vector<8x128xf32>
    %438 = arith.addf %436, %437 : vector<8x128xf32>
    %439 = arith.mulf %426, %438 : vector<8x128xf32>
    %440 = arith.addf %435, %439 : vector<8x128xf32>
    %441 = math.tanh %440 : vector<8x128xf32>
    %cst_172 = arith.constant 1.000000e+00 : f32
    %442 = vector.broadcast %cst_172 : f32 to vector<8x128xf32>
    %443 = arith.subf %442, %434 : vector<8x128xf32>
    %444 = arith.mulf %443, %441 : vector<8x128xf32>
    %445 = arith.mulf %434, %413 : vector<8x128xf32>
    %446 = arith.addf %444, %445 : vector<8x128xf32>
    %c1_173 = arith.constant 1 : index
    %c0_174 = arith.constant 0 : index
    %c0_175 = arith.constant 0 : index
    %447 = vector.load %arg12[%c1_173, %c0_174, %c0_175] : memref<2x8x128xf32, #tpu.memory_space<vmem>>, vector<1x8x128xf32>
    %448 = vector.shape_cast %447 : vector<1x8x128xf32> to vector<8x128xf32>
    %449 = vector.shape_cast %446 : vector<8x128xf32> to vector<1x8x128xf32>
    tpu.vector_store %arg12[%c1_173, %c0_174, %c0_175], %449 {strides = array<i32>} : memref<2x8x128xf32, #tpu.memory_space<vmem>>, vector<1x8x128xf32>,
    %450 = arith.index_cast %c1_i32_163 : i32 to index
    %c0_176 = arith.constant 0 : index
    %c0_177 = arith.constant 0 : index
    %451 = vector.load %arg14[%450, %c0_176, %c0_177] : memref<8x8x128xf32, #tpu.memory_space<vmem>>, vector<1x8x128xf32>
    %452 = vector.shape_cast %451 : vector<1x8x128xf32> to vector<8x128xf32>
    %453 = vector.shape_cast %446 : vector<8x128xf32> to vector<1x8x128xf32>
    tpu.vector_store %arg14[%450, %c0_176, %c0_177], %453 {strides = array<i32>} : memref<8x8x128xf32, #tpu.memory_space<vmem>>, vector<1x8x128xf32>,
    %c2_i32_178 = arith.constant 2 : i32
    %c1_179 = arith.constant 1 : index
    %c0_180 = arith.constant 0 : index
    %c0_181 = arith.constant 0 : index
    %454 = vector.load %arg12[%c1_179, %c0_180, %c0_181] : memref<2x8x128xf32, #tpu.memory_space<vmem>>, vector<1x8x128xf32>
    %455 = vector.shape_cast %454 : vector<1x8x128xf32> to vector<8x128xf32>
    %456 = arith.index_cast %c2_i32_178 : i32 to index
    %c0_182 = arith.constant 0 : index
    %c0_183 = arith.constant 0 : index
    %457 = vector.load %arg13[%456, %c0_182, %c0_183] : memref<8x8x384xf32, #tpu.memory_space<vmem>>, vector<1x8x384xf32>
    %458 = vector.shape_cast %457 : vector<1x8x384xf32> to vector<8x384xf32>
    %459 = arith.truncf %455 : vector<8x128xf32> to vector<8x128xbf16>
    %cst_184 = arith.constant dense<0.000000e+00> : vector<8x384xf32>
    %460 = tpu.matmul %459, %367, %cst_184 {dimension_numbers = #tpu.dot_dimension_numbers<[1], [0], [0], [1], [0, 0, 1, 1], [], []>} : vector<8x128xbf16>, vector<128x384xbf16>, vector<8x384xf32> -> vector<8x384xf32>
    %461 = vector.extract_strided_slice %458 {offsets = [0, 0], sizes = [8, 128], strides = [1, 1]} : vector<8x384xf32> to vector<8x128xf32>
    %462 = vector.extract_strided_slice %460 {offsets = [0, 0], sizes = [8, 128], strides = [1, 1]} : vector<8x384xf32> to vector<8x128xf32>
    %463 = arith.addf %461, %462 : vector<8x128xf32>
    %464 = arith.negf %463 : vector<8x128xf32>
    %465 = math.exp %464 : vector<8x128xf32>
    %cst_185 = arith.constant 1.000000e+00 : f32
    %466 = vector.broadcast %cst_185 : f32 to vector<8x128xf32>
    %467 = arith.addf %466, %465 : vector<8x128xf32>
    %468 = arith.divf %466, %467 : vector<8x128xf32>
    %469 = vector.extract_strided_slice %458 {offsets = [0, 128], sizes = [8, 128], strides = [1, 1]} : vector<8x384xf32> to vector<8x128xf32>
    %470 = vector.extract_strided_slice %460 {offsets = [0, 128], sizes = [8, 128], strides = [1, 1]} : vector<8x384xf32> to vector<8x128xf32>
    %471 = arith.addf %469, %470 : vector<8x128xf32>
    %472 = arith.negf %471 : vector<8x128xf32>
    %473 = math.exp %472 : vector<8x128xf32>
    %cst_186 = arith.constant 1.000000e+00 : f32
    %474 = vector.broadcast %cst_186 : f32 to vector<8x128xf32>
    %475 = arith.addf %474, %473 : vector<8x128xf32>
    %476 = arith.divf %474, %475 : vector<8x128xf32>
    %477 = vector.extract_strided_slice %458 {offsets = [0, 256], sizes = [8, 128], strides = [1, 1]} : vector<8x384xf32> to vector<8x128xf32>
    %478 = vector.extract_strided_slice %460 {offsets = [0, 256], sizes = [8, 128], strides = [1, 1]} : vector<8x384xf32> to vector<8x128xf32>
    %479 = vector.broadcast %369 : vector<1x128xf32> to vector<8x128xf32>
    %480 = arith.addf %478, %479 : vector<8x128xf32>
    %481 = arith.mulf %468, %480 : vector<8x128xf32>
    %482 = arith.addf %477, %481 : vector<8x128xf32>
    %483 = math.tanh %482 : vector<8x128xf32>
    %cst_187 = arith.constant 1.000000e+00 : f32
    %484 = vector.broadcast %cst_187 : f32 to vector<8x128xf32>
    %485 = arith.subf %484, %476 : vector<8x128xf32>
    %486 = arith.mulf %485, %483 : vector<8x128xf32>
    %487 = arith.mulf %476, %455 : vector<8x128xf32>
    %488 = arith.addf %486, %487 : vector<8x128xf32>
    %c1_188 = arith.constant 1 : index
    %c0_189 = arith.constant 0 : index
    %c0_190 = arith.constant 0 : index
    %489 = vector.load %arg12[%c1_188, %c0_189, %c0_190] : memref<2x8x128xf32, #tpu.memory_space<vmem>>, vector<1x8x128xf32>
    %490 = vector.shape_cast %489 : vector<1x8x128xf32> to vector<8x128xf32>
    %491 = vector.shape_cast %488 : vector<8x128xf32> to vector<1x8x128xf32>
    tpu.vector_store %arg12[%c1_188, %c0_189, %c0_190], %491 {strides = array<i32>} : memref<2x8x128xf32, #tpu.memory_space<vmem>>, vector<1x8x128xf32>,
    %492 = arith.index_cast %c2_i32_178 : i32 to index
    %c0_191 = arith.constant 0 : index
    %c0_192 = arith.constant 0 : index
    %493 = vector.load %arg14[%492, %c0_191, %c0_192] : memref<8x8x128xf32, #tpu.memory_space<vmem>>, vector<1x8x128xf32>
    %494 = vector.shape_cast %493 : vector<1x8x128xf32> to vector<8x128xf32>
    %495 = vector.shape_cast %488 : vector<8x128xf32> to vector<1x8x128xf32>
    tpu.vector_store %arg14[%492, %c0_191, %c0_192], %495 {strides = array<i32>} : memref<8x8x128xf32, #tpu.memory_space<vmem>>, vector<1x8x128xf32>,
    %c3_i32_193 = arith.constant 3 : i32
    %c1_194 = arith.constant 1 : index
    %c0_195 = arith.constant 0 : index
    %c0_196 = arith.constant 0 : index
    %496 = vector.load %arg12[%c1_194, %c0_195, %c0_196] : memref<2x8x128xf32, #tpu.memory_space<vmem>>, vector<1x8x128xf32>
    %497 = vector.shape_cast %496 : vector<1x8x128xf32> to vector<8x128xf32>
    %498 = arith.index_cast %c3_i32_193 : i32 to index
    %c0_197 = arith.constant 0 : index
    %c0_198 = arith.constant 0 : index
    %499 = vector.load %arg13[%498, %c0_197, %c0_198] : memref<8x8x384xf32, #tpu.memory_space<vmem>>, vector<1x8x384xf32>
    %500 = vector.shape_cast %499 : vector<1x8x384xf32> to vector<8x384xf32>
    %501 = arith.truncf %497 : vector<8x128xf32> to vector<8x128xbf16>
    %cst_199 = arith.constant dense<0.000000e+00> : vector<8x384xf32>
    %502 = tpu.matmul %501, %367, %cst_199 {dimension_numbers = #tpu.dot_dimension_numbers<[1], [0], [0], [1], [0, 0, 1, 1], [], []>} : vector<8x128xbf16>, vector<128x384xbf16>, vector<8x384xf32> -> vector<8x384xf32>
    %503 = vector.extract_strided_slice %500 {offsets = [0, 0], sizes = [8, 128], strides = [1, 1]} : vector<8x384xf32> to vector<8x128xf32>
    %504 = vector.extract_strided_slice %502 {offsets = [0, 0], sizes = [8, 128], strides = [1, 1]} : vector<8x384xf32> to vector<8x128xf32>
    %505 = arith.addf %503, %504 : vector<8x128xf32>
    %506 = arith.negf %505 : vector<8x128xf32>
    %507 = math.exp %506 : vector<8x128xf32>
    %cst_200 = arith.constant 1.000000e+00 : f32
    %508 = vector.broadcast %cst_200 : f32 to vector<8x128xf32>
    %509 = arith.addf %508, %507 : vector<8x128xf32>
    %510 = arith.divf %508, %509 : vector<8x128xf32>
    %511 = vector.extract_strided_slice %500 {offsets = [0, 128], sizes = [8, 128], strides = [1, 1]} : vector<8x384xf32> to vector<8x128xf32>
    %512 = vector.extract_strided_slice %502 {offsets = [0, 128], sizes = [8, 128], strides = [1, 1]} : vector<8x384xf32> to vector<8x128xf32>
    %513 = arith.addf %511, %512 : vector<8x128xf32>
    %514 = arith.negf %513 : vector<8x128xf32>
    %515 = math.exp %514 : vector<8x128xf32>
    %cst_201 = arith.constant 1.000000e+00 : f32
    %516 = vector.broadcast %cst_201 : f32 to vector<8x128xf32>
    %517 = arith.addf %516, %515 : vector<8x128xf32>
    %518 = arith.divf %516, %517 : vector<8x128xf32>
    %519 = vector.extract_strided_slice %500 {offsets = [0, 256], sizes = [8, 128], strides = [1, 1]} : vector<8x384xf32> to vector<8x128xf32>
    %520 = vector.extract_strided_slice %502 {offsets = [0, 256], sizes = [8, 128], strides = [1, 1]} : vector<8x384xf32> to vector<8x128xf32>
    %521 = vector.broadcast %369 : vector<1x128xf32> to vector<8x128xf32>
    %522 = arith.addf %520, %521 : vector<8x128xf32>
    %523 = arith.mulf %510, %522 : vector<8x128xf32>
    %524 = arith.addf %519, %523 : vector<8x128xf32>
    %525 = math.tanh %524 : vector<8x128xf32>
    %cst_202 = arith.constant 1.000000e+00 : f32
    %526 = vector.broadcast %cst_202 : f32 to vector<8x128xf32>
    %527 = arith.subf %526, %518 : vector<8x128xf32>
    %528 = arith.mulf %527, %525 : vector<8x128xf32>
    %529 = arith.mulf %518, %497 : vector<8x128xf32>
    %530 = arith.addf %528, %529 : vector<8x128xf32>
    %c1_203 = arith.constant 1 : index
    %c0_204 = arith.constant 0 : index
    %c0_205 = arith.constant 0 : index
    %531 = vector.load %arg12[%c1_203, %c0_204, %c0_205] : memref<2x8x128xf32, #tpu.memory_space<vmem>>, vector<1x8x128xf32>
    %532 = vector.shape_cast %531 : vector<1x8x128xf32> to vector<8x128xf32>
    %533 = vector.shape_cast %530 : vector<8x128xf32> to vector<1x8x128xf32>
    tpu.vector_store %arg12[%c1_203, %c0_204, %c0_205], %533 {strides = array<i32>} : memref<2x8x128xf32, #tpu.memory_space<vmem>>, vector<1x8x128xf32>,
    %534 = arith.index_cast %c3_i32_193 : i32 to index
    %c0_206 = arith.constant 0 : index
    %c0_207 = arith.constant 0 : index
    %535 = vector.load %arg14[%534, %c0_206, %c0_207] : memref<8x8x128xf32, #tpu.memory_space<vmem>>, vector<1x8x128xf32>
    %536 = vector.shape_cast %535 : vector<1x8x128xf32> to vector<8x128xf32>
    %537 = vector.shape_cast %530 : vector<8x128xf32> to vector<1x8x128xf32>
    tpu.vector_store %arg14[%534, %c0_206, %c0_207], %537 {strides = array<i32>} : memref<8x8x128xf32, #tpu.memory_space<vmem>>, vector<1x8x128xf32>,
    %c4_i32_208 = arith.constant 4 : i32
    %c1_209 = arith.constant 1 : index
    %c0_210 = arith.constant 0 : index
    %c0_211 = arith.constant 0 : index
    %538 = vector.load %arg12[%c1_209, %c0_210, %c0_211] : memref<2x8x128xf32, #tpu.memory_space<vmem>>, vector<1x8x128xf32>
    %539 = vector.shape_cast %538 : vector<1x8x128xf32> to vector<8x128xf32>
    %540 = arith.index_cast %c4_i32_208 : i32 to index
    %c0_212 = arith.constant 0 : index
    %c0_213 = arith.constant 0 : index
    %541 = vector.load %arg13[%540, %c0_212, %c0_213] : memref<8x8x384xf32, #tpu.memory_space<vmem>>, vector<1x8x384xf32>
    %542 = vector.shape_cast %541 : vector<1x8x384xf32> to vector<8x384xf32>
    %543 = arith.truncf %539 : vector<8x128xf32> to vector<8x128xbf16>
    %cst_214 = arith.constant dense<0.000000e+00> : vector<8x384xf32>
    %544 = tpu.matmul %543, %367, %cst_214 {dimension_numbers = #tpu.dot_dimension_numbers<[1], [0], [0], [1], [0, 0, 1, 1], [], []>} : vector<8x128xbf16>, vector<128x384xbf16>, vector<8x384xf32> -> vector<8x384xf32>
    %545 = vector.extract_strided_slice %542 {offsets = [0, 0], sizes = [8, 128], strides = [1, 1]} : vector<8x384xf32> to vector<8x128xf32>
    %546 = vector.extract_strided_slice %544 {offsets = [0, 0], sizes = [8, 128], strides = [1, 1]} : vector<8x384xf32> to vector<8x128xf32>
    %547 = arith.addf %545, %546 : vector<8x128xf32>
    %548 = arith.negf %547 : vector<8x128xf32>
    %549 = math.exp %548 : vector<8x128xf32>
    %cst_215 = arith.constant 1.000000e+00 : f32
    %550 = vector.broadcast %cst_215 : f32 to vector<8x128xf32>
    %551 = arith.addf %550, %549 : vector<8x128xf32>
    %552 = arith.divf %550, %551 : vector<8x128xf32>
    %553 = vector.extract_strided_slice %542 {offsets = [0, 128], sizes = [8, 128], strides = [1, 1]} : vector<8x384xf32> to vector<8x128xf32>
    %554 = vector.extract_strided_slice %544 {offsets = [0, 128], sizes = [8, 128], strides = [1, 1]} : vector<8x384xf32> to vector<8x128xf32>
    %555 = arith.addf %553, %554 : vector<8x128xf32>
    %556 = arith.negf %555 : vector<8x128xf32>
    %557 = math.exp %556 : vector<8x128xf32>
    %cst_216 = arith.constant 1.000000e+00 : f32
    %558 = vector.broadcast %cst_216 : f32 to vector<8x128xf32>
    %559 = arith.addf %558, %557 : vector<8x128xf32>
    %560 = arith.divf %558, %559 : vector<8x128xf32>
    %561 = vector.extract_strided_slice %542 {offsets = [0, 256], sizes = [8, 128], strides = [1, 1]} : vector<8x384xf32> to vector<8x128xf32>
    %562 = vector.extract_strided_slice %544 {offsets = [0, 256], sizes = [8, 128], strides = [1, 1]} : vector<8x384xf32> to vector<8x128xf32>
    %563 = vector.broadcast %369 : vector<1x128xf32> to vector<8x128xf32>
    %564 = arith.addf %562, %563 : vector<8x128xf32>
    %565 = arith.mulf %552, %564 : vector<8x128xf32>
    %566 = arith.addf %561, %565 : vector<8x128xf32>
    %567 = math.tanh %566 : vector<8x128xf32>
    %cst_217 = arith.constant 1.000000e+00 : f32
    %568 = vector.broadcast %cst_217 : f32 to vector<8x128xf32>
    %569 = arith.subf %568, %560 : vector<8x128xf32>
    %570 = arith.mulf %569, %567 : vector<8x128xf32>
    %571 = arith.mulf %560, %539 : vector<8x128xf32>
    %572 = arith.addf %570, %571 : vector<8x128xf32>
    %c1_218 = arith.constant 1 : index
    %c0_219 = arith.constant 0 : index
    %c0_220 = arith.constant 0 : index
    %573 = vector.load %arg12[%c1_218, %c0_219, %c0_220] : memref<2x8x128xf32, #tpu.memory_space<vmem>>, vector<1x8x128xf32>
    %574 = vector.shape_cast %573 : vector<1x8x128xf32> to vector<8x128xf32>
    %575 = vector.shape_cast %572 : vector<8x128xf32> to vector<1x8x128xf32>
    tpu.vector_store %arg12[%c1_218, %c0_219, %c0_220], %575 {strides = array<i32>} : memref<2x8x128xf32, #tpu.memory_space<vmem>>, vector<1x8x128xf32>,
    %576 = arith.index_cast %c4_i32_208 : i32 to index
    %c0_221 = arith.constant 0 : index
    %c0_222 = arith.constant 0 : index
    %577 = vector.load %arg14[%576, %c0_221, %c0_222] : memref<8x8x128xf32, #tpu.memory_space<vmem>>, vector<1x8x128xf32>
    %578 = vector.shape_cast %577 : vector<1x8x128xf32> to vector<8x128xf32>
    %579 = vector.shape_cast %572 : vector<8x128xf32> to vector<1x8x128xf32>
    tpu.vector_store %arg14[%576, %c0_221, %c0_222], %579 {strides = array<i32>} : memref<8x8x128xf32, #tpu.memory_space<vmem>>, vector<1x8x128xf32>,
    %c5_i32_223 = arith.constant 5 : i32
    %c1_224 = arith.constant 1 : index
    %c0_225 = arith.constant 0 : index
    %c0_226 = arith.constant 0 : index
    %580 = vector.load %arg12[%c1_224, %c0_225, %c0_226] : memref<2x8x128xf32, #tpu.memory_space<vmem>>, vector<1x8x128xf32>
    %581 = vector.shape_cast %580 : vector<1x8x128xf32> to vector<8x128xf32>
    %582 = arith.index_cast %c5_i32_223 : i32 to index
    %c0_227 = arith.constant 0 : index
    %c0_228 = arith.constant 0 : index
    %583 = vector.load %arg13[%582, %c0_227, %c0_228] : memref<8x8x384xf32, #tpu.memory_space<vmem>>, vector<1x8x384xf32>
    %584 = vector.shape_cast %583 : vector<1x8x384xf32> to vector<8x384xf32>
    %585 = arith.truncf %581 : vector<8x128xf32> to vector<8x128xbf16>
    %cst_229 = arith.constant dense<0.000000e+00> : vector<8x384xf32>
    %586 = tpu.matmul %585, %367, %cst_229 {dimension_numbers = #tpu.dot_dimension_numbers<[1], [0], [0], [1], [0, 0, 1, 1], [], []>} : vector<8x128xbf16>, vector<128x384xbf16>, vector<8x384xf32> -> vector<8x384xf32>
    %587 = vector.extract_strided_slice %584 {offsets = [0, 0], sizes = [8, 128], strides = [1, 1]} : vector<8x384xf32> to vector<8x128xf32>
    %588 = vector.extract_strided_slice %586 {offsets = [0, 0], sizes = [8, 128], strides = [1, 1]} : vector<8x384xf32> to vector<8x128xf32>
    %589 = arith.addf %587, %588 : vector<8x128xf32>
    %590 = arith.negf %589 : vector<8x128xf32>
    %591 = math.exp %590 : vector<8x128xf32>
    %cst_230 = arith.constant 1.000000e+00 : f32
    %592 = vector.broadcast %cst_230 : f32 to vector<8x128xf32>
    %593 = arith.addf %592, %591 : vector<8x128xf32>
    %594 = arith.divf %592, %593 : vector<8x128xf32>
    %595 = vector.extract_strided_slice %584 {offsets = [0, 128], sizes = [8, 128], strides = [1, 1]} : vector<8x384xf32> to vector<8x128xf32>
    %596 = vector.extract_strided_slice %586 {offsets = [0, 128], sizes = [8, 128], strides = [1, 1]} : vector<8x384xf32> to vector<8x128xf32>
    %597 = arith.addf %595, %596 : vector<8x128xf32>
    %598 = arith.negf %597 : vector<8x128xf32>
    %599 = math.exp %598 : vector<8x128xf32>
    %cst_231 = arith.constant 1.000000e+00 : f32
    %600 = vector.broadcast %cst_231 : f32 to vector<8x128xf32>
    %601 = arith.addf %600, %599 : vector<8x128xf32>
    %602 = arith.divf %600, %601 : vector<8x128xf32>
    %603 = vector.extract_strided_slice %584 {offsets = [0, 256], sizes = [8, 128], strides = [1, 1]} : vector<8x384xf32> to vector<8x128xf32>
    %604 = vector.extract_strided_slice %586 {offsets = [0, 256], sizes = [8, 128], strides = [1, 1]} : vector<8x384xf32> to vector<8x128xf32>
    %605 = vector.broadcast %369 : vector<1x128xf32> to vector<8x128xf32>
    %606 = arith.addf %604, %605 : vector<8x128xf32>
    %607 = arith.mulf %594, %606 : vector<8x128xf32>
    %608 = arith.addf %603, %607 : vector<8x128xf32>
    %609 = math.tanh %608 : vector<8x128xf32>
    %cst_232 = arith.constant 1.000000e+00 : f32
    %610 = vector.broadcast %cst_232 : f32 to vector<8x128xf32>
    %611 = arith.subf %610, %602 : vector<8x128xf32>
    %612 = arith.mulf %611, %609 : vector<8x128xf32>
    %613 = arith.mulf %602, %581 : vector<8x128xf32>
    %614 = arith.addf %612, %613 : vector<8x128xf32>
    %c1_233 = arith.constant 1 : index
    %c0_234 = arith.constant 0 : index
    %c0_235 = arith.constant 0 : index
    %615 = vector.load %arg12[%c1_233, %c0_234, %c0_235] : memref<2x8x128xf32, #tpu.memory_space<vmem>>, vector<1x8x128xf32>
    %616 = vector.shape_cast %615 : vector<1x8x128xf32> to vector<8x128xf32>
    %617 = vector.shape_cast %614 : vector<8x128xf32> to vector<1x8x128xf32>
    tpu.vector_store %arg12[%c1_233, %c0_234, %c0_235], %617 {strides = array<i32>} : memref<2x8x128xf32, #tpu.memory_space<vmem>>, vector<1x8x128xf32>,
    %618 = arith.index_cast %c5_i32_223 : i32 to index
    %c0_236 = arith.constant 0 : index
    %c0_237 = arith.constant 0 : index
    %619 = vector.load %arg14[%618, %c0_236, %c0_237] : memref<8x8x128xf32, #tpu.memory_space<vmem>>, vector<1x8x128xf32>
    %620 = vector.shape_cast %619 : vector<1x8x128xf32> to vector<8x128xf32>
    %621 = vector.shape_cast %614 : vector<8x128xf32> to vector<1x8x128xf32>
    tpu.vector_store %arg14[%618, %c0_236, %c0_237], %621 {strides = array<i32>} : memref<8x8x128xf32, #tpu.memory_space<vmem>>, vector<1x8x128xf32>,
    %c6_i32_238 = arith.constant 6 : i32
    %c1_239 = arith.constant 1 : index
    %c0_240 = arith.constant 0 : index
    %c0_241 = arith.constant 0 : index
    %622 = vector.load %arg12[%c1_239, %c0_240, %c0_241] : memref<2x8x128xf32, #tpu.memory_space<vmem>>, vector<1x8x128xf32>
    %623 = vector.shape_cast %622 : vector<1x8x128xf32> to vector<8x128xf32>
    %624 = arith.index_cast %c6_i32_238 : i32 to index
    %c0_242 = arith.constant 0 : index
    %c0_243 = arith.constant 0 : index
    %625 = vector.load %arg13[%624, %c0_242, %c0_243] : memref<8x8x384xf32, #tpu.memory_space<vmem>>, vector<1x8x384xf32>
    %626 = vector.shape_cast %625 : vector<1x8x384xf32> to vector<8x384xf32>
    %627 = arith.truncf %623 : vector<8x128xf32> to vector<8x128xbf16>
    %cst_244 = arith.constant dense<0.000000e+00> : vector<8x384xf32>
    %628 = tpu.matmul %627, %367, %cst_244 {dimension_numbers = #tpu.dot_dimension_numbers<[1], [0], [0], [1], [0, 0, 1, 1], [], []>} : vector<8x128xbf16>, vector<128x384xbf16>, vector<8x384xf32> -> vector<8x384xf32>
    %629 = vector.extract_strided_slice %626 {offsets = [0, 0], sizes = [8, 128], strides = [1, 1]} : vector<8x384xf32> to vector<8x128xf32>
    %630 = vector.extract_strided_slice %628 {offsets = [0, 0], sizes = [8, 128], strides = [1, 1]} : vector<8x384xf32> to vector<8x128xf32>
    %631 = arith.addf %629, %630 : vector<8x128xf32>
    %632 = arith.negf %631 : vector<8x128xf32>
    %633 = math.exp %632 : vector<8x128xf32>
    %cst_245 = arith.constant 1.000000e+00 : f32
    %634 = vector.broadcast %cst_245 : f32 to vector<8x128xf32>
    %635 = arith.addf %634, %633 : vector<8x128xf32>
    %636 = arith.divf %634, %635 : vector<8x128xf32>
    %637 = vector.extract_strided_slice %626 {offsets = [0, 128], sizes = [8, 128], strides = [1, 1]} : vector<8x384xf32> to vector<8x128xf32>
    %638 = vector.extract_strided_slice %628 {offsets = [0, 128], sizes = [8, 128], strides = [1, 1]} : vector<8x384xf32> to vector<8x128xf32>
    %639 = arith.addf %637, %638 : vector<8x128xf32>
    %640 = arith.negf %639 : vector<8x128xf32>
    %641 = math.exp %640 : vector<8x128xf32>
    %cst_246 = arith.constant 1.000000e+00 : f32
    %642 = vector.broadcast %cst_246 : f32 to vector<8x128xf32>
    %643 = arith.addf %642, %641 : vector<8x128xf32>
    %644 = arith.divf %642, %643 : vector<8x128xf32>
    %645 = vector.extract_strided_slice %626 {offsets = [0, 256], sizes = [8, 128], strides = [1, 1]} : vector<8x384xf32> to vector<8x128xf32>
    %646 = vector.extract_strided_slice %628 {offsets = [0, 256], sizes = [8, 128], strides = [1, 1]} : vector<8x384xf32> to vector<8x128xf32>
    %647 = vector.broadcast %369 : vector<1x128xf32> to vector<8x128xf32>
    %648 = arith.addf %646, %647 : vector<8x128xf32>
    %649 = arith.mulf %636, %648 : vector<8x128xf32>
    %650 = arith.addf %645, %649 : vector<8x128xf32>
    %651 = math.tanh %650 : vector<8x128xf32>
    %cst_247 = arith.constant 1.000000e+00 : f32
    %652 = vector.broadcast %cst_247 : f32 to vector<8x128xf32>
    %653 = arith.subf %652, %644 : vector<8x128xf32>
    %654 = arith.mulf %653, %651 : vector<8x128xf32>
    %655 = arith.mulf %644, %623 : vector<8x128xf32>
    %656 = arith.addf %654, %655 : vector<8x128xf32>
    %c1_248 = arith.constant 1 : index
    %c0_249 = arith.constant 0 : index
    %c0_250 = arith.constant 0 : index
    %657 = vector.load %arg12[%c1_248, %c0_249, %c0_250] : memref<2x8x128xf32, #tpu.memory_space<vmem>>, vector<1x8x128xf32>
    %658 = vector.shape_cast %657 : vector<1x8x128xf32> to vector<8x128xf32>
    %659 = vector.shape_cast %656 : vector<8x128xf32> to vector<1x8x128xf32>
    tpu.vector_store %arg12[%c1_248, %c0_249, %c0_250], %659 {strides = array<i32>} : memref<2x8x128xf32, #tpu.memory_space<vmem>>, vector<1x8x128xf32>,
    %660 = arith.index_cast %c6_i32_238 : i32 to index
    %c0_251 = arith.constant 0 : index
    %c0_252 = arith.constant 0 : index
    %661 = vector.load %arg14[%660, %c0_251, %c0_252] : memref<8x8x128xf32, #tpu.memory_space<vmem>>, vector<1x8x128xf32>
    %662 = vector.shape_cast %661 : vector<1x8x128xf32> to vector<8x128xf32>
    %663 = vector.shape_cast %656 : vector<8x128xf32> to vector<1x8x128xf32>
    tpu.vector_store %arg14[%660, %c0_251, %c0_252], %663 {strides = array<i32>} : memref<8x8x128xf32, #tpu.memory_space<vmem>>, vector<1x8x128xf32>,
    %c7_i32_253 = arith.constant 7 : i32
    %c1_254 = arith.constant 1 : index
    %c0_255 = arith.constant 0 : index
    %c0_256 = arith.constant 0 : index
    %664 = vector.load %arg12[%c1_254, %c0_255, %c0_256] : memref<2x8x128xf32, #tpu.memory_space<vmem>>, vector<1x8x128xf32>
    %665 = vector.shape_cast %664 : vector<1x8x128xf32> to vector<8x128xf32>
    %666 = arith.index_cast %c7_i32_253 : i32 to index
    %c0_257 = arith.constant 0 : index
    %c0_258 = arith.constant 0 : index
    %667 = vector.load %arg13[%666, %c0_257, %c0_258] : memref<8x8x384xf32, #tpu.memory_space<vmem>>, vector<1x8x384xf32>
    %668 = vector.shape_cast %667 : vector<1x8x384xf32> to vector<8x384xf32>
    %669 = arith.truncf %665 : vector<8x128xf32> to vector<8x128xbf16>
    %cst_259 = arith.constant dense<0.000000e+00> : vector<8x384xf32>
    %670 = tpu.matmul %669, %367, %cst_259 {dimension_numbers = #tpu.dot_dimension_numbers<[1], [0], [0], [1], [0, 0, 1, 1], [], []>} : vector<8x128xbf16>, vector<128x384xbf16>, vector<8x384xf32> -> vector<8x384xf32>
    %671 = vector.extract_strided_slice %668 {offsets = [0, 0], sizes = [8, 128], strides = [1, 1]} : vector<8x384xf32> to vector<8x128xf32>
    %672 = vector.extract_strided_slice %670 {offsets = [0, 0], sizes = [8, 128], strides = [1, 1]} : vector<8x384xf32> to vector<8x128xf32>
    %673 = arith.addf %671, %672 : vector<8x128xf32>
    %674 = arith.negf %673 : vector<8x128xf32>
    %675 = math.exp %674 : vector<8x128xf32>
    %cst_260 = arith.constant 1.000000e+00 : f32
    %676 = vector.broadcast %cst_260 : f32 to vector<8x128xf32>
    %677 = arith.addf %676, %675 : vector<8x128xf32>
    %678 = arith.divf %676, %677 : vector<8x128xf32>
    %679 = vector.extract_strided_slice %668 {offsets = [0, 128], sizes = [8, 128], strides = [1, 1]} : vector<8x384xf32> to vector<8x128xf32>
    %680 = vector.extract_strided_slice %670 {offsets = [0, 128], sizes = [8, 128], strides = [1, 1]} : vector<8x384xf32> to vector<8x128xf32>
    %681 = arith.addf %679, %680 : vector<8x128xf32>
    %682 = arith.negf %681 : vector<8x128xf32>
    %683 = math.exp %682 : vector<8x128xf32>
    %cst_261 = arith.constant 1.000000e+00 : f32
    %684 = vector.broadcast %cst_261 : f32 to vector<8x128xf32>
    %685 = arith.addf %684, %683 : vector<8x128xf32>
    %686 = arith.divf %684, %685 : vector<8x128xf32>
    %687 = vector.extract_strided_slice %668 {offsets = [0, 256], sizes = [8, 128], strides = [1, 1]} : vector<8x384xf32> to vector<8x128xf32>
    %688 = vector.extract_strided_slice %670 {offsets = [0, 256], sizes = [8, 128], strides = [1, 1]} : vector<8x384xf32> to vector<8x128xf32>
    %689 = vector.broadcast %369 : vector<1x128xf32> to vector<8x128xf32>
    %690 = arith.addf %688, %689 : vector<8x128xf32>
    %691 = arith.mulf %678, %690 : vector<8x128xf32>
    %692 = arith.addf %687, %691 : vector<8x128xf32>
    %693 = math.tanh %692 : vector<8x128xf32>
    %cst_262 = arith.constant 1.000000e+00 : f32
    %694 = vector.broadcast %cst_262 : f32 to vector<8x128xf32>
    %695 = arith.subf %694, %686 : vector<8x128xf32>
    %696 = arith.mulf %695, %693 : vector<8x128xf32>
    %697 = arith.mulf %686, %665 : vector<8x128xf32>
    %698 = arith.addf %696, %697 : vector<8x128xf32>
    %c1_263 = arith.constant 1 : index
    %c0_264 = arith.constant 0 : index
    %c0_265 = arith.constant 0 : index
    %699 = vector.load %arg12[%c1_263, %c0_264, %c0_265] : memref<2x8x128xf32, #tpu.memory_space<vmem>>, vector<1x8x128xf32>
    %700 = vector.shape_cast %699 : vector<1x8x128xf32> to vector<8x128xf32>
    %701 = vector.shape_cast %698 : vector<8x128xf32> to vector<1x8x128xf32>
    tpu.vector_store %arg12[%c1_263, %c0_264, %c0_265], %701 {strides = array<i32>} : memref<2x8x128xf32, #tpu.memory_space<vmem>>, vector<1x8x128xf32>,
    %702 = arith.index_cast %c7_i32_253 : i32 to index
    %c0_266 = arith.constant 0 : index
    %c0_267 = arith.constant 0 : index
    %703 = vector.load %arg14[%702, %c0_266, %c0_267] : memref<8x8x128xf32, #tpu.memory_space<vmem>>, vector<1x8x128xf32>
    %704 = vector.shape_cast %703 : vector<1x8x128xf32> to vector<8x128xf32>
    %705 = vector.shape_cast %698 : vector<8x128xf32> to vector<1x8x128xf32>
    tpu.vector_store %arg14[%702, %c0_266, %c0_267], %705 {strides = array<i32>} : memref<8x8x128xf32, #tpu.memory_space<vmem>>, vector<1x8x128xf32>,
    %c8_i32_268 = arith.constant 8 : i32
    %c0_i32_269 = arith.constant 0 : i32
    %706 = arith.cmpi eq, %arg1, %c0_i32_269 : i32
    %707 = arith.extui %706 : i1 to i32
    %c0_i32_270 = arith.constant 0 : i32
    %708 = arith.cmpi ne, %707, %c0_i32_270 : i32
    scf.if %708 {
      %c0_283 = arith.constant 0 : index
      %c0_284 = arith.constant 0 : index
      %c0_285 = arith.constant 0 : index
      %724 = vector.load %arg12[%c0_283, %c0_284, %c0_285] : memref<2x8x128xf32, #tpu.memory_space<vmem>>, vector<2x8x128xf32>
      %c0_286 = arith.constant 0 : index
      %c0_287 = arith.constant 0 : index
      %c0_288 = arith.constant 0 : index
      %725 = vector.load %arg11[%c0_286, %c0_287, %c0_288] : memref<2x8x128xf32, #tpu.memory_space<vmem>>, vector<2x8x128xf32>
      tpu.vector_store %arg11[%c0_286, %c0_287, %c0_288], %724 {strides = array<i32>} : memref<2x8x128xf32, #tpu.memory_space<vmem>>, vector<2x8x128xf32>,
    } else {
    }
    %c0_271 = arith.constant 0 : index
    %c0_272 = arith.constant 0 : index
    %c0_273 = arith.constant 0 : index
    %709 = vector.load %arg14[%c0_271, %c0_272, %c0_273] : memref<8x8x128xf32, #tpu.memory_space<vmem>>, vector<8x8x128xf32>
    %710 = vector.shape_cast %709 : vector<8x8x128xf32> to vector<64x128xf32>
    %711 = arith.truncf %710 : vector<64x128xf32> to vector<64x128xbf16>
    %c0_274 = arith.constant 0 : index
    %c0_275 = arith.constant 0 : index
    %712 = vector.load %arg8[%c0_274, %c0_275] : memref<128x128xbf16, #tpu.memory_space<vmem>>, vector<128x128xbf16>
    %cst_276 = arith.constant dense<0.000000e+00> : vector<64x128xf32>
    %713 = tpu.matmul %711, %712, %cst_276 {dimension_numbers = #tpu.dot_dimension_numbers<[1], [0], [0], [1], [0, 0, 1, 1], [], []>} : vector<64x128xbf16>, vector<128x128xbf16>, vector<64x128xf32> -> vector<64x128xf32>
    %c0_277 = arith.constant 0 : index
    %c0_278 = arith.constant 0 : index
    %714 = vector.load %arg9[%c0_277, %c0_278] : memref<1x128xf32, #tpu.memory_space<vmem>>, vector<1x128xf32>
    %715 = vector.broadcast %714 : vector<1x128xf32> to vector<64x128xf32>
    %716 = arith.addf %713, %715 : vector<64x128xf32>
    %717 = arith.negf %716 : vector<64x128xf32>
    %718 = math.exp %717 : vector<64x128xf32>
    %cst_279 = arith.constant 1.000000e+00 : f32
    %719 = vector.broadcast %cst_279 : f32 to vector<64x128xf32>
    %720 = arith.addf %719, %718 : vector<64x128xf32>
    %721 = arith.divf %719, %720 : vector<64x128xf32>
    %722 = vector.shape_cast %721 : vector<64x128xf32> to vector<8x8x128xf32>
    %c0_280 = arith.constant 0 : index
    %c0_281 = arith.constant 0 : index
    %c0_282 = arith.constant 0 : index
    %723 = vector.load %arg10[%c0_280, %c0_281, %c0_282] : memref<8x8x128xf32, #tpu.memory_space<vmem>>, vector<8x8x128xf32>
    tpu.vector_store %arg10[%c0_280, %c0_281, %c0_282], %722 {strides = array<i32>} : memref<8x8x128xf32, #tpu.memory_space<vmem>>, vector<8x8x128xf32>,
    return
  }
  func.func @transform_0(%arg0: i32, %arg1: i32) -> (i32, i32, i32) {
    %c0_i32 = arith.constant 0 : i32
    %c0_i32_0 = arith.constant 0 : i32
    return %arg1, %arg0, %c0_i32 : i32, i32, i32
  }
  func.func @transform_1(%arg0: i32, %arg1: i32) -> (i32, i32) {
    %c0_i32 = arith.constant 0 : i32
    %c0_i32_0 = arith.constant 0 : i32
    %c0_i32_1 = arith.constant 0 : i32
    return %c0_i32, %c0_i32_0 : i32, i32
  }
  func.func @transform_2(%arg0: i32, %arg1: i32) -> (i32, i32, i32) {
    %c0_i32 = arith.constant 0 : i32
    %c0_i32_0 = arith.constant 0 : i32
    %c0_i32_1 = arith.constant 0 : i32
    %c0_i32_2 = arith.constant 0 : i32
    return %c0_i32, %c0_i32_0, %c0_i32_1 : i32, i32, i32
  }
  func.func @transform_3(%arg0: i32, %arg1: i32) -> (i32, i32, i32) {
    %c0_i32 = arith.constant 0 : i32
    %c0_i32_0 = arith.constant 0 : i32
    %c0_i32_1 = arith.constant 0 : i32
    %c0_i32_2 = arith.constant 0 : i32
    return %c0_i32, %c0_i32_0, %c0_i32_1 : i32, i32, i32
  }
  func.func @transform_4(%arg0: i32, %arg1: i32) -> (i32, i32, i32) {
    %c0_i32 = arith.constant 0 : i32
    %c0_i32_0 = arith.constant 0 : i32
    %c0_i32_1 = arith.constant 0 : i32
    %c0_i32_2 = arith.constant 0 : i32
    return %c0_i32, %c0_i32_0, %c0_i32_1 : i32, i32, i32
  }
  func.func @transform_5(%arg0: i32, %arg1: i32) -> (i32, i32, i32) {
    %c0_i32 = arith.constant 0 : i32
    %c0_i32_0 = arith.constant 0 : i32
    %c0_i32_1 = arith.constant 0 : i32
    %c0_i32_2 = arith.constant 0 : i32
    return %c0_i32, %c0_i32_0, %c0_i32_1 : i32, i32, i32
  }
  func.func @transform_6(%arg0: i32, %arg1: i32) -> (i32, i32) {
    %c0_i32 = arith.constant 0 : i32
    %c0_i32_0 = arith.constant 0 : i32
    %c0_i32_1 = arith.constant 0 : i32
    return %c0_i32, %c0_i32_0 : i32, i32
  }
  func.func @transform_7(%arg0: i32, %arg1: i32) -> (i32, i32) {
    %c0_i32 = arith.constant 0 : i32
    %c0_i32_0 = arith.constant 0 : i32
    %c0_i32_1 = arith.constant 0 : i32
    return %c0_i32, %c0_i32_0 : i32, i32
  }
  func.func @transform_8(%arg0: i32, %arg1: i32) -> (i32, i32, i32) {
    %c0_i32 = arith.constant 0 : i32
    %c0_i32_0 = arith.constant 0 : i32
    return %arg1, %arg0, %c0_i32 : i32, i32, i32
  }
  func.func @transform_9(%arg0: i32, %arg1: i32) -> (i32, i32, i32) {
    %c0_i32 = arith.constant 0 : i32
    %c0_i32_0 = arith.constant 0 : i32
    %c0_i32_1 = arith.constant 0 : i32
    return %c0_i32, %arg0, %c0_i32_0 : i32, i32, i32
  }
}

</mosaic_0001>

<llo_original>
// kernel: time_gan_module_forward.1
$region0: #{time_gan_module_forward.1}
  #allocation0 [shape = 'u32[]', space=smem, size = 0x4, offset = 0x4, fixed_abs, tag = 'smem constant byte address 0x4 - core index']
  #allocation1 [shape = 'u32[72,128]{1,0:T(1,128)}', space=vmem, size = 0x9000, scoped, tag = 'internal scratch']
  #allocation2 [shape = 'f32[2,8,128]{2,1,0:T(8,128)}', space=vmem, size = 0x2000, scoped, tag = 'scratch operand']
  #allocation3 [shape = 'f32[8,8,384]{2,1,0:T(8,128)}', space=vmem, size = 0x18000, scoped, tag = 'scratch operand']
  #allocation4 [shape = 'f32[8,8,128]{2,1,0:T(8,128)}', space=vmem, size = 0x8000, scoped, tag = 'scratch operand']
  %s0 = inlined_call_operand.vmem [shape: f32[8,8,128], index: 0, kind: input, shape index: {}]
  %s1 = inlined_call_operand.hbm [shape: bf16[128,384], index: 1, kind: input, shape index: {}]
  %s2 = inlined_call_operand.hbm [shape: bf16[1,128,384], index: 2, kind: input, shape index: {}]
  %s3 = inlined_call_operand.hbm [shape: bf16[2,128,384], index: 3, kind: input, shape index: {}]
  %s4 = inlined_call_operand.vmem [shape: f32[2,1,384], index: 4, kind: input, shape index: {}]
  %s5 = inlined_call_operand.vmem [shape: f32[2,1,128], index: 5, kind: input, shape index: {}]
  %s6 = inlined_call_operand.vmem [shape: bf16[128,128], index: 6, kind: input, shape index: {}]
  %s7 = inlined_call_operand.vmem [shape: f32[1,128], index: 7, kind: input, shape index: {}]
  %s8 = inlined_call_operand.vmem [shape: f32[8,8,128], index: 8, kind: output, shape index: {0}]
  %s9 = inlined_call_operand.vmem [shape: f32[2,8,128], index: 9, kind: output, shape index: {1}]
  %10 = xla_tuple %s8, %s9
  %s11 = sld [smem:[#allocation0]]
  $region70: #{time_gan_module_forward.1} parent=0
    _
  %s13 = ssub.s32 1, %s11
  %s14 = scalar_select 0, %s13, %s11
  $region1: #{time_gan_module_forward.1} parent=0
    #allocation5 [shape = 'u8[98304]{0}', space=vmem, size = 0x18000, scoped, tag = 'input window, operand 1, single buffered']
    #allocation6 [shape = 's32[1]{0}', space=sflag, size = 0x4, scoped, tag = 'scoped memory for time_gan_module_forward.1']
    #allocation7 [shape = 'u8[98304]{0}', space=vmem, size = 0x18000, scoped, tag = 'input window, operand 2, single buffered']
    #allocation8 [shape = 's32[1]{0}', space=sflag, size = 0x4, scoped, tag = 'scoped memory for time_gan_module_forward.1']
    #allocation9 [shape = 'u8[196608]{0}', space=vmem, size = 0x30000, scoped, tag = 'input window, operand 3, single buffered']
    %15 = vsyncpa [#allocation6], 0
    %16 = vsyncpa [#allocation8], 0
    // Predicated region
    $region2: #{time_gan_module_forward.1} parent=1 // pred_check
      _
    $region3: #{time_gan_module_forward.1} parent=1 // pred_check_branch
      %18 = sbr.rel (0) target = $region5
    $region4: #{time_gan_module_forward.1} parent=1 // pred_region
      _
    $region5: #{time_gan_module_forward.1} parent=1 // pred_fallthru
      _
    // Predicated region
    $region6: #{time_gan_module_forward.1} parent=1 // pred_check
      _
    $region7: #{time_gan_module_forward.1} parent=1 // pred_check_branch
      %20 = sbr.rel (0) target = $region9
    $region8: #{time_gan_module_forward.1} parent=1 // pred_region
      %22 = vsyncadd [#allocation6], 0
      %s23 = sshll.u32 %s1, 4
      %s24 = int_to_ptr.hbm [resolvable:$true] %s23
      %s25 = sshll.u32 [#allocation5], 4
      %s26 = int_to_ptr.vmem [resolvable:$true] %s25
      %31 = dma.hbm_to_vmem [thread:$0]  %s24, 3072, %s26, [#allocation6], 192, 192, 12
    $region9: #{time_gan_module_forward.1} parent=1 // pred_fallthru
      _
    // Predicated region
    $region10: #{time_gan_module_forward.1} parent=1 // pred_check
      _
    $region11: #{time_gan_module_forward.1} parent=1 // pred_check_branch
      %33 = sbr.rel (0) target = $region13
    $region12: #{time_gan_module_forward.1} parent=1 // pred_region
      %35 = vsyncadd [#allocation8], 0
      %s36 = sshll.u32 %s2, 4
      %s37 = int_to_ptr.hbm [resolvable:$true] %s36
      %s38 = sshll.u32 [#allocation7], 4
      %s39 = int_to_ptr.vmem [resolvable:$true] %s38
      %44 = dma.hbm_to_vmem [thread:$0]  %s37, 3072, %s39, [#allocation8], 192, 192, 12
    $region13: #{time_gan_module_forward.1} parent=1 // pred_fallthru
      _
    // Predicated region
    $region14: #{time_gan_module_forward.1} parent=1 // pred_check
      _
    $region15: #{time_gan_module_forward.1} parent=1 // pred_check_branch
      %46 = sbr.rel (0) target = $region17
    $region16: #{time_gan_module_forward.1} parent=1 // pred_region
      %48 = vsyncadd [#allocation8], 0
      %s49 = sshll.u32 %s3, 4
      %s50 = int_to_ptr.hbm [resolvable:$true] %s49
      %s51 = sshll.u32 [#allocation9], 4
      %s52 = int_to_ptr.vmem [resolvable:$true] %s51
      %57 = dma.hbm_to_vmem [thread:$0]  %s50, 6144, %s52, [#allocation8], 192, 192, 12
    $region17: #{time_gan_module_forward.1} parent=1 // pred_fallthru
      _
    // Predicated region
    $region18: #{time_gan_module_forward.1} parent=1 // pred_check
      _
    $region19: #{time_gan_module_forward.1} parent=1 // pred_check_branch
      %59 = sbr.rel (0) target = $region21
    $region20: #{time_gan_module_forward.1} parent=1 // pred_region
      _
    $region21: #{time_gan_module_forward.1} parent=1 // pred_fallthru
      _
    // Predicated region
    $region22: #{time_gan_module_forward.1} parent=1 // pred_check
      _
    $region23: #{time_gan_module_forward.1} parent=1 // pred_check_branch
      %61 = sbr.rel (0) target = $region25
    $region24: #{time_gan_module_forward.1} parent=1 // pred_region
      _
    $region25: #{time_gan_module_forward.1} parent=1 // pred_fallthru
      _
    // Predicated region
    $region26: #{time_gan_module_forward.1} parent=1 // pred_check
      _
    $region27: #{time_gan_module_forward.1} parent=1 // pred_check_branch
      %63 = sbr.rel (0) target = $region29
    $region28: #{time_gan_module_forward.1} parent=1 // pred_region
      _
    $region29: #{time_gan_module_forward.1} parent=1 // pred_fallthru
      _
    // Predicated region
    $region30: #{time_gan_module_forward.1} parent=1 // pred_check
      _
    $region31: #{time_gan_module_forward.1} parent=1 // pred_check_branch
      %65 = sbr.rel (0) target = $region33
    $region32: #{time_gan_module_forward.1} parent=1 // pred_region
      _
    $region33: #{time_gan_module_forward.1} parent=1 // pred_fallthru
      _
    // Predicated region
    $region34: #{time_gan_module_forward.1} parent=1 // pred_check
      _
    $region35: #{time_gan_module_forward.1} parent=1 // pred_check_branch
      %67 = sbr.rel (0) target = $region37
    $region36: #{time_gan_module_forward.1} parent=1 // pred_region
      %69 = dma.done [#allocation6], 3072
    $region37: #{time_gan_module_forward.1} parent=1 // pred_fallthru
      _
    // Predicated region
    $region38: #{time_gan_module_forward.1} parent=1 // pred_check
      _
    $region39: #{time_gan_module_forward.1} parent=1 // pred_check_branch
      %71 = sbr.rel (0) target = $region41
    $region40: #{time_gan_module_forward.1} parent=1 // pred_region
      %73 = dma.done [#allocation8], 3072
    $region41: #{time_gan_module_forward.1} parent=1 // pred_fallthru
      _
    // Predicated region
    $region42: #{time_gan_module_forward.1} parent=1 // pred_check
      _
    $region43: #{time_gan_module_forward.1} parent=1 // pred_check_branch
      %75 = sbr.rel (0) target = $region45
    $region44: #{time_gan_module_forward.1} parent=1 // pred_region
      %77 = dma.done [#allocation8], 6144
    $region45: #{time_gan_module_forward.1} parent=1 // pred_fallthru
      _
    %p78 = scmp.eq.s32.totalorder 0, 0
    // Predicated region
    $region46: #{time_gan_module_forward.1} parent=1 // pred_check
      %p79 = pneg %p78
    $region47: #{time_gan_module_forward.1} parent=1 // pred_check_branch
      %81 = sbr.rel (%p79) target = $region49
    $region48: #{time_gan_module_forward.1} parent=1 // pred_region
      %82 = vst [vmem:[#allocation2] sm:$0xff] 0.0
      %83 = vst [vmem:[#allocation2 + $0x8] sm:$0xff] 0.0
    $region49: #{time_gan_module_forward.1} parent=1 // pred_fallthru
      _
    %v84 = vld [vmem:[%s0] sm:$0xff]
    %v85 = vld [vmem:[%s0 + $0x8] sm:$0xff]
    %v86 = vld [vmem:[%s0 + $0x10] sm:$0xff]
    %v87 = vld [vmem:[%s0 + $0x18] sm:$0xff]
    %v88 = vld [vmem:[%s0 + $0x20] sm:$0xff]
    %v89 = vld [vmem:[%s0 + $0x28] sm:$0xff]
    %v90 = vld [vmem:[%s0 + $0x30] sm:$0xff]
    %v91 = vld [vmem:[%s0 + $0x38] sm:$0xff]
    %v92 = vpack.c.bf16 %v85, %v84
    %v93 = vpack.c.bf16 %v87, %v86
    %v94 = vpack.c.bf16 %v89, %v88
    %v95 = vpack.c.bf16 %v91, %v90
    %v96 = vld [vmem:[#allocation5] sm:$0xff]
    %v97 = vld [vmem:[#allocation5 + $0x8] sm:$0xf]
    %v98 = vld [vmem:[#allocation5 + $0xc] sm:$0xff]
    %v99 = vld [vmem:[#allocation5 + $0x14] sm:$0xf]
    %v100 = vld [vmem:[#allocation5 + $0x18] sm:$0xff]
    %v101 = vld [vmem:[#allocation5 + $0x20] sm:$0xf]
    %v102 = vld [vmem:[#allocation5 + $0x24] sm:$0xff]
    %v103 = vld [vmem:[#allocation5 + $0x2c] sm:$0xf]
    %v104 = vld [vmem:[#allocation5 + $0x30] sm:$0xff]
    %v105 = vld [vmem:[#allocation5 + $0x38] sm:$0xf]
    %v106 = vld [vmem:[#allocation5 + $0x3c] sm:$0xff]
    %v107 = vld [vmem:[#allocation5 + $0x44] sm:$0xf]
    %v108 = vld [vmem:[#allocation5 + $0x48] sm:$0xff]
    %v109 = vld [vmem:[#allocation5 + $0x50] sm:$0xf]
    %v110 = vld [vmem:[#allocation5 + $0x54] sm:$0xff]
    %v111 = vld [vmem:[#allocation5 + $0x5c] sm:$0xf]
    %v112 = vld [vmem:[#allocation5 + $0x60] sm:$0xff]
    %v113 = vld [vmem:[#allocation5 + $0x68] sm:$0xf]
    %v114 = vld [vmem:[#allocation5 + $0x6c] sm:$0xff]
    %v115 = vld [vmem:[#allocation5 + $0x74] sm:$0xf]
    %v116 = vld [vmem:[#allocation5 + $0x78] sm:$0xff]
    %v117 = vld [vmem:[#allocation5 + $0x80] sm:$0xf]
    %v118 = vld [vmem:[#allocation5 + $0x84] sm:$0xff]
    %v119 = vld [vmem:[#allocation5 + $0x8c] sm:$0xf]
    %v120 = vld [vmem:[#allocation5 + $0x90] sm:$0xff]
    %v121 = vld [vmem:[#allocation5 + $0x98] sm:$0xf]
    %v122 = vld [vmem:[#allocation5 + $0x9c] sm:$0xff]
    %v123 = vld [vmem:[#allocation5 + $0xa4] sm:$0xf]
    %v124 = vld [vmem:[#allocation5 + $0xa8] sm:$0xff]
    %v125 = vld [vmem:[#allocation5 + $0xb0] sm:$0xf]
    %v126 = vld [vmem:[#allocation5 + $0xb4] sm:$0xff]
    %v127 = vld [vmem:[#allocation5 + $0xbc] sm:$0xf]
    %v128 = vld [vmem:[%s4] sm:$0x7]
    %v130 = vperm.slane %v128, 0
    %v131 = vperm.slane %v128, 1
    %v132 = vperm.slane %v128, 2
    %v168 = vunpack.c.l.b16 %v96
    %v169 = vunpack.c.h.b16 %v96
    %v170 = vunpack.c.l.b16 %v97
    %v171 = vunpack.c.l.b16 %v98
    %v172 = vunpack.c.h.b16 %v98
    %v173 = vunpack.c.l.b16 %v99
    %v174 = vunpack.c.l.b16 %v100
    %v175 = vunpack.c.h.b16 %v100
    %v176 = vunpack.c.l.b16 %v101
    %v177 = vunpack.c.l.b16 %v102
    %v178 = vunpack.c.h.b16 %v102
    %v179 = vunpack.c.l.b16 %v103
    %v180 = vunpack.c.l.b16 %v104
    %v181 = vunpack.c.h.b16 %v104
    %v182 = vunpack.c.l.b16 %v105
    %v183 = vunpack.c.l.b16 %v106
    %v184 = vunpack.c.h.b16 %v106
    %v185 = vunpack.c.l.b16 %v107
    %v186 = vunpack.c.l.b16 %v108
    %v187 = vunpack.c.h.b16 %v108
    %v188 = vunpack.c.l.b16 %v109
    %v189 = vunpack.c.l.b16 %v110
    %v190 = vunpack.c.h.b16 %v110
    %v191 = vunpack.c.l.b16 %v111
    %v192 = vunpack.c.l.b16 %v112
    %v193 = vunpack.c.h.b16 %v112
    %v194 = vunpack.c.l.b16 %v113
    %v195 = vunpack.c.l.b16 %v114
    %v196 = vunpack.c.h.b16 %v114
    %v197 = vunpack.c.l.b16 %v115
    %v198 = vunpack.c.l.b16 %v116
    %v199 = vunpack.c.h.b16 %v116
    %v200 = vunpack.c.l.b16 %v117
    %v201 = vunpack.c.l.b16 %v118
    %v202 = vunpack.c.h.b16 %v118
    %v203 = vunpack.c.l.b16 %v119
    %v204 = vunpack.c.l.b16 %v120
    %v205 = vunpack.c.h.b16 %v120
    %v206 = vunpack.c.l.b16 %v121
    %v207 = vunpack.c.l.b16 %v122
    %v208 = vunpack.c.h.b16 %v122
    %v209 = vunpack.c.l.b16 %v123
    %v210 = vunpack.c.l.b16 %v124
    %v211 = vunpack.c.h.b16 %v124
    %v212 = vunpack.c.l.b16 %v125
    %v213 = vunpack.c.l.b16 %v126
    %v214 = vunpack.c.h.b16 %v126
    %v215 = vunpack.c.l.b16 %v127
    %v216 = vpack.c.b16 %v171, %v168
    %v217 = vpack.c.b16 %v172, %v169
    %v218 = vpack.c.b16 %v173, %v170
    %v219 = vpack.c.b16 %v177, %v174
    %v220 = vpack.c.b16 %v178, %v175
    %v221 = vpack.c.b16 %v179, %v176
    %v222 = vpack.c.b16 %v183, %v180
    %v223 = vpack.c.b16 %v184, %v181
    %v224 = vpack.c.b16 %v185, %v182
    %v225 = vpack.c.b16 %v189, %v186
    %v226 = vpack.c.b16 %v190, %v187
    %v227 = vpack.c.b16 %v191, %v188
    %v228 = vpack.c.b16 %v195, %v192
    %v229 = vpack.c.b16 %v196, %v193
    %v230 = vpack.c.b16 %v197, %v194
    %v231 = vpack.c.b16 %v201, %v198
    %v232 = vpack.c.b16 %v202, %v199
    %v233 = vpack.c.b16 %v203, %v200
    %v234 = vpack.c.b16 %v207, %v204
    %v235 = vpack.c.b16 %v208, %v205
    %v236 = vpack.c.b16 %v209, %v206
    %v237 = vpack.c.b16 %v213, %v210
    %v238 = vpack.c.b16 %v214, %v211
    %v239 = vpack.c.b16 %v215, %v212
    %264 = vmatpush.bf16.msra.mxu0 %v237
    %265 = vmatpush.bf16.msra.mxu0 %v234
    %266 = vmatpush.bf16.msra.mxu0 %v231
    %267 = vmatpush.bf16.msra.mxu0 %v228
    %268 = vmatpush.bf16.msra.mxu0 %v225
    %269 = vmatpush.bf16.msra.mxu0 %v222
    %270 = vmatpush.bf16.msra.mxu0 %v219
    %271 = vmatpush.bf16.msra.mxu0 %v216
    %272 = vmatmul.bf16.gmra.mxu0 %v92
    %v273 = vpop.f32.mrf.mxu0
    %v274 = vadd.f32 %v130, %v273
    %v275 = vpop.f32.mrf.mxu0
    %v276 = vadd.f32 %v130, %v275
    %277 = vmatmul.bf16.gmra.mxu0 %v93
    %v278 = vpop.f32.mrf.mxu0
    %v279 = vadd.f32 %v130, %v278
    %v280 = vpop.f32.mrf.mxu0
    %v281 = vadd.f32 %v130, %v280
    %282 = vmatmul.bf16.gmra.mxu0 %v94
    %v283 = vpop.f32.mrf.mxu0
    %v284 = vadd.f32 %v130, %v283
    %v285 = vpop.f32.mrf.mxu0
    %v286 = vadd.f32 %v130, %v285
    %287 = vmatmul.bf16.gmra.mxu0 %v95
    %v288 = vpop.f32.mrf.mxu0
    %v289 = vadd.f32 %v130, %v288
    %v290 = vpop.f32.mrf.mxu0
    %v291 = vadd.f32 %v130, %v290
    %292 = vdwg.mxu0
    %293 = vmatpush.bf16.msra.mxu0 %v238
    %294 = vmatpush.bf16.msra.mxu0 %v235
    %295 = vmatpush.bf16.msra.mxu0 %v232
    %296 = vmatpush.bf16.msra.mxu0 %v229
    %297 = vmatpush.bf16.msra.mxu0 %v226
    %298 = vmatpush.bf16.msra.mxu0 %v223
    %299 = vmatpush.bf16.msra.mxu0 %v220
    %300 = vmatpush.bf16.msra.mxu0 %v217
    %301 = vmatmul.bf16.gmra.mxu0 %v92
    %v302 = vpop.f32.mrf.mxu0
    %v303 = vadd.f32 %v131, %v302
    %v304 = vpop.f32.mrf.mxu0
    %v305 = vadd.f32 %v131, %v304
    %306 = vmatmul.bf16.gmra.mxu0 %v93
    %v307 = vpop.f32.mrf.mxu0
    %v308 = vadd.f32 %v131, %v307
    %v309 = vpop.f32.mrf.mxu0
    %v310 = vadd.f32 %v131, %v309
    %311 = vmatmul.bf16.gmra.mxu0 %v94
    %v312 = vpop.f32.mrf.mxu0
    %v313 = vadd.f32 %v131, %v312
    %v314 = vpop.f32.mrf.mxu0
    %v315 = vadd.f32 %v131, %v314
    %316 = vmatmul.bf16.gmra.mxu0 %v95
    %v317 = vpop.f32.mrf.mxu0
    %v318 = vadd.f32 %v131, %v317
    %v319 = vpop.f32.mrf.mxu0
    %v320 = vadd.f32 %v131, %v319
    %321 = vdwg.mxu0
    %322 = vmatpush.bf16.msra.mxu0 %v239
    %323 = vmatpush.bf16.msra.mxu0 %v236
    %324 = vmatpush.bf16.msra.mxu0 %v233
    %325 = vmatpush.bf16.msra.mxu0 %v230
    %326 = vmatpush.bf16.msra.mxu0 %v227
    %327 = vmatpush.bf16.msra.mxu0 %v224
    %328 = vmatpush.bf16.msra.mxu0 %v221
    %329 = vmatpush.bf16.msra.mxu0 %v218
    %330 = vmatmul.bf16.gmra.mxu0 %v92
    %v331 = vpop.f32.mrf.mxu0
    %v332 = vadd.f32 %v132, %v331
    %v333 = vpop.f32.mrf.mxu0
    %v334 = vadd.f32 %v132, %v333
    %335 = vmatmul.bf16.gmra.mxu0 %v93
    %v336 = vpop.f32.mrf.mxu0
    %v337 = vadd.f32 %v132, %v336
    %v338 = vpop.f32.mrf.mxu0
    %v339 = vadd.f32 %v132, %v338
    %340 = vmatmul.bf16.gmra.mxu0 %v94
    %v341 = vpop.f32.mrf.mxu0
    %v342 = vadd.f32 %v132, %v341
    %v343 = vpop.f32.mrf.mxu0
    %v344 = vadd.f32 %v132, %v343
    %345 = vmatmul.bf16.gmra.mxu0 %v95
    %v346 = vpop.f32.mrf.mxu0
    %v347 = vadd.f32 %v132, %v346
    %v348 = vpop.f32.mrf.mxu0
    %v349 = vadd.f32 %v132, %v348
    %350 = vdwg.mxu0
    %351 = vst [vmem:[#allocation3] sm:$0xff] %v274
    %352 = vst [vmem:[#allocation3 + $0x8] sm:$0xff] %v303
    %353 = vst [vmem:[#allocation3 + $0x10] sm:$0xff] %v332
    %354 = vst [vmem:[#allocation3 + $0x18] sm:$0xff] %v276
    %355 = vst [vmem:[#allocation3 + $0x20] sm:$0xff] %v305
    %356 = vst [vmem:[#allocation3 + $0x28] sm:$0xff] %v334
    %357 = vst [vmem:[#allocation3 + $0x30] sm:$0xff] %v279
    %358 = vst [vmem:[#allocation3 + $0x38] sm:$0xff] %v308
    %359 = vst [vmem:[#allocation3 + $0x40] sm:$0xff] %v337
    %360 = vst [vmem:[#allocation3 + $0x48] sm:$0xff] %v281
    %361 = vst [vmem:[#allocation3 + $0x50] sm:$0xff] %v310
    %362 = vst [vmem:[#allocation3 + $0x58] sm:$0xff] %v339
    %363 = vst [vmem:[#allocation3 + $0x60] sm:$0xff] %v284
    %364 = vst [vmem:[#allocation3 + $0x68] sm:$0xff] %v313
    %365 = vst [vmem:[#allocation3 + $0x70] sm:$0xff] %v342
    %366 = vst [vmem:[#allocation3 + $0x78] sm:$0xff] %v286
    %367 = vst [vmem:[#allocation3 + $0x80] sm:$0xff] %v315
    %368 = vst [vmem:[#allocation3 + $0x88] sm:$0xff] %v344
    %369 = vst [vmem:[#allocation3 + $0x90] sm:$0xff] %v289
    %370 = vst [vmem:[#allocation3 + $0x98] sm:$0xff] %v318
    %371 = vst [vmem:[#allocation3 + $0xa0] sm:$0xff] %v347
    %372 = vst [vmem:[#allocation3 + $0xa8] sm:$0xff] %v291
    %373 = vst [vmem:[#allocation3 + $0xb0] sm:$0xff] %v320
    %374 = vst [vmem:[#allocation3 + $0xb8] sm:$0xff] %v349
    %v375 = vld [vmem:[#allocation9] sm:$0xff]
    %v376 = vld [vmem:[#allocation9 + $0x8] sm:$0xf]
    %v377 = vld [vmem:[#allocation9 + $0xc] sm:$0xff]
    %v378 = vld [vmem:[#allocation9 + $0x14] sm:$0xf]
    %v379 = vld [vmem:[#allocation9 + $0x18] sm:$0xff]
    %v380 = vld [vmem:[#allocation9 + $0x20] sm:$0xf]
    %v381 = vld [vmem:[#allocation9 + $0x24] sm:$0xff]
    %v382 = vld [vmem:[#allocation9 + $0x2c] sm:$0xf]
    %v383 = vld [vmem:[#allocation9 + $0x30] sm:$0xff]
    %v384 = vld [vmem:[#allocation9 + $0x38] sm:$0xf]
    %v385 = vld [vmem:[#allocation9 + $0x3c] sm:$0xff]
    %v386 = vld [vmem:[#allocation9 + $0x44] sm:$0xf]
    %v387 = vld [vmem:[#allocation9 + $0x48] sm:$0xff]
    %v388 = vld [vmem:[#allocation9 + $0x50] sm:$0xf]
    %v389 = vld [vmem:[#allocation9 + $0x54] sm:$0xff]
    %v390 = vld [vmem:[#allocation9 + $0x5c] sm:$0xf]
    %v391 = vld [vmem:[#allocation9 + $0x60] sm:$0xff]
    %v392 = vld [vmem:[#allocation9 + $0x68] sm:$0xf]
    %v393 = vld [vmem:[#allocation9 + $0x6c] sm:$0xff]
    %v394 = vld [vmem:[#allocation9 + $0x74] sm:$0xf]
    %v395 = vld [vmem:[#allocation9 + $0x78] sm:$0xff]
    %v396 = vld [vmem:[#allocation9 + $0x80] sm:$0xf]
    %v397 = vld [vmem:[#allocation9 + $0x84] sm:$0xff]
    %v398 = vld [vmem:[#allocation9 + $0x8c] sm:$0xf]
    %v399 = vld [vmem:[#allocation9 + $0x90] sm:$0xff]
    %v400 = vld [vmem:[#allocation9 + $0x98] sm:$0xf]
    %v401 = vld [vmem:[#allocation9 + $0x9c] sm:$0xff]
    %v402 = vld [vmem:[#allocation9 + $0xa4] sm:$0xf]
    %v403 = vld [vmem:[#allocation9 + $0xa8] sm:$0xff]
    %v404 = vld [vmem:[#allocation9 + $0xb0] sm:$0xf]
    %v405 = vld [vmem:[#allocation9 + $0xb4] sm:$0xff]
    %v406 = vld [vmem:[#allocation9 + $0xbc] sm:$0xf]
    %v407 = vld [vmem:[%s5] sm:$0x1]
    %v408 = vld [vmem:[#allocation2] sm:$0xff]
    %v409 = vld [vmem:[#allocation3] sm:$0xff]
    %v410 = vld [vmem:[#allocation3 + $0x8] sm:$0xff]
    %v411 = vld [vmem:[#allocation3 + $0x10] sm:$0xff]
    %v412 = vpack.c.bf16 %v408, %v408
    %v445 = vunpack.c.l.b16 %v375
    %v446 = vunpack.c.h.b16 %v375
    %v447 = vunpack.c.l.b16 %v376
    %v448 = vunpack.c.l.b16 %v377
    %v449 = vunpack.c.h.b16 %v377
    %v450 = vunpack.c.l.b16 %v378
    %v451 = vunpack.c.l.b16 %v379
    %v452 = vunpack.c.h.b16 %v379
    %v453 = vunpack.c.l.b16 %v380
    %v454 = vunpack.c.l.b16 %v381
    %v455 = vunpack.c.h.b16 %v381
    %v456 = vunpack.c.l.b16 %v382
    %v457 = vunpack.c.l.b16 %v383
    %v458 = vunpack.c.h.b16 %v383
    %v459 = vunpack.c.l.b16 %v384
    %v460 = vunpack.c.l.b16 %v385
    %v461 = vunpack.c.h.b16 %v385
    %v462 = vunpack.c.l.b16 %v386
    %v463 = vunpack.c.l.b16 %v387
    %v464 = vunpack.c.h.b16 %v387
    %v465 = vunpack.c.l.b16 %v388
    %v466 = vunpack.c.l.b16 %v389
    %v467 = vunpack.c.h.b16 %v389
    %v468 = vunpack.c.l.b16 %v390
    %v469 = vunpack.c.l.b16 %v391
    %v470 = vunpack.c.h.b16 %v391
    %v471 = vunpack.c.l.b16 %v392
    %v472 = vunpack.c.l.b16 %v393
    %v473 = vunpack.c.h.b16 %v393
    %v474 = vunpack.c.l.b16 %v394
    %v475 = vunpack.c.l.b16 %v395
    %v476 = vunpack.c.h.b16 %v395
    %v477 = vunpack.c.l.b16 %v396
    %v478 = vunpack.c.l.b16 %v397
    %v479 = vunpack.c.h.b16 %v397
    %v480 = vunpack.c.l.b16 %v398
    %v481 = vunpack.c.l.b16 %v399
    %v482 = vunpack.c.h.b16 %v399
    %v483 = vunpack.c.l.b16 %v400
    %v484 = vunpack.c.l.b16 %v401
    %v485 = vunpack.c.h.b16 %v401
    %v486 = vunpack.c.l.b16 %v402
    %v487 = vunpack.c.l.b16 %v403
    %v488 = vunpack.c.h.b16 %v403
    %v489 = vunpack.c.l.b16 %v404
    %v490 = vunpack.c.l.b16 %v405
    %v491 = vunpack.c.h.b16 %v405
    %v492 = vunpack.c.l.b16 %v406
    %v493 = vpack.c.b16 %v448, %v445
    %v494 = vpack.c.b16 %v449, %v446
    %v495 = vpack.c.b16 %v450, %v447
    %v496 = vpack.c.b16 %v454, %v451
    %v497 = vpack.c.b16 %v455, %v452
    %v498 = vpack.c.b16 %v456, %v453
    %v499 = vpack.c.b16 %v460, %v457
    %v500 = vpack.c.b16 %v461, %v458
    %v501 = vpack.c.b16 %v462, %v459
    %v502 = vpack.c.b16 %v466, %v463
    %v503 = vpack.c.b16 %v467, %v464
    %v504 = vpack.c.b16 %v468, %v465
    %v505 = vpack.c.b16 %v472, %v469
    %v506 = vpack.c.b16 %v473, %v470
    %v507 = vpack.c.b16 %v474, %v471
    %v508 = vpack.c.b16 %v478, %v475
    %v509 = vpack.c.b16 %v479, %v476
    %v510 = vpack.c.b16 %v480, %v477
    %v511 = vpack.c.b16 %v484, %v481
    %v512 = vpack.c.b16 %v485, %v482
    %v513 = vpack.c.b16 %v486, %v483
    %v514 = vpack.c.b16 %v490, %v487
    %v515 = vpack.c.b16 %v491, %v488
    %v516 = vpack.c.b16 %v492, %v489
    %541 = vmatpush.bf16.msra.mxu0 %v514
    %542 = vmatpush.bf16.msra.mxu0 %v511
    %543 = vmatpush.bf16.msra.mxu0 %v508
    %544 = vmatpush.bf16.msra.mxu0 %v505
    %545 = vmatpush.bf16.msra.mxu0 %v502
    %546 = vmatpush.bf16.msra.mxu0 %v499
    %547 = vmatpush.bf16.msra.mxu0 %v496
    %548 = vmatpush.bf16.msra.mxu0 %v493
    %549 = vmatmul.bf16.gmra.mxu0 %v412
    %v550 = vpop.f32.mrf.mxu0
    %v551 = vadd.f32 0.0, %v550
    %v552 = vpop.f32.mrf.mxu0
    %553 = vdwg.mxu0
    %554 = vmatpush.bf16.msra.mxu0 %v515
    %555 = vmatpush.bf16.msra.mxu0 %v512
    %556 = vmatpush.bf16.msra.mxu0 %v509
    %557 = vmatpush.bf16.msra.mxu0 %v506
    %558 = vmatpush.bf16.msra.mxu0 %v503
    %559 = vmatpush.bf16.msra.mxu0 %v500
    %560 = vmatpush.bf16.msra.mxu0 %v497
    %561 = vmatpush.bf16.msra.mxu0 %v494
    %562 = vmatmul.bf16.gmra.mxu0 %v412
    %v563 = vpop.f32.mrf.mxu0
    %v564 = vadd.f32 0.0, %v563
    %v565 = vpop.f32.mrf.mxu0
    %566 = vdwg.mxu0
    %567 = vmatpush.bf16.msra.mxu0 %v516
    %568 = vmatpush.bf16.msra.mxu0 %v513
    %569 = vmatpush.bf16.msra.mxu0 %v510
    %570 = vmatpush.bf16.msra.mxu0 %v507
    %571 = vmatpush.bf16.msra.mxu0 %v504
    %572 = vmatpush.bf16.msra.mxu0 %v501
    %573 = vmatpush.bf16.msra.mxu0 %v498
    %574 = vmatpush.bf16.msra.mxu0 %v495
    %575 = vmatmul.bf16.gmra.mxu0 %v412
    %v576 = vpop.f32.mrf.mxu0
    %v577 = vadd.f32 0.0, %v576
    %v578 = vpop.f32.mrf.mxu0
    %579 = vdwg.mxu0
    %v580 = vadd.f32 %v409, %v551
    %v581 = vxor.u32 %v580, 2147483648
    %v582 = vmul.f32 %v581, 1.442695
    %v583 = vpow.pop %v582
    %v584 = vadd.f32 %v583, 1.0
    %v585 = vrcp.pop %v584
    %v586 = vmul.f32 %v584, %v585
    %v587 = vsub.f32 1.0, %v586
    %v588 = vmul.f32 %v585, %v587
    %v589 = vadd.f32 %v585, %v588
    %vm590 = vweird.f32 %v584
    %vm591 = vweird.f32 %v585
    %vm592 = vmor %vm590, %vm591
    %v593 = vsel %vm592, %v585, %v589
    %v594 = vand.u32 2147483647, %v584
    %vm595 = vcmp.eq.f32.partialorder %v594, 8.507059e+37
    %v596 = vand.u32 %v584, 2147483648
    %v597 = vor.u32 1.1754944e-38, %v596
    %v598 = vsel %vm595, %v597, %v593
    %v599 = vmul.f32 1.0, %v598
    %v600 = vadd.f32 %v410, %v564
    %v601 = vxor.u32 %v600, 2147483648
    %v602 = vmul.f32 %v601, 1.442695
    %v603 = vpow.pop %v602
    %v604 = vadd.f32 %v603, 1.0
    %v605 = vrcp.pop %v604
    %v606 = vmul.f32 %v604, %v605
    %v607 = vsub.f32 1.0, %v606
    %v608 = vmul.f32 %v605, %v607
    %v609 = vadd.f32 %v605, %v608
    %vm610 = vweird.f32 %v604
    %vm611 = vweird.f32 %v605
    %vm612 = vmor %vm610, %vm611
    %v613 = vsel %vm612, %v605, %v609
    %v614 = vand.u32 2147483647, %v604
    %vm615 = vcmp.eq.f32.partialorder %v614, 8.507059e+37
    %v616 = vand.u32 %v604, 2147483648
    %v617 = vor.u32 1.1754944e-38, %v616
    %v618 = vsel %vm615, %v617, %v613
    %v619 = vmul.f32 1.0, %v618
    %v621 = vperm.slane %v407, 0
    %v623 = vadd.f32 %v577, %v621
    %v624 = vmul.f32 %v599, %v623
    %v625 = vadd.f32 %v411, %v624
    %v626 = vtanh.pop %v625
    %v627 = vsub.f32 1.0, %v619
    %v628 = vmul.f32 %v627, %v626
    %v629 = vmul.f32 %v619, %v408
    %v630 = vadd.f32 %v628, %v629
    %631 = vst [vmem:[#allocation2] sm:$0xff] %v630
    %632 = vst [vmem:[#allocation4] sm:$0xff] %v630
    %v633 = vld [vmem:[#allocation2] sm:$0xff]
    %s634 = scalar_lea.vmem [#allocation3], 24
    %v635 = vld [vmem:[%s634] sm:$0xff]
    %v636 = vld [vmem:[%s634 + $0x8] sm:$0xff]
    %v637 = vld [vmem:[%s634 + $0x10] sm:$0xff]
    %v638 = vpack.c.bf16 %v633, %v633
    %639 = vmatpush.bf16.msra.mxu0 %v514
    %640 = vmatpush.bf16.msra.mxu0 %v511
    %641 = vmatpush.bf16.msra.mxu0 %v508
    %642 = vmatpush.bf16.msra.mxu0 %v505
    %643 = vmatpush.bf16.msra.mxu0 %v502
    %644 = vmatpush.bf16.msra.mxu0 %v499
    %645 = vmatpush.bf16.msra.mxu0 %v496
    %646 = vmatpush.bf16.msra.mxu0 %v493
    %647 = vmatmul.bf16.gmra.mxu0 %v638
    %v648 = vpop.f32.mrf.mxu0
    %v649 = vadd.f32 0.0, %v648
    %v650 = vpop.f32.mrf.mxu0
    %651 = vdwg.mxu0
    %652 = vmatpush.bf16.msra.mxu0 %v515
    %653 = vmatpush.bf16.msra.mxu0 %v512
    %654 = vmatpush.bf16.msra.mxu0 %v509
    %655 = vmatpush.bf16.msra.mxu0 %v506
    %656 = vmatpush.bf16.msra.mxu0 %v503
    %657 = vmatpush.bf16.msra.mxu0 %v500
    %658 = vmatpush.bf16.msra.mxu0 %v497
    %659 = vmatpush.bf16.msra.mxu0 %v494
    %660 = vmatmul.bf16.gmra.mxu0 %v638
    %v661 = vpop.f32.mrf.mxu0
    %v662 = vadd.f32 0.0, %v661
    %v663 = vpop.f32.mrf.mxu0
    %664 = vdwg.mxu0
    %665 = vmatpush.bf16.msra.mxu0 %v516
    %666 = vmatpush.bf16.msra.mxu0 %v513
    %667 = vmatpush.bf16.msra.mxu0 %v510
    %668 = vmatpush.bf16.msra.mxu0 %v507
    %669 = vmatpush.bf16.msra.mxu0 %v504
    %670 = vmatpush.bf16.msra.mxu0 %v501
    %671 = vmatpush.bf16.msra.mxu0 %v498
    %672 = vmatpush.bf16.msra.mxu0 %v495
    %673 = vmatmul.bf16.gmra.mxu0 %v638
    %v674 = vpop.f32.mrf.mxu0
    %v675 = vadd.f32 0.0, %v674
    %v676 = vpop.f32.mrf.mxu0
    %677 = vdwg.mxu0
    %v678 = vadd.f32 %v635, %v649
    %v679 = vxor.u32 %v678, 2147483648
    %v680 = vmul.f32 %v679, 1.442695
    %v681 = vpow.pop %v680
    %v682 = vadd.f32 %v681, 1.0
    %v683 = vrcp.pop %v682
    %v684 = vmul.f32 %v682, %v683
    %v685 = vsub.f32 1.0, %v684
    %v686 = vmul.f32 %v683, %v685
    %v687 = vadd.f32 %v683, %v686
    %vm688 = vweird.f32 %v682
    %vm689 = vweird.f32 %v683
    %vm690 = vmor %vm688, %vm689
    %v691 = vsel %vm690, %v683, %v687
    %v692 = vand.u32 2147483647, %v682
    %vm693 = vcmp.eq.f32.partialorder %v692, 8.507059e+37
    %v694 = vand.u32 %v682, 2147483648
    %v695 = vor.u32 1.1754944e-38, %v694
    %v696 = vsel %vm693, %v695, %v691
    %v697 = vmul.f32 1.0, %v696
    %v698 = vadd.f32 %v636, %v662
    %v699 = vxor.u32 %v698, 2147483648
    %v700 = vmul.f32 %v699, 1.442695
    %v701 = vpow.pop %v700
    %v702 = vadd.f32 %v701, 1.0
    %v703 = vrcp.pop %v702
    %v704 = vmul.f32 %v702, %v703
    %v705 = vsub.f32 1.0, %v704
    %v706 = vmul.f32 %v703, %v705
    %v707 = vadd.f32 %v703, %v706
    %vm708 = vweird.f32 %v702
    %vm709 = vweird.f32 %v703
    %vm710 = vmor %vm708, %vm709
    %v711 = vsel %vm710, %v703, %v707
    %v712 = vand.u32 2147483647, %v702
    %vm713 = vcmp.eq.f32.partialorder %v712, 8.507059e+37
    %v714 = vand.u32 %v702, 2147483648
    %v715 = vor.u32 1.1754944e-38, %v714
    %v716 = vsel %vm713, %v715, %v711
    %v717 = vmul.f32 1.0, %v716
    %v718 = vadd.f32 %v675, %v621
    %v719 = vmul.f32 %v697, %v718
    %v720 = vadd.f32 %v637, %v719
    %v721 = vtanh.pop %v720
    %v722 = vsub.f32 1.0, %v717
    %v723 = vmul.f32 %v722, %v721
    %v724 = vmul.f32 %v717, %v633
    %v725 = vadd.f32 %v723, %v724
    %726 = vst [vmem:[#allocation2] sm:$0xff] %v725
    %s727 = scalar_lea.vmem [#allocation4], 8
    %728 = vst [vmem:[%s727] sm:$0xff] %v725
    %v729 = vld [vmem:[#allocation2] sm:$0xff]
    %s730 = scalar_lea.vmem [#allocation3], 48
    %v731 = vld [vmem:[%s730] sm:$0xff]
    %v732 = vld [vmem:[%s730 + $0x8] sm:$0xff]
    %v733 = vld [vmem:[%s730 + $0x10] sm:$0xff]
    %v734 = vpack.c.bf16 %v729, %v729
    %735 = vmatpush.bf16.msra.mxu0 %v514
    %736 = vmatpush.bf16.msra.mxu0 %v511
    %737 = vmatpush.bf16.msra.mxu0 %v508
    %738 = vmatpush.bf16.msra.mxu0 %v505
    %739 = vmatpush.bf16.msra.mxu0 %v502
    %740 = vmatpush.bf16.msra.mxu0 %v499
    %741 = vmatpush.bf16.msra.mxu0 %v496
    %742 = vmatpush.bf16.msra.mxu0 %v493
    %743 = vmatmul.bf16.gmra.mxu0 %v734
    %v744 = vpop.f32.mrf.mxu0
    %v745 = vadd.f32 0.0, %v744
    %v746 = vpop.f32.mrf.mxu0
    %747 = vdwg.mxu0
    %748 = vmatpush.bf16.msra.mxu0 %v515
    %749 = vmatpush.bf16.msra.mxu0 %v512
    %750 = vmatpush.bf16.msra.mxu0 %v509
    %751 = vmatpush.bf16.msra.mxu0 %v506
    %752 = vmatpush.bf16.msra.mxu0 %v503
    %753 = vmatpush.bf16.msra.mxu0 %v500
    %754 = vmatpush.bf16.msra.mxu0 %v497
    %755 = vmatpush.bf16.msra.mxu0 %v494
    %756 = vmatmul.bf16.gmra.mxu0 %v734
    %v757 = vpop.f32.mrf.mxu0
    %v758 = vadd.f32 0.0, %v757
    %v759 = vpop.f32.mrf.mxu0
    %760 = vdwg.mxu0
    %761 = vmatpush.bf16.msra.mxu0 %v516
    %762 = vmatpush.bf16.msra.mxu0 %v513
    %763 = vmatpush.bf16.msra.mxu0 %v510
    %764 = vmatpush.bf16.msra.mxu0 %v507
    %765 = vmatpush.bf16.msra.mxu0 %v504
    %766 = vmatpush.bf16.msra.mxu0 %v501
    %767 = vmatpush.bf16.msra.mxu0 %v498
    %768 = vmatpush.bf16.msra.mxu0 %v495
    %769 = vmatmul.bf16.gmra.mxu0 %v734
    %v770 = vpop.f32.mrf.mxu0
    %v771 = vadd.f32 0.0, %v770
    %v772 = vpop.f32.mrf.mxu0
    %773 = vdwg.mxu0
    %v774 = vadd.f32 %v731, %v745
    %v775 = vxor.u32 %v774, 2147483648
    %v776 = vmul.f32 %v775, 1.442695
    %v777 = vpow.pop %v776
    %v778 = vadd.f32 %v777, 1.0
    %v779 = vrcp.pop %v778
    %v780 = vmul.f32 %v778, %v779
    %v781 = vsub.f32 1.0, %v780
    %v782 = vmul.f32 %v779, %v781
    %v783 = vadd.f32 %v779, %v782
    %vm784 = vweird.f32 %v778
    %vm785 = vweird.f32 %v779
    %vm786 = vmor %vm784, %vm785
    %v787 = vsel %vm786, %v779, %v783
    %v788 = vand.u32 2147483647, %v778
    %vm789 = vcmp.eq.f32.partialorder %v788, 8.507059e+37
    %v790 = vand.u32 %v778, 2147483648
    %v791 = vor.u32 1.1754944e-38, %v790
    %v792 = vsel %vm789, %v791, %v787
    %v793 = vmul.f32 1.0, %v792
    %v794 = vadd.f32 %v732, %v758
    %v795 = vxor.u32 %v794, 2147483648
    %v796 = vmul.f32 %v795, 1.442695
    %v797 = vpow.pop %v796
    %v798 = vadd.f32 %v797, 1.0
    %v799 = vrcp.pop %v798
    %v800 = vmul.f32 %v798, %v799
    %v801 = vsub.f32 1.0, %v800
    %v802 = vmul.f32 %v799, %v801
    %v803 = vadd.f32 %v799, %v802
    %vm804 = vweird.f32 %v798
    %vm805 = vweird.f32 %v799
    %vm806 = vmor %vm804, %vm805
    %v807 = vsel %vm806, %v799, %v803
    %v808 = vand.u32 2147483647, %v798
    %vm809 = vcmp.eq.f32.partialorder %v808, 8.507059e+37
    %v810 = vand.u32 %v798, 2147483648
    %v811 = vor.u32 1.1754944e-38, %v810
    %v812 = vsel %vm809, %v811, %v807
    %v813 = vmul.f32 1.0, %v812
    %v814 = vadd.f32 %v771, %v621
    %v815 = vmul.f32 %v793, %v814
    %v816 = vadd.f32 %v733, %v815
    %v817 = vtanh.pop %v816
    %v818 = vsub.f32 1.0, %v813
    %v819 = vmul.f32 %v818, %v817
    %v820 = vmul.f32 %v813, %v729
    %v821 = vadd.f32 %v819, %v820
    %822 = vst [vmem:[#allocation2] sm:$0xff] %v821
    %s823 = scalar_lea.vmem [#allocation4], 16
    %824 = vst [vmem:[%s823] sm:$0xff] %v821
    %v825 = vld [vmem:[#allocation2] sm:$0xff]
    %s826 = scalar_lea.vmem [#allocation3], 72
    %v827 = vld [vmem:[%s826] sm:$0xff]
    %v828 = vld [vmem:[%s826 + $0x8] sm:$0xff]
    %v829 = vld [vmem:[%s826 + $0x10] sm:$0xff]
    %v830 = vpack.c.bf16 %v825, %v825
    %831 = vmatpush.bf16.msra.mxu0 %v514
    %832 = vmatpush.bf16.msra.mxu0 %v511
    %833 = vmatpush.bf16.msra.mxu0 %v508
    %834 = vmatpush.bf16.msra.mxu0 %v505
    %835 = vmatpush.bf16.msra.mxu0 %v502
    %836 = vmatpush.bf16.msra.mxu0 %v499
    %837 = vmatpush.bf16.msra.mxu0 %v496
    %838 = vmatpush.bf16.msra.mxu0 %v493
    %839 = vmatmul.bf16.gmra.mxu0 %v830
    %v840 = vpop.f32.mrf.mxu0
    %v841 = vadd.f32 0.0, %v840
    %v842 = vpop.f32.mrf.mxu0
    %843 = vdwg.mxu0
    %844 = vmatpush.bf16.msra.mxu0 %v515
    %845 = vmatpush.bf16.msra.mxu0 %v512
    %846 = vmatpush.bf16.msra.mxu0 %v509
    %847 = vmatpush.bf16.msra.mxu0 %v506
    %848 = vmatpush.bf16.msra.mxu0 %v503
    %849 = vmatpush.bf16.msra.mxu0 %v500
    %850 = vmatpush.bf16.msra.mxu0 %v497
    %851 = vmatpush.bf16.msra.mxu0 %v494
    %852 = vmatmul.bf16.gmra.mxu0 %v830
    %v853 = vpop.f32.mrf.mxu0
    %v854 = vadd.f32 0.0, %v853
    %v855 = vpop.f32.mrf.mxu0
    %856 = vdwg.mxu0
    %857 = vmatpush.bf16.msra.mxu0 %v516
    %858 = vmatpush.bf16.msra.mxu0 %v513
    %859 = vmatpush.bf16.msra.mxu0 %v510
    %860 = vmatpush.bf16.msra.mxu0 %v507
    %861 = vmatpush.bf16.msra.mxu0 %v504
    %862 = vmatpush.bf16.msra.mxu0 %v501
    %863 = vmatpush.bf16.msra.mxu0 %v498
    %864 = vmatpush.bf16.msra.mxu0 %v495
    %865 = vmatmul.bf16.gmra.mxu0 %v830
    %v866 = vpop.f32.mrf.mxu0
    %v867 = vadd.f32 0.0, %v866
    %v868 = vpop.f32.mrf.mxu0
    %869 = vdwg.mxu0
    %v870 = vadd.f32 %v827, %v841
    %v871 = vxor.u32 %v870, 2147483648
    %v872 = vmul.f32 %v871, 1.442695
    %v873 = vpow.pop %v872
    %v874 = vadd.f32 %v873, 1.0
    %v875 = vrcp.pop %v874
    %v876 = vmul.f32 %v874, %v875
    %v877 = vsub.f32 1.0, %v876
    %v878 = vmul.f32 %v875, %v877
    %v879 = vadd.f32 %v875, %v878
    %vm880 = vweird.f32 %v874
    %vm881 = vweird.f32 %v875
    %vm882 = vmor %vm880, %vm881
    %v883 = vsel %vm882, %v875, %v879
    %v884 = vand.u32 2147483647, %v874
    %vm885 = vcmp.eq.f32.partialorder %v884, 8.507059e+37
    %v886 = vand.u32 %v874, 2147483648
    %v887 = vor.u32 1.1754944e-38, %v886
    %v888 = vsel %vm885, %v887, %v883
    %v889 = vmul.f32 1.0, %v888
    %v890 = vadd.f32 %v828, %v854
    %v891 = vxor.u32 %v890, 2147483648
    %v892 = vmul.f32 %v891, 1.442695
    %v893 = vpow.pop %v892
    %v894 = vadd.f32 %v893, 1.0
    %v895 = vrcp.pop %v894
    %v896 = vmul.f32 %v894, %v895
    %v897 = vsub.f32 1.0, %v896
    %v898 = vmul.f32 %v895, %v897
    %v899 = vadd.f32 %v895, %v898
    %vm900 = vweird.f32 %v894
    %vm901 = vweird.f32 %v895
    %vm902 = vmor %vm900, %vm901
    %v903 = vsel %vm902, %v895, %v899
    %v904 = vand.u32 2147483647, %v894
    %vm905 = vcmp.eq.f32.partialorder %v904, 8.507059e+37
    %v906 = vand.u32 %v894, 2147483648
    %v907 = vor.u32 1.1754944e-38, %v906
    %v908 = vsel %vm905, %v907, %v903
    %v909 = vmul.f32 1.0, %v908
    %v910 = vadd.f32 %v867, %v621
    %v911 = vmul.f32 %v889, %v910
    %v912 = vadd.f32 %v829, %v911
    %v913 = vtanh.pop %v912
    %v914 = vsub.f32 1.0, %v909
    %v915 = vmul.f32 %v914, %v913
    %v916 = vmul.f32 %v909, %v825
    %v917 = vadd.f32 %v915, %v916
    %918 = vst [vmem:[#allocation2] sm:$0xff] %v917
    %s919 = scalar_lea.vmem [#allocation4], 24
    %920 = vst [vmem:[%s919] sm:$0xff] %v917
    %v921 = vld [vmem:[#allocation2] sm:$0xff]
    %s922 = scalar_lea.vmem [#allocation3], 96
    %v923 = vld [vmem:[%s922] sm:$0xff]
    %v924 = vld [vmem:[%s922 + $0x8] sm:$0xff]
    %v925 = vld [vmem:[%s922 + $0x10] sm:$0xff]
    %v926 = vpack.c.bf16 %v921, %v921
    %927 = vmatpush.bf16.msra.mxu0 %v514
    %928 = vmatpush.bf16.msra.mxu0 %v511
    %929 = vmatpush.bf16.msra.mxu0 %v508
    %930 = vmatpush.bf16.msra.mxu0 %v505
    %931 = vmatpush.bf16.msra.mxu0 %v502
    %932 = vmatpush.bf16.msra.mxu0 %v499
    %933 = vmatpush.bf16.msra.mxu0 %v496
    %934 = vmatpush.bf16.msra.mxu0 %v493
    %935 = vmatmul.bf16.gmra.mxu0 %v926
    %v936 = vpop.f32.mrf.mxu0
    %v937 = vadd.f32 0.0, %v936
    %v938 = vpop.f32.mrf.mxu0
    %939 = vdwg.mxu0
    %940 = vmatpush.bf16.msra.mxu0 %v515
    %941 = vmatpush.bf16.msra.mxu0 %v512
    %942 = vmatpush.bf16.msra.mxu0 %v509
    %943 = vmatpush.bf16.msra.mxu0 %v506
    %944 = vmatpush.bf16.msra.mxu0 %v503
    %945 = vmatpush.bf16.msra.mxu0 %v500
    %946 = vmatpush.bf16.msra.mxu0 %v497
    %947 = vmatpush.bf16.msra.mxu0 %v494
    %948 = vmatmul.bf16.gmra.mxu0 %v926
    %v949 = vpop.f32.mrf.mxu0
    %v950 = vadd.f32 0.0, %v949
    %v951 = vpop.f32.mrf.mxu0
    %952 = vdwg.mxu0
    %953 = vmatpush.bf16.msra.mxu0 %v516
    %954 = vmatpush.bf16.msra.mxu0 %v513
    %955 = vmatpush.bf16.msra.mxu0 %v510
    %956 = vmatpush.bf16.msra.mxu0 %v507
    %957 = vmatpush.bf16.msra.mxu0 %v504
    %958 = vmatpush.bf16.msra.mxu0 %v501
    %959 = vmatpush.bf16.msra.mxu0 %v498
    %960 = vmatpush.bf16.msra.mxu0 %v495
    %961 = vmatmul.bf16.gmra.mxu0 %v926
    %v962 = vpop.f32.mrf.mxu0
    %v963 = vadd.f32 0.0, %v962
    %v964 = vpop.f32.mrf.mxu0
    %965 = vdwg.mxu0
    %v966 = vadd.f32 %v923, %v937
    %v967 = vxor.u32 %v966, 2147483648
    %v968 = vmul.f32 %v967, 1.442695
    %v969 = vpow.pop %v968
    %v970 = vadd.f32 %v969, 1.0
    %v971 = vrcp.pop %v970
    %v972 = vmul.f32 %v970, %v971
    %v973 = vsub.f32 1.0, %v972
    %v974 = vmul.f32 %v971, %v973
    %v975 = vadd.f32 %v971, %v974
    %vm976 = vweird.f32 %v970
    %vm977 = vweird.f32 %v971
    %vm978 = vmor %vm976, %vm977
    %v979 = vsel %vm978, %v971, %v975
    %v980 = vand.u32 2147483647, %v970
    %vm981 = vcmp.eq.f32.partialorder %v980, 8.507059e+37
    %v982 = vand.u32 %v970, 2147483648
    %v983 = vor.u32 1.1754944e-38, %v982
    %v984 = vsel %vm981, %v983, %v979
    %v985 = vmul.f32 1.0, %v984
    %v986 = vadd.f32 %v924, %v950
    %v987 = vxor.u32 %v986, 2147483648
    %v988 = vmul.f32 %v987, 1.442695
    %v989 = vpow.pop %v988
    %v990 = vadd.f32 %v989, 1.0
    %v991 = vrcp.pop %v990
    %v992 = vmul.f32 %v990, %v991
    %v993 = vsub.f32 1.0, %v992
    %v994 = vmul.f32 %v991, %v993
    %v995 = vadd.f32 %v991, %v994
    %vm996 = vweird.f32 %v990
    %vm997 = vweird.f32 %v991
    %vm998 = vmor %vm996, %vm997
    %v999 = vsel %vm998, %v991, %v995
    %v1000 = vand.u32 2147483647, %v990
    %vm1001 = vcmp.eq.f32.partialorder %v1000, 8.507059e+37
    %v1002 = vand.u32 %v990, 2147483648
    %v1003 = vor.u32 1.1754944e-38, %v1002
    %v1004 = vsel %vm1001, %v1003, %v999
    %v1005 = vmul.f32 1.0, %v1004
    %v1006 = vadd.f32 %v963, %v621
    %v1007 = vmul.f32 %v985, %v1006
    %v1008 = vadd.f32 %v925, %v1007
    %v1009 = vtanh.pop %v1008
    %v1010 = vsub.f32 1.0, %v1005
    %v1011 = vmul.f32 %v1010, %v1009
    %v1012 = vmul.f32 %v1005, %v921
    %v1013 = vadd.f32 %v1011, %v1012
    %1014 = vst [vmem:[#allocation2] sm:$0xff] %v1013
    %s1015 = scalar_lea.vmem [#allocation4], 32
    %1016 = vst [vmem:[%s1015] sm:$0xff] %v1013
    %v1017 = vld [vmem:[#allocation2] sm:$0xff]
    %s1018 = scalar_lea.vmem [#allocation3], 120
    %v1019 = vld [vmem:[%s1018] sm:$0xff]
    %v1020 = vld [vmem:[%s1018 + $0x8] sm:$0xff]
    %v1021 = vld [vmem:[%s1018 + $0x10] sm:$0xff]
    %v1022 = vpack.c.bf16 %v1017, %v1017
    %1023 = vmatpush.bf16.msra.mxu0 %v514
    %1024 = vmatpush.bf16.msra.mxu0 %v511
    %1025 = vmatpush.bf16.msra.mxu0 %v508
    %1026 = vmatpush.bf16.msra.mxu0 %v505
    %1027 = vmatpush.bf16.msra.mxu0 %v502
    %1028 = vmatpush.bf16.msra.mxu0 %v499
    %1029 = vmatpush.bf16.msra.mxu0 %v496
    %1030 = vmatpush.bf16.msra.mxu0 %v493
    %1031 = vmatmul.bf16.gmra.mxu0 %v1022
    %v1032 = vpop.f32.mrf.mxu0
    %v1033 = vadd.f32 0.0, %v1032
    %v1034 = vpop.f32.mrf.mxu0
    %1035 = vdwg.mxu0
    %1036 = vmatpush.bf16.msra.mxu0 %v515
    %1037 = vmatpush.bf16.msra.mxu0 %v512
    %1038 = vmatpush.bf16.msra.mxu0 %v509
    %1039 = vmatpush.bf16.msra.mxu0 %v506
    %1040 = vmatpush.bf16.msra.mxu0 %v503
    %1041 = vmatpush.bf16.msra.mxu0 %v500
    %1042 = vmatpush.bf16.msra.mxu0 %v497
    %1043 = vmatpush.bf16.msra.mxu0 %v494
    %1044 = vmatmul.bf16.gmra.mxu0 %v1022
    %v1045 = vpop.f32.mrf.mxu0
    %v1046 = vadd.f32 0.0, %v1045
    %v1047 = vpop.f32.mrf.mxu0
    %1048 = vdwg.mxu0
    %1049 = vmatpush.bf16.msra.mxu0 %v516
    %1050 = vmatpush.bf16.msra.mxu0 %v513
    %1051 = vmatpush.bf16.msra.mxu0 %v510
    %1052 = vmatpush.bf16.msra.mxu0 %v507
    %1053 = vmatpush.bf16.msra.mxu0 %v504
    %1054 = vmatpush.bf16.msra.mxu0 %v501
    %1055 = vmatpush.bf16.msra.mxu0 %v498
    %1056 = vmatpush.bf16.msra.mxu0 %v495
    %1057 = vmatmul.bf16.gmra.mxu0 %v1022
    %v1058 = vpop.f32.mrf.mxu0
    %v1059 = vadd.f32 0.0, %v1058
    %v1060 = vpop.f32.mrf.mxu0
    %1061 = vdwg.mxu0
    %v1062 = vadd.f32 %v1019, %v1033
    %v1063 = vxor.u32 %v1062, 2147483648
    %v1064 = vmul.f32 %v1063, 1.442695
    %v1065 = vpow.pop %v1064
    %v1066 = vadd.f32 %v1065, 1.0
    %v1067 = vrcp.pop %v1066
    %v1068 = vmul.f32 %v1066, %v1067
    %v1069 = vsub.f32 1.0, %v1068
    %v1070 = vmul.f32 %v1067, %v1069
    %v1071 = vadd.f32 %v1067, %v1070
    %vm1072 = vweird.f32 %v1066
    %vm1073 = vweird.f32 %v1067
    %vm1074 = vmor %vm1072, %vm1073
    %v1075 = vsel %vm1074, %v1067, %v1071
    %v1076 = vand.u32 2147483647, %v1066
    %vm1077 = vcmp.eq.f32.partialorder %v1076, 8.507059e+37
    %v1078 = vand.u32 %v1066, 2147483648
    %v1079 = vor.u32 1.1754944e-38, %v1078
    %v1080 = vsel %vm1077, %v1079, %v1075
    %v1081 = vmul.f32 1.0, %v1080
    %v1082 = vadd.f32 %v1020, %v1046
    %v1083 = vxor.u32 %v1082, 2147483648
    %v1084 = vmul.f32 %v1083, 1.442695
    %v1085 = vpow.pop %v1084
    %v1086 = vadd.f32 %v1085, 1.0
    %v1087 = vrcp.pop %v1086
    %v1088 = vmul.f32 %v1086, %v1087
    %v1089 = vsub.f32 1.0, %v1088
    %v1090 = vmul.f32 %v1087, %v1089
    %v1091 = vadd.f32 %v1087, %v1090
    %vm1092 = vweird.f32 %v1086
    %vm1093 = vweird.f32 %v1087
    %vm1094 = vmor %vm1092, %vm1093
    %v1095 = vsel %vm1094, %v1087, %v1091
    %v1096 = vand.u32 2147483647, %v1086
    %vm1097 = vcmp.eq.f32.partialorder %v1096, 8.507059e+37
    %v1098 = vand.u32 %v1086, 2147483648
    %v1099 = vor.u32 1.1754944e-38, %v1098
    %v1100 = vsel %vm1097, %v1099, %v1095
    %v1101 = vmul.f32 1.0, %v1100
    %v1102 = vadd.f32 %v1059, %v621
    %v1103 = vmul.f32 %v1081, %v1102
    %v1104 = vadd.f32 %v1021, %v1103
    %v1105 = vtanh.pop %v1104
    %v1106 = vsub.f32 1.0, %v1101
    %v1107 = vmul.f32 %v1106, %v1105
    %v1108 = vmul.f32 %v1101, %v1017
    %v1109 = vadd.f32 %v1107, %v1108
    %1110 = vst [vmem:[#allocation2] sm:$0xff] %v1109
    %s1111 = scalar_lea.vmem [#allocation4], 40
    %1112 = vst [vmem:[%s1111] sm:$0xff] %v1109
    %v1113 = vld [vmem:[#allocation2] sm:$0xff]
    %s1114 = scalar_lea.vmem [#allocation3], 144
    %v1115 = vld [vmem:[%s1114] sm:$0xff]
    %v1116 = vld [vmem:[%s1114 + $0x8] sm:$0xff]
    %v1117 = vld [vmem:[%s1114 + $0x10] sm:$0xff]
    %v1118 = vpack.c.bf16 %v1113, %v1113
    %1119 = vmatpush.bf16.msra.mxu0 %v514
    %1120 = vmatpush.bf16.msra.mxu0 %v511
    %1121 = vmatpush.bf16.msra.mxu0 %v508
    %1122 = vmatpush.bf16.msra.mxu0 %v505
    %1123 = vmatpush.bf16.msra.mxu0 %v502
    %1124 = vmatpush.bf16.msra.mxu0 %v499
    %1125 = vmatpush.bf16.msra.mxu0 %v496
    %1126 = vmatpush.bf16.msra.mxu0 %v493
    %1127 = vmatmul.bf16.gmra.mxu0 %v1118
    %v1128 = vpop.f32.mrf.mxu0
    %v1129 = vadd.f32 0.0, %v1128
    %v1130 = vpop.f32.mrf.mxu0
    %1131 = vdwg.mxu0
    %1132 = vmatpush.bf16.msra.mxu0 %v515
    %1133 = vmatpush.bf16.msra.mxu0 %v512
    %1134 = vmatpush.bf16.msra.mxu0 %v509
    %1135 = vmatpush.bf16.msra.mxu0 %v506
    %1136 = vmatpush.bf16.msra.mxu0 %v503
    %1137 = vmatpush.bf16.msra.mxu0 %v500
    %1138 = vmatpush.bf16.msra.mxu0 %v497
    %1139 = vmatpush.bf16.msra.mxu0 %v494
    %1140 = vmatmul.bf16.gmra.mxu0 %v1118
    %v1141 = vpop.f32.mrf.mxu0
    %v1142 = vadd.f32 0.0, %v1141
    %v1143 = vpop.f32.mrf.mxu0
    %1144 = vdwg.mxu0
    %1145 = vmatpush.bf16.msra.mxu0 %v516
    %1146 = vmatpush.bf16.msra.mxu0 %v513
    %1147 = vmatpush.bf16.msra.mxu0 %v510
    %1148 = vmatpush.bf16.msra.mxu0 %v507
    %1149 = vmatpush.bf16.msra.mxu0 %v504
    %1150 = vmatpush.bf16.msra.mxu0 %v501
    %1151 = vmatpush.bf16.msra.mxu0 %v498
    %1152 = vmatpush.bf16.msra.mxu0 %v495
    %1153 = vmatmul.bf16.gmra.mxu0 %v1118
    %v1154 = vpop.f32.mrf.mxu0
    %v1155 = vadd.f32 0.0, %v1154
    %v1156 = vpop.f32.mrf.mxu0
    %1157 = vdwg.mxu0
    %v1158 = vadd.f32 %v1115, %v1129
    %v1159 = vxor.u32 %v1158, 2147483648
    %v1160 = vmul.f32 %v1159, 1.442695
    %v1161 = vpow.pop %v1160
    %v1162 = vadd.f32 %v1161, 1.0
    %v1163 = vrcp.pop %v1162
    %v1164 = vmul.f32 %v1162, %v1163
    %v1165 = vsub.f32 1.0, %v1164
    %v1166 = vmul.f32 %v1163, %v1165
    %v1167 = vadd.f32 %v1163, %v1166
    %vm1168 = vweird.f32 %v1162
    %vm1169 = vweird.f32 %v1163
    %vm1170 = vmor %vm1168, %vm1169
    %v1171 = vsel %vm1170, %v1163, %v1167
    %v1172 = vand.u32 2147483647, %v1162
    %vm1173 = vcmp.eq.f32.partialorder %v1172, 8.507059e+37
    %v1174 = vand.u32 %v1162, 2147483648
    %v1175 = vor.u32 1.1754944e-38, %v1174
    %v1176 = vsel %vm1173, %v1175, %v1171
    %v1177 = vmul.f32 1.0, %v1176
    %v1178 = vadd.f32 %v1116, %v1142
    %v1179 = vxor.u32 %v1178, 2147483648
    %v1180 = vmul.f32 %v1179, 1.442695
    %v1181 = vpow.pop %v1180
    %v1182 = vadd.f32 %v1181, 1.0
    %v1183 = vrcp.pop %v1182
    %v1184 = vmul.f32 %v1182, %v1183
    %v1185 = vsub.f32 1.0, %v1184
    %v1186 = vmul.f32 %v1183, %v1185
    %v1187 = vadd.f32 %v1183, %v1186
    %vm1188 = vweird.f32 %v1182
    %vm1189 = vweird.f32 %v1183
    %vm1190 = vmor %vm1188, %vm1189
    %v1191 = vsel %vm1190, %v1183, %v1187
    %v1192 = vand.u32 2147483647, %v1182
    %vm1193 = vcmp.eq.f32.partialorder %v1192, 8.507059e+37
    %v1194 = vand.u32 %v1182, 2147483648
    %v1195 = vor.u32 1.1754944e-38, %v1194
    %v1196 = vsel %vm1193, %v1195, %v1191
    %v1197 = vmul.f32 1.0, %v1196
    %v1198 = vadd.f32 %v1155, %v621
    %v1199 = vmul.f32 %v1177, %v1198
    %v1200 = vadd.f32 %v1117, %v1199
    %v1201 = vtanh.pop %v1200
    %v1202 = vsub.f32 1.0, %v1197
    %v1203 = vmul.f32 %v1202, %v1201
    %v1204 = vmul.f32 %v1197, %v1113
    %v1205 = vadd.f32 %v1203, %v1204
    %1206 = vst [vmem:[#allocation2] sm:$0xff] %v1205
    %s1207 = scalar_lea.vmem [#allocation4], 48
    %1208 = vst [vmem:[%s1207] sm:$0xff] %v1205
    %v1209 = vld [vmem:[#allocation2] sm:$0xff]
    %s1210 = scalar_lea.vmem [#allocation3], 168
    %v1211 = vld [vmem:[%s1210] sm:$0xff]
    %v1212 = vld [vmem:[%s1210 + $0x8] sm:$0xff]
    %v1213 = vld [vmem:[%s1210 + $0x10] sm:$0xff]
    %v1214 = vpack.c.bf16 %v1209, %v1209
    %1215 = vmatpush.bf16.msra.mxu0 %v514
    %1216 = vmatpush.bf16.msra.mxu0 %v511
    %1217 = vmatpush.bf16.msra.mxu0 %v508
    %1218 = vmatpush.bf16.msra.mxu0 %v505
    %1219 = vmatpush.bf16.msra.mxu0 %v502
    %1220 = vmatpush.bf16.msra.mxu0 %v499
    %1221 = vmatpush.bf16.msra.mxu0 %v496
    %1222 = vmatpush.bf16.msra.mxu0 %v493
    %1223 = vmatmul.bf16.gmra.mxu0 %v1214
    %v1224 = vpop.f32.mrf.mxu0
    %v1225 = vadd.f32 0.0, %v1224
    %v1226 = vpop.f32.mrf.mxu0
    %1227 = vdwg.mxu0
    %1228 = vmatpush.bf16.msra.mxu0 %v515
    %1229 = vmatpush.bf16.msra.mxu0 %v512
    %1230 = vmatpush.bf16.msra.mxu0 %v509
    %1231 = vmatpush.bf16.msra.mxu0 %v506
    %1232 = vmatpush.bf16.msra.mxu0 %v503
    %1233 = vmatpush.bf16.msra.mxu0 %v500
    %1234 = vmatpush.bf16.msra.mxu0 %v497
    %1235 = vmatpush.bf16.msra.mxu0 %v494
    %1236 = vmatmul.bf16.gmra.mxu0 %v1214
    %v1237 = vpop.f32.mrf.mxu0
    %v1238 = vadd.f32 0.0, %v1237
    %v1239 = vpop.f32.mrf.mxu0
    %1240 = vdwg.mxu0
    %1241 = vmatpush.bf16.msra.mxu0 %v516
    %1242 = vmatpush.bf16.msra.mxu0 %v513
    %1243 = vmatpush.bf16.msra.mxu0 %v510
    %1244 = vmatpush.bf16.msra.mxu0 %v507
    %1245 = vmatpush.bf16.msra.mxu0 %v504
    %1246 = vmatpush.bf16.msra.mxu0 %v501
    %1247 = vmatpush.bf16.msra.mxu0 %v498
    %1248 = vmatpush.bf16.msra.mxu0 %v495
    %1249 = vmatmul.bf16.gmra.mxu0 %v1214
    %v1250 = vpop.f32.mrf.mxu0
    %v1251 = vadd.f32 0.0, %v1250
    %v1252 = vpop.f32.mrf.mxu0
    %1253 = vdwg.mxu0
    %v1254 = vadd.f32 %v1211, %v1225
    %v1255 = vxor.u32 %v1254, 2147483648
    %v1256 = vmul.f32 %v1255, 1.442695
    %v1257 = vpow.pop %v1256
    %v1258 = vadd.f32 %v1257, 1.0
    %v1259 = vrcp.pop %v1258
    %v1260 = vmul.f32 %v1258, %v1259
    %v1261 = vsub.f32 1.0, %v1260
    %v1262 = vmul.f32 %v1259, %v1261
    %v1263 = vadd.f32 %v1259, %v1262
    %vm1264 = vweird.f32 %v1258
    %vm1265 = vweird.f32 %v1259
    %vm1266 = vmor %vm1264, %vm1265
    %v1267 = vsel %vm1266, %v1259, %v1263
    %v1268 = vand.u32 2147483647, %v1258
    %vm1269 = vcmp.eq.f32.partialorder %v1268, 8.507059e+37
    %v1270 = vand.u32 %v1258, 2147483648
    %v1271 = vor.u32 1.1754944e-38, %v1270
    %v1272 = vsel %vm1269, %v1271, %v1267
    %v1273 = vmul.f32 1.0, %v1272
    %v1274 = vadd.f32 %v1212, %v1238
    %v1275 = vxor.u32 %v1274, 2147483648
    %v1276 = vmul.f32 %v1275, 1.442695
    %v1277 = vpow.pop %v1276
    %v1278 = vadd.f32 %v1277, 1.0
    %v1279 = vrcp.pop %v1278
    %v1280 = vmul.f32 %v1278, %v1279
    %v1281 = vsub.f32 1.0, %v1280
    %v1282 = vmul.f32 %v1279, %v1281
    %v1283 = vadd.f32 %v1279, %v1282
    %vm1284 = vweird.f32 %v1278
    %vm1285 = vweird.f32 %v1279
    %vm1286 = vmor %vm1284, %vm1285
    %v1287 = vsel %vm1286, %v1279, %v1283
    %v1288 = vand.u32 2147483647, %v1278
    %vm1289 = vcmp.eq.f32.partialorder %v1288, 8.507059e+37
    %v1290 = vand.u32 %v1278, 2147483648
    %v1291 = vor.u32 1.1754944e-38, %v1290
    %v1292 = vsel %vm1289, %v1291, %v1287
    %v1293 = vmul.f32 1.0, %v1292
    %v1294 = vadd.f32 %v1251, %v621
    %v1295 = vmul.f32 %v1273, %v1294
    %v1296 = vadd.f32 %v1213, %v1295
    %v1297 = vtanh.pop %v1296
    %v1298 = vsub.f32 1.0, %v1293
    %v1299 = vmul.f32 %v1298, %v1297
    %v1300 = vmul.f32 %v1293, %v1209
    %v1301 = vadd.f32 %v1299, %v1300
    %1302 = vst [vmem:[#allocation2] sm:$0xff] %v1301
    %s1303 = scalar_lea.vmem [#allocation4], 56
    %1304 = vst [vmem:[%s1303] sm:$0xff] %v1301
    %v1305 = vld [vmem:[#allocation4] sm:$0xff]
    %v1306 = vld [vmem:[#allocation4 + $0x8] sm:$0xff]
    %v1307 = vld [vmem:[#allocation4 + $0x10] sm:$0xff]
    %v1308 = vld [vmem:[#allocation4 + $0x18] sm:$0xff]
    %v1309 = vld [vmem:[#allocation4 + $0x20] sm:$0xff]
    %v1310 = vld [vmem:[#allocation4 + $0x28] sm:$0xff]
    %v1311 = vld [vmem:[#allocation4 + $0x30] sm:$0xff]
    %v1312 = vld [vmem:[#allocation4 + $0x38] sm:$0xff]
    %v1313 = vpack.c.bf16 %v1306, %v1305
    %v1314 = vpack.c.bf16 %v1308, %v1307
    %v1315 = vpack.c.bf16 %v1310, %v1309
    %v1316 = vpack.c.bf16 %v1312, %v1311
    %v1317 = vld [vmem:[#allocation7] sm:$0xff]
    %v1318 = vld [vmem:[#allocation7 + $0x8] sm:$0xf]
    %v1319 = vld [vmem:[#allocation7 + $0xc] sm:$0xff]
    %v1320 = vld [vmem:[#allocation7 + $0x14] sm:$0xf]
    %v1321 = vld [vmem:[#allocation7 + $0x18] sm:$0xff]
    %v1322 = vld [vmem:[#allocation7 + $0x20] sm:$0xf]
    %v1323 = vld [vmem:[#allocation7 + $0x24] sm:$0xff]
    %v1324 = vld [vmem:[#allocation7 + $0x2c] sm:$0xf]
    %v1325 = vld [vmem:[#allocation7 + $0x30] sm:$0xff]
    %v1326 = vld [vmem:[#allocation7 + $0x38] sm:$0xf]
    %v1327 = vld [vmem:[#allocation7 + $0x3c] sm:$0xff]
    %v1328 = vld [vmem:[#allocation7 + $0x44] sm:$0xf]
    %v1329 = vld [vmem:[#allocation7 + $0x48] sm:$0xff]
    %v1330 = vld [vmem:[#allocation7 + $0x50] sm:$0xf]
    %v1331 = vld [vmem:[#allocation7 + $0x54] sm:$0xff]
    %v1332 = vld [vmem:[#allocation7 + $0x5c] sm:$0xf]
    %v1333 = vld [vmem:[#allocation7 + $0x60] sm:$0xff]
    %v1334 = vld [vmem:[#allocation7 + $0x68] sm:$0xf]
    %v1335 = vld [vmem:[#allocation7 + $0x6c] sm:$0xff]
    %v1336 = vld [vmem:[#allocation7 + $0x74] sm:$0xf]
    %v1337 = vld [vmem:[#allocation7 + $0x78] sm:$0xff]
    %v1338 = vld [vmem:[#allocation7 + $0x80] sm:$0xf]
    %v1339 = vld [vmem:[#allocation7 + $0x84] sm:$0xff]
    %v1340 = vld [vmem:[#allocation7 + $0x8c] sm:$0xf]
    %v1341 = vld [vmem:[#allocation7 + $0x90] sm:$0xff]
    %v1342 = vld [vmem:[#allocation7 + $0x98] sm:$0xf]
    %v1343 = vld [vmem:[#allocation7 + $0x9c] sm:$0xff]
    %v1344 = vld [vmem:[#allocation7 + $0xa4] sm:$0xf]
    %v1345 = vld [vmem:[#allocation7 + $0xa8] sm:$0xff]
    %v1346 = vld [vmem:[#allocation7 + $0xb0] sm:$0xf]
    %v1347 = vld [vmem:[#allocation7 + $0xb4] sm:$0xff]
    %v1348 = vld [vmem:[#allocation7 + $0xbc] sm:$0xf]
    %s1349 = scalar_lea.vmem %s4, 3
    %v1350 = vld [vmem:[%s1349] sm:$0x7]
    %v1352 = vperm.slane %v1350, 0
    %v1353 = vperm.slane %v1350, 1
    %v1354 = vperm.slane %v1350, 2
    %v1390 = vunpack.c.l.b16 %v1317
    %v1391 = vunpack.c.h.b16 %v1317
    %v1392 = vunpack.c.l.b16 %v1318
    %v1393 = vunpack.c.l.b16 %v1319
    %v1394 = vunpack.c.h.b16 %v1319
    %v1395 = vunpack.c.l.b16 %v1320
    %v1396 = vunpack.c.l.b16 %v1321
    %v1397 = vunpack.c.h.b16 %v1321
    %v1398 = vunpack.c.l.b16 %v1322
    %v1399 = vunpack.c.l.b16 %v1323
    %v1400 = vunpack.c.h.b16 %v1323
    %v1401 = vunpack.c.l.b16 %v1324
    %v1402 = vunpack.c.l.b16 %v1325
    %v1403 = vunpack.c.h.b16 %v1325
    %v1404 = vunpack.c.l.b16 %v1326
    %v1405 = vunpack.c.l.b16 %v1327
    %v1406 = vunpack.c.h.b16 %v1327
    %v1407 = vunpack.c.l.b16 %v1328
    %v1408 = vunpack.c.l.b16 %v1329
    %v1409 = vunpack.c.h.b16 %v1329
    %v1410 = vunpack.c.l.b16 %v1330
    %v1411 = vunpack.c.l.b16 %v1331
    %v1412 = vunpack.c.h.b16 %v1331
    %v1413 = vunpack.c.l.b16 %v1332
    %v1414 = vunpack.c.l.b16 %v1333
    %v1415 = vunpack.c.h.b16 %v1333
    %v1416 = vunpack.c.l.b16 %v1334
    %v1417 = vunpack.c.l.b16 %v1335
    %v1418 = vunpack.c.h.b16 %v1335
    %v1419 = vunpack.c.l.b16 %v1336
    %v1420 = vunpack.c.l.b16 %v1337
    %v1421 = vunpack.c.h.b16 %v1337
    %v1422 = vunpack.c.l.b16 %v1338
    %v1423 = vunpack.c.l.b16 %v1339
    %v1424 = vunpack.c.h.b16 %v1339
    %v1425 = vunpack.c.l.b16 %v1340
    %v1426 = vunpack.c.l.b16 %v1341
    %v1427 = vunpack.c.h.b16 %v1341
    %v1428 = vunpack.c.l.b16 %v1342
    %v1429 = vunpack.c.l.b16 %v1343
    %v1430 = vunpack.c.h.b16 %v1343
    %v1431 = vunpack.c.l.b16 %v1344
    %v1432 = vunpack.c.l.b16 %v1345
    %v1433 = vunpack.c.h.b16 %v1345
    %v1434 = vunpack.c.l.b16 %v1346
    %v1435 = vunpack.c.l.b16 %v1347
    %v1436 = vunpack.c.h.b16 %v1347
    %v1437 = vunpack.c.l.b16 %v1348
    %v1438 = vpack.c.b16 %v1393, %v1390
    %v1439 = vpack.c.b16 %v1394, %v1391
    %v1440 = vpack.c.b16 %v1395, %v1392
    %v1441 = vpack.c.b16 %v1399, %v1396
    %v1442 = vpack.c.b16 %v1400, %v1397
    %v1443 = vpack.c.b16 %v1401, %v1398
    %v1444 = vpack.c.b16 %v1405, %v1402
    %v1445 = vpack.c.b16 %v1406, %v1403
    %v1446 = vpack.c.b16 %v1407, %v1404
    %v1447 = vpack.c.b16 %v1411, %v1408
    %v1448 = vpack.c.b16 %v1412, %v1409
    %v1449 = vpack.c.b16 %v1413, %v1410
    %v1450 = vpack.c.b16 %v1417, %v1414
    %v1451 = vpack.c.b16 %v1418, %v1415
    %v1452 = vpack.c.b16 %v1419, %v1416
    %v1453 = vpack.c.b16 %v1423, %v1420
    %v1454 = vpack.c.b16 %v1424, %v1421
    %v1455 = vpack.c.b16 %v1425, %v1422
    %v1456 = vpack.c.b16 %v1429, %v1426
    %v1457 = vpack.c.b16 %v1430, %v1427
    %v1458 = vpack.c.b16 %v1431, %v1428
    %v1459 = vpack.c.b16 %v1435, %v1432
    %v1460 = vpack.c.b16 %v1436, %v1433
    %v1461 = vpack.c.b16 %v1437, %v1434
    %1486 = vmatpush.bf16.msra.mxu0 %v1459
    %1487 = vmatpush.bf16.msra.mxu0 %v1456
    %1488 = vmatpush.bf16.msra.mxu0 %v1453
    %1489 = vmatpush.bf16.msra.mxu0 %v1450
    %1490 = vmatpush.bf16.msra.mxu0 %v1447
    %1491 = vmatpush.bf16.msra.mxu0 %v1444
    %1492 = vmatpush.bf16.msra.mxu0 %v1441
    %1493 = vmatpush.bf16.msra.mxu0 %v1438
    %1494 = vmatmul.bf16.gmra.mxu0 %v1313
    %v1495 = vpop.f32.mrf.mxu0
    %v1496 = vadd.f32 %v1352, %v1495
    %v1497 = vpop.f32.mrf.mxu0
    %v1498 = vadd.f32 %v1352, %v1497
    %1499 = vmatmul.bf16.gmra.mxu0 %v1314
    %v1500 = vpop.f32.mrf.mxu0
    %v1501 = vadd.f32 %v1352, %v1500
    %v1502 = vpop.f32.mrf.mxu0
    %v1503 = vadd.f32 %v1352, %v1502
    %1504 = vmatmul.bf16.gmra.mxu0 %v1315
    %v1505 = vpop.f32.mrf.mxu0
    %v1506 = vadd.f32 %v1352, %v1505
    %v1507 = vpop.f32.mrf.mxu0
    %v1508 = vadd.f32 %v1352, %v1507
    %1509 = vmatmul.bf16.gmra.mxu0 %v1316
    %v1510 = vpop.f32.mrf.mxu0
    %v1511 = vadd.f32 %v1352, %v1510
    %v1512 = vpop.f32.mrf.mxu0
    %v1513 = vadd.f32 %v1352, %v1512
    %1514 = vdwg.mxu0
    %1515 = vmatpush.bf16.msra.mxu0 %v1460
    %1516 = vmatpush.bf16.msra.mxu0 %v1457
    %1517 = vmatpush.bf16.msra.mxu0 %v1454
    %1518 = vmatpush.bf16.msra.mxu0 %v1451
    %1519 = vmatpush.bf16.msra.mxu0 %v1448
    %1520 = vmatpush.bf16.msra.mxu0 %v1445
    %1521 = vmatpush.bf16.msra.mxu0 %v1442
    %1522 = vmatpush.bf16.msra.mxu0 %v1439
    %1523 = vmatmul.bf16.gmra.mxu0 %v1313
    %v1524 = vpop.f32.mrf.mxu0
    %v1525 = vadd.f32 %v1353, %v1524
    %v1526 = vpop.f32.mrf.mxu0
    %v1527 = vadd.f32 %v1353, %v1526
    %1528 = vmatmul.bf16.gmra.mxu0 %v1314
    %v1529 = vpop.f32.mrf.mxu0
    %v1530 = vadd.f32 %v1353, %v1529
    %v1531 = vpop.f32.mrf.mxu0
    %v1532 = vadd.f32 %v1353, %v1531
    %1533 = vmatmul.bf16.gmra.mxu0 %v1315
    %v1534 = vpop.f32.mrf.mxu0
    %v1535 = vadd.f32 %v1353, %v1534
    %v1536 = vpop.f32.mrf.mxu0
    %v1537 = vadd.f32 %v1353, %v1536
    %1538 = vmatmul.bf16.gmra.mxu0 %v1316
    %v1539 = vpop.f32.mrf.mxu0
    %v1540 = vadd.f32 %v1353, %v1539
    %v1541 = vpop.f32.mrf.mxu0
    %v1542 = vadd.f32 %v1353, %v1541
    %1543 = vdwg.mxu0
    %1544 = vmatpush.bf16.msra.mxu0 %v1461
    %1545 = vmatpush.bf16.msra.mxu0 %v1458
    %1546 = vmatpush.bf16.msra.mxu0 %v1455
    %1547 = vmatpush.bf16.msra.mxu0 %v1452
    %1548 = vmatpush.bf16.msra.mxu0 %v1449
    %1549 = vmatpush.bf16.msra.mxu0 %v1446
    %1550 = vmatpush.bf16.msra.mxu0 %v1443
    %1551 = vmatpush.bf16.msra.mxu0 %v1440
    %1552 = vmatmul.bf16.gmra.mxu0 %v1313
    %v1553 = vpop.f32.mrf.mxu0
    %v1554 = vadd.f32 %v1354, %v1553
    %v1555 = vpop.f32.mrf.mxu0
    %v1556 = vadd.f32 %v1354, %v1555
    %1557 = vmatmul.bf16.gmra.mxu0 %v1314
    %v1558 = vpop.f32.mrf.mxu0
    %v1559 = vadd.f32 %v1354, %v1558
    %v1560 = vpop.f32.mrf.mxu0
    %v1561 = vadd.f32 %v1354, %v1560
    %1562 = vmatmul.bf16.gmra.mxu0 %v1315
    %v1563 = vpop.f32.mrf.mxu0
    %v1564 = vadd.f32 %v1354, %v1563
    %v1565 = vpop.f32.mrf.mxu0
    %v1566 = vadd.f32 %v1354, %v1565
    %1567 = vmatmul.bf16.gmra.mxu0 %v1316
    %v1568 = vpop.f32.mrf.mxu0
    %v1569 = vadd.f32 %v1354, %v1568
    %v1570 = vpop.f32.mrf.mxu0
    %v1571 = vadd.f32 %v1354, %v1570
    %1572 = vdwg.mxu0
    %1573 = vst [vmem:[#allocation3] sm:$0xff] %v1496
    %1574 = vst [vmem:[#allocation3 + $0x8] sm:$0xff] %v1525
    %1575 = vst [vmem:[#allocation3 + $0x10] sm:$0xff] %v1554
    %1576 = vst [vmem:[#allocation3 + $0x18] sm:$0xff] %v1498
    %1577 = vst [vmem:[#allocation3 + $0x20] sm:$0xff] %v1527
    %1578 = vst [vmem:[#allocation3 + $0x28] sm:$0xff] %v1556
    %1579 = vst [vmem:[#allocation3 + $0x30] sm:$0xff] %v1501
    %1580 = vst [vmem:[#allocation3 + $0x38] sm:$0xff] %v1530
    %1581 = vst [vmem:[#allocation3 + $0x40] sm:$0xff] %v1559
    %1582 = vst [vmem:[#allocation3 + $0x48] sm:$0xff] %v1503
    %1583 = vst [vmem:[#allocation3 + $0x50] sm:$0xff] %v1532
    %1584 = vst [vmem:[#allocation3 + $0x58] sm:$0xff] %v1561
    %1585 = vst [vmem:[#allocation3 + $0x60] sm:$0xff] %v1506
    %1586 = vst [vmem:[#allocation3 + $0x68] sm:$0xff] %v1535
    %1587 = vst [vmem:[#allocation3 + $0x70] sm:$0xff] %v1564
    %1588 = vst [vmem:[#allocation3 + $0x78] sm:$0xff] %v1508
    %1589 = vst [vmem:[#allocation3 + $0x80] sm:$0xff] %v1537
    %1590 = vst [vmem:[#allocation3 + $0x88] sm:$0xff] %v1566
    %1591 = vst [vmem:[#allocation3 + $0x90] sm:$0xff] %v1511
    %1592 = vst [vmem:[#allocation3 + $0x98] sm:$0xff] %v1540
    %1593 = vst [vmem:[#allocation3 + $0xa0] sm:$0xff] %v1569
    %1594 = vst [vmem:[#allocation3 + $0xa8] sm:$0xff] %v1513
    %1595 = vst [vmem:[#allocation3 + $0xb0] sm:$0xff] %v1542
    %1596 = vst [vmem:[#allocation3 + $0xb8] sm:$0xff] %v1571
    %s1597 = scalar_lea.vmem [#allocation9], 192
    %v1598 = vld [vmem:[%s1597] sm:$0xff]
    %v1599 = vld [vmem:[%s1597 + $0x8] sm:$0xf]
    %v1600 = vld [vmem:[%s1597 + $0xc] sm:$0xff]
    %v1601 = vld [vmem:[%s1597 + $0x14] sm:$0xf]
    %v1602 = vld [vmem:[%s1597 + $0x18] sm:$0xff]
    %v1603 = vld [vmem:[%s1597 + $0x20] sm:$0xf]
    %v1604 = vld [vmem:[%s1597 + $0x24] sm:$0xff]
    %v1605 = vld [vmem:[%s1597 + $0x2c] sm:$0xf]
    %v1606 = vld [vmem:[%s1597 + $0x30] sm:$0xff]
    %v1607 = vld [vmem:[%s1597 + $0x38] sm:$0xf]
    %v1608 = vld [vmem:[%s1597 + $0x3c] sm:$0xff]
    %v1609 = vld [vmem:[%s1597 + $0x44] sm:$0xf]
    %v1610 = vld [vmem:[%s1597 + $0x48] sm:$0xff]
    %v1611 = vld [vmem:[%s1597 + $0x50] sm:$0xf]
    %v1612 = vld [vmem:[%s1597 + $0x54] sm:$0xff]
    %v1613 = vld [vmem:[%s1597 + $0x5c] sm:$0xf]
    %v1614 = vld [vmem:[%s1597 + $0x60] sm:$0xff]
    %v1615 = vld [vmem:[%s1597 + $0x68] sm:$0xf]
    %v1616 = vld [vmem:[%s1597 + $0x6c] sm:$0xff]
    %v1617 = vld [vmem:[%s1597 + $0x74] sm:$0xf]
    %v1618 = vld [vmem:[%s1597 + $0x78] sm:$0xff]
    %v1619 = vld [vmem:[%s1597 + $0x80] sm:$0xf]
    %v1620 = vld [vmem:[%s1597 + $0x84] sm:$0xff]
    %v1621 = vld [vmem:[%s1597 + $0x8c] sm:$0xf]
    %v1622 = vld [vmem:[%s1597 + $0x90] sm:$0xff]
    %v1623 = vld [vmem:[%s1597 + $0x98] sm:$0xf]
    %v1624 = vld [vmem:[%s1597 + $0x9c] sm:$0xff]
    %v1625 = vld [vmem:[%s1597 + $0xa4] sm:$0xf]
    %v1626 = vld [vmem:[%s1597 + $0xa8] sm:$0xff]
    %v1627 = vld [vmem:[%s1597 + $0xb0] sm:$0xf]
    %v1628 = vld [vmem:[%s1597 + $0xb4] sm:$0xff]
    %v1629 = vld [vmem:[%s1597 + $0xbc] sm:$0xf]
    %s1630 = scalar_lea.vmem %s5, 1
    %v1631 = vld [vmem:[%s1630] sm:$0x1]
    %s1632 = scalar_lea.vmem [#allocation2], 8
    %v1633 = vld [vmem:[%s1632] sm:$0xff]
    %v1634 = vld [vmem:[#allocation3] sm:$0xff]
    %v1635 = vld [vmem:[#allocation3 + $0x8] sm:$0xff]
    %v1636 = vld [vmem:[#allocation3 + $0x10] sm:$0xff]
    %v1637 = vpack.c.bf16 %v1633, %v1633
    %v1670 = vunpack.c.l.b16 %v1598
    %v1671 = vunpack.c.h.b16 %v1598
    %v1672 = vunpack.c.l.b16 %v1599
    %v1673 = vunpack.c.l.b16 %v1600
    %v1674 = vunpack.c.h.b16 %v1600
    %v1675 = vunpack.c.l.b16 %v1601
    %v1676 = vunpack.c.l.b16 %v1602
    %v1677 = vunpack.c.h.b16 %v1602
    %v1678 = vunpack.c.l.b16 %v1603
    %v1679 = vunpack.c.l.b16 %v1604
    %v1680 = vunpack.c.h.b16 %v1604
    %v1681 = vunpack.c.l.b16 %v1605
    %v1682 = vunpack.c.l.b16 %v1606
    %v1683 = vunpack.c.h.b16 %v1606
    %v1684 = vunpack.c.l.b16 %v1607
    %v1685 = vunpack.c.l.b16 %v1608
    %v1686 = vunpack.c.h.b16 %v1608
    %v1687 = vunpack.c.l.b16 %v1609
    %v1688 = vunpack.c.l.b16 %v1610
    %v1689 = vunpack.c.h.b16 %v1610
    %v1690 = vunpack.c.l.b16 %v1611
    %v1691 = vunpack.c.l.b16 %v1612
    %v1692 = vunpack.c.h.b16 %v1612
    %v1693 = vunpack.c.l.b16 %v1613
    %v1694 = vunpack.c.l.b16 %v1614
    %v1695 = vunpack.c.h.b16 %v1614
    %v1696 = vunpack.c.l.b16 %v1615
    %v1697 = vunpack.c.l.b16 %v1616
    %v1698 = vunpack.c.h.b16 %v1616
    %v1699 = vunpack.c.l.b16 %v1617
    %v1700 = vunpack.c.l.b16 %v1618
    %v1701 = vunpack.c.h.b16 %v1618
    %v1702 = vunpack.c.l.b16 %v1619
    %v1703 = vunpack.c.l.b16 %v1620
    %v1704 = vunpack.c.h.b16 %v1620
    %v1705 = vunpack.c.l.b16 %v1621
    %v1706 = vunpack.c.l.b16 %v1622
    %v1707 = vunpack.c.h.b16 %v1622
    %v1708 = vunpack.c.l.b16 %v1623
    %v1709 = vunpack.c.l.b16 %v1624
    %v1710 = vunpack.c.h.b16 %v1624
    %v1711 = vunpack.c.l.b16 %v1625
    %v1712 = vunpack.c.l.b16 %v1626
    %v1713 = vunpack.c.h.b16 %v1626
    %v1714 = vunpack.c.l.b16 %v1627
    %v1715 = vunpack.c.l.b16 %v1628
    %v1716 = vunpack.c.h.b16 %v1628
    %v1717 = vunpack.c.l.b16 %v1629
    %v1718 = vpack.c.b16 %v1673, %v1670
    %v1719 = vpack.c.b16 %v1674, %v1671
    %v1720 = vpack.c.b16 %v1675, %v1672
    %v1721 = vpack.c.b16 %v1679, %v1676
    %v1722 = vpack.c.b16 %v1680, %v1677
    %v1723 = vpack.c.b16 %v1681, %v1678
    %v1724 = vpack.c.b16 %v1685, %v1682
    %v1725 = vpack.c.b16 %v1686, %v1683
    %v1726 = vpack.c.b16 %v1687, %v1684
    %v1727 = vpack.c.b16 %v1691, %v1688
    %v1728 = vpack.c.b16 %v1692, %v1689
    %v1729 = vpack.c.b16 %v1693, %v1690
    %v1730 = vpack.c.b16 %v1697, %v1694
    %v1731 = vpack.c.b16 %v1698, %v1695
    %v1732 = vpack.c.b16 %v1699, %v1696
    %v1733 = vpack.c.b16 %v1703, %v1700
    %v1734 = vpack.c.b16 %v1704, %v1701
    %v1735 = vpack.c.b16 %v1705, %v1702
    %v1736 = vpack.c.b16 %v1709, %v1706
    %v1737 = vpack.c.b16 %v1710, %v1707
    %v1738 = vpack.c.b16 %v1711, %v1708
    %v1739 = vpack.c.b16 %v1715, %v1712
    %v1740 = vpack.c.b16 %v1716, %v1713
    %v1741 = vpack.c.b16 %v1717, %v1714
    %1766 = vmatpush.bf16.msra.mxu0 %v1739
    %1767 = vmatpush.bf16.msra.mxu0 %v1736
    %1768 = vmatpush.bf16.msra.mxu0 %v1733
    %1769 = vmatpush.bf16.msra.mxu0 %v1730
    %1770 = vmatpush.bf16.msra.mxu0 %v1727
    %1771 = vmatpush.bf16.msra.mxu0 %v1724
    %1772 = vmatpush.bf16.msra.mxu0 %v1721
    %1773 = vmatpush.bf16.msra.mxu0 %v1718
    %1774 = vmatmul.bf16.gmra.mxu0 %v1637
    %v1775 = vpop.f32.mrf.mxu0
    %v1776 = vadd.f32 0.0, %v1775
    %v1777 = vpop.f32.mrf.mxu0
    %1778 = vdwg.mxu0
    %1779 = vmatpush.bf16.msra.mxu0 %v1740
    %1780 = vmatpush.bf16.msra.mxu0 %v1737
    %1781 = vmatpush.bf16.msra.mxu0 %v1734
    %1782 = vmatpush.bf16.msra.mxu0 %v1731
    %1783 = vmatpush.bf16.msra.mxu0 %v1728
    %1784 = vmatpush.bf16.msra.mxu0 %v1725
    %1785 = vmatpush.bf16.msra.mxu0 %v1722
    %1786 = vmatpush.bf16.msra.mxu0 %v1719
    %1787 = vmatmul.bf16.gmra.mxu0 %v1637
    %v1788 = vpop.f32.mrf.mxu0
    %v1789 = vadd.f32 0.0, %v1788
    %v1790 = vpop.f32.mrf.mxu0
    %1791 = vdwg.mxu0
    %1792 = vmatpush.bf16.msra.mxu0 %v1741
    %1793 = vmatpush.bf16.msra.mxu0 %v1738
    %1794 = vmatpush.bf16.msra.mxu0 %v1735
    %1795 = vmatpush.bf16.msra.mxu0 %v1732
    %1796 = vmatpush.bf16.msra.mxu0 %v1729
    %1797 = vmatpush.bf16.msra.mxu0 %v1726
    %1798 = vmatpush.bf16.msra.mxu0 %v1723
    %1799 = vmatpush.bf16.msra.mxu0 %v1720
    %1800 = vmatmul.bf16.gmra.mxu0 %v1637
    %v1801 = vpop.f32.mrf.mxu0
    %v1802 = vadd.f32 0.0, %v1801
    %v1803 = vpop.f32.mrf.mxu0
    %1804 = vdwg.mxu0
    %v1805 = vadd.f32 %v1634, %v1776
    %v1806 = vxor.u32 %v1805, 2147483648
    %v1807 = vmul.f32 %v1806, 1.442695
    %v1808 = vpow.pop %v1807
    %v1809 = vadd.f32 %v1808, 1.0
    %v1810 = vrcp.pop %v1809
    %v1811 = vmul.f32 %v1809, %v1810
    %v1812 = vsub.f32 1.0, %v1811
    %v1813 = vmul.f32 %v1810, %v1812
    %v1814 = vadd.f32 %v1810, %v1813
    %vm1815 = vweird.f32 %v1809
    %vm1816 = vweird.f32 %v1810
    %vm1817 = vmor %vm1815, %vm1816
    %v1818 = vsel %vm1817, %v1810, %v1814
    %v1819 = vand.u32 2147483647, %v1809
    %vm1820 = vcmp.eq.f32.partialorder %v1819, 8.507059e+37
    %v1821 = vand.u32 %v1809, 2147483648
    %v1822 = vor.u32 1.1754944e-38, %v1821
    %v1823 = vsel %vm1820, %v1822, %v1818
    %v1824 = vmul.f32 1.0, %v1823
    %v1825 = vadd.f32 %v1635, %v1789
    %v1826 = vxor.u32 %v1825, 2147483648
    %v1827 = vmul.f32 %v1826, 1.442695
    %v1828 = vpow.pop %v1827
    %v1829 = vadd.f32 %v1828, 1.0
    %v1830 = vrcp.pop %v1829
    %v1831 = vmul.f32 %v1829, %v1830
    %v1832 = vsub.f32 1.0, %v1831
    %v1833 = vmul.f32 %v1830, %v1832
    %v1834 = vadd.f32 %v1830, %v1833
    %vm1835 = vweird.f32 %v1829
    %vm1836 = vweird.f32 %v1830
    %vm1837 = vmor %vm1835, %vm1836
    %v1838 = vsel %vm1837, %v1830, %v1834
    %v1839 = vand.u32 2147483647, %v1829
    %vm1840 = vcmp.eq.f32.partialorder %v1839, 8.507059e+37
    %v1841 = vand.u32 %v1829, 2147483648
    %v1842 = vor.u32 1.1754944e-38, %v1841
    %v1843 = vsel %vm1840, %v1842, %v1838
    %v1844 = vmul.f32 1.0, %v1843
    %v1846 = vperm.slane %v1631, 0
    %v1848 = vadd.f32 %v1802, %v1846
    %v1849 = vmul.f32 %v1824, %v1848
    %v1850 = vadd.f32 %v1636, %v1849
    %v1851 = vtanh.pop %v1850
    %v1852 = vsub.f32 1.0, %v1844
    %v1853 = vmul.f32 %v1852, %v1851
    %v1854 = vmul.f32 %v1844, %v1633
    %v1855 = vadd.f32 %v1853, %v1854
    %1856 = vst [vmem:[%s1632] sm:$0xff] %v1855
    %1857 = vst [vmem:[#allocation4] sm:$0xff] %v1855
    %v1858 = vld [vmem:[%s1632] sm:$0xff]
    %v1859 = vld [vmem:[%s634] sm:$0xff]
    %v1860 = vld [vmem:[%s634 + $0x8] sm:$0xff]
    %v1861 = vld [vmem:[%s634 + $0x10] sm:$0xff]
    %v1862 = vpack.c.bf16 %v1858, %v1858
    %1863 = vmatpush.bf16.msra.mxu0 %v1739
    %1864 = vmatpush.bf16.msra.mxu0 %v1736
    %1865 = vmatpush.bf16.msra.mxu0 %v1733
    %1866 = vmatpush.bf16.msra.mxu0 %v1730
    %1867 = vmatpush.bf16.msra.mxu0 %v1727
    %1868 = vmatpush.bf16.msra.mxu0 %v1724
    %1869 = vmatpush.bf16.msra.mxu0 %v1721
    %1870 = vmatpush.bf16.msra.mxu0 %v1718
    %1871 = vmatmul.bf16.gmra.mxu0 %v1862
    %v1872 = vpop.f32.mrf.mxu0
    %v1873 = vadd.f32 0.0, %v1872
    %v1874 = vpop.f32.mrf.mxu0
    %1875 = vdwg.mxu0
    %1876 = vmatpush.bf16.msra.mxu0 %v1740
    %1877 = vmatpush.bf16.msra.mxu0 %v1737
    %1878 = vmatpush.bf16.msra.mxu0 %v1734
    %1879 = vmatpush.bf16.msra.mxu0 %v1731
    %1880 = vmatpush.bf16.msra.mxu0 %v1728
    %1881 = vmatpush.bf16.msra.mxu0 %v1725
    %1882 = vmatpush.bf16.msra.mxu0 %v1722
    %1883 = vmatpush.bf16.msra.mxu0 %v1719
    %1884 = vmatmul.bf16.gmra.mxu0 %v1862
    %v1885 = vpop.f32.mrf.mxu0
    %v1886 = vadd.f32 0.0, %v1885
    %v1887 = vpop.f32.mrf.mxu0
    %1888 = vdwg.mxu0
    %1889 = vmatpush.bf16.msra.mxu0 %v1741
    %1890 = vmatpush.bf16.msra.mxu0 %v1738
    %1891 = vmatpush.bf16.msra.mxu0 %v1735
    %1892 = vmatpush.bf16.msra.mxu0 %v1732
    %1893 = vmatpush.bf16.msra.mxu0 %v1729
    %1894 = vmatpush.bf16.msra.mxu0 %v1726
    %1895 = vmatpush.bf16.msra.mxu0 %v1723
    %1896 = vmatpush.bf16.msra.mxu0 %v1720
    %1897 = vmatmul.bf16.gmra.mxu0 %v1862
    %v1898 = vpop.f32.mrf.mxu0
    %v1899 = vadd.f32 0.0, %v1898
    %v1900 = vpop.f32.mrf.mxu0
    %1901 = vdwg.mxu0
    %v1902 = vadd.f32 %v1859, %v1873
    %v1903 = vxor.u32 %v1902, 2147483648
    %v1904 = vmul.f32 %v1903, 1.442695
    %v1905 = vpow.pop %v1904
    %v1906 = vadd.f32 %v1905, 1.0
    %v1907 = vrcp.pop %v1906
    %v1908 = vmul.f32 %v1906, %v1907
    %v1909 = vsub.f32 1.0, %v1908
    %v1910 = vmul.f32 %v1907, %v1909
    %v1911 = vadd.f32 %v1907, %v1910
    %vm1912 = vweird.f32 %v1906
    %vm1913 = vweird.f32 %v1907
    %vm1914 = vmor %vm1912, %vm1913
    %v1915 = vsel %vm1914, %v1907, %v1911
    %v1916 = vand.u32 2147483647, %v1906
    %vm1917 = vcmp.eq.f32.partialorder %v1916, 8.507059e+37
    %v1918 = vand.u32 %v1906, 2147483648
    %v1919 = vor.u32 1.1754944e-38, %v1918
    %v1920 = vsel %vm1917, %v1919, %v1915
    %v1921 = vmul.f32 1.0, %v1920
    %v1922 = vadd.f32 %v1860, %v1886
    %v1923 = vxor.u32 %v1922, 2147483648
    %v1924 = vmul.f32 %v1923, 1.442695
    %v1925 = vpow.pop %v1924
    %v1926 = vadd.f32 %v1925, 1.0
    %v1927 = vrcp.pop %v1926
    %v1928 = vmul.f32 %v1926, %v1927
    %v1929 = vsub.f32 1.0, %v1928
    %v1930 = vmul.f32 %v1927, %v1929
    %v1931 = vadd.f32 %v1927, %v1930
    %vm1932 = vweird.f32 %v1926
    %vm1933 = vweird.f32 %v1927
    %vm1934 = vmor %vm1932, %vm1933
    %v1935 = vsel %vm1934, %v1927, %v1931
    %v1936 = vand.u32 2147483647, %v1926
    %vm1937 = vcmp.eq.f32.partialorder %v1936, 8.507059e+37
    %v1938 = vand.u32 %v1926, 2147483648
    %v1939 = vor.u32 1.1754944e-38, %v1938
    %v1940 = vsel %vm1937, %v1939, %v1935
    %v1941 = vmul.f32 1.0, %v1940
    %v1942 = vadd.f32 %v1899, %v1846
    %v1943 = vmul.f32 %v1921, %v1942
    %v1944 = vadd.f32 %v1861, %v1943
    %v1945 = vtanh.pop %v1944
    %v1946 = vsub.f32 1.0, %v1941
    %v1947 = vmul.f32 %v1946, %v1945
    %v1948 = vmul.f32 %v1941, %v1858
    %v1949 = vadd.f32 %v1947, %v1948
    %1950 = vst [vmem:[%s1632] sm:$0xff] %v1949
    %1951 = vst [vmem:[%s727] sm:$0xff] %v1949
    %v1952 = vld [vmem:[%s1632] sm:$0xff]
    %v1953 = vld [vmem:[%s730] sm:$0xff]
    %v1954 = vld [vmem:[%s730 + $0x8] sm:$0xff]
    %v1955 = vld [vmem:[%s730 + $0x10] sm:$0xff]
    %v1956 = vpack.c.bf16 %v1952, %v1952
    %1957 = vmatpush.bf16.msra.mxu0 %v1739
    %1958 = vmatpush.bf16.msra.mxu0 %v1736
    %1959 = vmatpush.bf16.msra.mxu0 %v1733
    %1960 = vmatpush.bf16.msra.mxu0 %v1730
    %1961 = vmatpush.bf16.msra.mxu0 %v1727
    %1962 = vmatpush.bf16.msra.mxu0 %v1724
    %1963 = vmatpush.bf16.msra.mxu0 %v1721
    %1964 = vmatpush.bf16.msra.mxu0 %v1718
    %1965 = vmatmul.bf16.gmra.mxu0 %v1956
    %v1966 = vpop.f32.mrf.mxu0
    %v1967 = vadd.f32 0.0, %v1966
    %v1968 = vpop.f32.mrf.mxu0
    %1969 = vdwg.mxu0
    %1970 = vmatpush.bf16.msra.mxu0 %v1740
    %1971 = vmatpush.bf16.msra.mxu0 %v1737
    %1972 = vmatpush.bf16.msra.mxu0 %v1734
    %1973 = vmatpush.bf16.msra.mxu0 %v1731
    %1974 = vmatpush.bf16.msra.mxu0 %v1728
    %1975 = vmatpush.bf16.msra.mxu0 %v1725
    %1976 = vmatpush.bf16.msra.mxu0 %v1722
    %1977 = vmatpush.bf16.msra.mxu0 %v1719
    %1978 = vmatmul.bf16.gmra.mxu0 %v1956
    %v1979 = vpop.f32.mrf.mxu0
    %v1980 = vadd.f32 0.0, %v1979
    %v1981 = vpop.f32.mrf.mxu0
    %1982 = vdwg.mxu0
    %1983 = vmatpush.bf16.msra.mxu0 %v1741
    %1984 = vmatpush.bf16.msra.mxu0 %v1738
    %1985 = vmatpush.bf16.msra.mxu0 %v1735
    %1986 = vmatpush.bf16.msra.mxu0 %v1732
    %1987 = vmatpush.bf16.msra.mxu0 %v1729
    %1988 = vmatpush.bf16.msra.mxu0 %v1726
    %1989 = vmatpush.bf16.msra.mxu0 %v1723
    %1990 = vmatpush.bf16.msra.mxu0 %v1720
    %1991 = vmatmul.bf16.gmra.mxu0 %v1956
    %v1992 = vpop.f32.mrf.mxu0
    %v1993 = vadd.f32 0.0, %v1992
    %v1994 = vpop.f32.mrf.mxu0
    %1995 = vdwg.mxu0
    %v1996 = vadd.f32 %v1953, %v1967
    %v1997 = vxor.u32 %v1996, 2147483648
    %v1998 = vmul.f32 %v1997, 1.442695
    %v1999 = vpow.pop %v1998
    %v2000 = vadd.f32 %v1999, 1.0
    %v2001 = vrcp.pop %v2000
    %v2002 = vmul.f32 %v2000, %v2001
    %v2003 = vsub.f32 1.0, %v2002
    %v2004 = vmul.f32 %v2001, %v2003
    %v2005 = vadd.f32 %v2001, %v2004
    %vm2006 = vweird.f32 %v2000
    %vm2007 = vweird.f32 %v2001
    %vm2008 = vmor %vm2006, %vm2007
    %v2009 = vsel %vm2008, %v2001, %v2005
    %v2010 = vand.u32 2147483647, %v2000
    %vm2011 = vcmp.eq.f32.partialorder %v2010, 8.507059e+37
    %v2012 = vand.u32 %v2000, 2147483648
    %v2013 = vor.u32 1.1754944e-38, %v2012
    %v2014 = vsel %vm2011, %v2013, %v2009
    %v2015 = vmul.f32 1.0, %v2014
    %v2016 = vadd.f32 %v1954, %v1980
    %v2017 = vxor.u32 %v2016, 2147483648
    %v2018 = vmul.f32 %v2017, 1.442695
    %v2019 = vpow.pop %v2018
    %v2020 = vadd.f32 %v2019, 1.0
    %v2021 = vrcp.pop %v2020
    %v2022 = vmul.f32 %v2020, %v2021
    %v2023 = vsub.f32 1.0, %v2022
    %v2024 = vmul.f32 %v2021, %v2023
    %v2025 = vadd.f32 %v2021, %v2024
    %vm2026 = vweird.f32 %v2020
    %vm2027 = vweird.f32 %v2021
    %vm2028 = vmor %vm2026, %vm2027
    %v2029 = vsel %vm2028, %v2021, %v2025
    %v2030 = vand.u32 2147483647, %v2020
    %vm2031 = vcmp.eq.f32.partialorder %v2030, 8.507059e+37
    %v2032 = vand.u32 %v2020, 2147483648
    %v2033 = vor.u32 1.1754944e-38, %v2032
    %v2034 = vsel %vm2031, %v2033, %v2029
    %v2035 = vmul.f32 1.0, %v2034
    %v2036 = vadd.f32 %v1993, %v1846
    %v2037 = vmul.f32 %v2015, %v2036
    %v2038 = vadd.f32 %v1955, %v2037
    %v2039 = vtanh.pop %v2038
    %v2040 = vsub.f32 1.0, %v2035
    %v2041 = vmul.f32 %v2040, %v2039
    %v2042 = vmul.f32 %v2035, %v1952
    %v2043 = vadd.f32 %v2041, %v2042
    %2044 = vst [vmem:[%s1632] sm:$0xff] %v2043
    %2045 = vst [vmem:[%s823] sm:$0xff] %v2043
    %v2046 = vld [vmem:[%s1632] sm:$0xff]
    %v2047 = vld [vmem:[%s826] sm:$0xff]
    %v2048 = vld [vmem:[%s826 + $0x8] sm:$0xff]
    %v2049 = vld [vmem:[%s826 + $0x10] sm:$0xff]
    %v2050 = vpack.c.bf16 %v2046, %v2046
    %2051 = vmatpush.bf16.msra.mxu0 %v1739
    %2052 = vmatpush.bf16.msra.mxu0 %v1736
    %2053 = vmatpush.bf16.msra.mxu0 %v1733
    %2054 = vmatpush.bf16.msra.mxu0 %v1730
    %2055 = vmatpush.bf16.msra.mxu0 %v1727
    %2056 = vmatpush.bf16.msra.mxu0 %v1724
    %2057 = vmatpush.bf16.msra.mxu0 %v1721
    %2058 = vmatpush.bf16.msra.mxu0 %v1718
    %2059 = vmatmul.bf16.gmra.mxu0 %v2050
    %v2060 = vpop.f32.mrf.mxu0
    %v2061 = vadd.f32 0.0, %v2060
    %v2062 = vpop.f32.mrf.mxu0
    %2063 = vdwg.mxu0
    %2064 = vmatpush.bf16.msra.mxu0 %v1740
    %2065 = vmatpush.bf16.msra.mxu0 %v1737
    %2066 = vmatpush.bf16.msra.mxu0 %v1734
    %2067 = vmatpush.bf16.msra.mxu0 %v1731
    %2068 = vmatpush.bf16.msra.mxu0 %v1728
    %2069 = vmatpush.bf16.msra.mxu0 %v1725
    %2070 = vmatpush.bf16.msra.mxu0 %v1722
    %2071 = vmatpush.bf16.msra.mxu0 %v1719
    %2072 = vmatmul.bf16.gmra.mxu0 %v2050
    %v2073 = vpop.f32.mrf.mxu0
    %v2074 = vadd.f32 0.0, %v2073
    %v2075 = vpop.f32.mrf.mxu0
    %2076 = vdwg.mxu0
    %2077 = vmatpush.bf16.msra.mxu0 %v1741
    %2078 = vmatpush.bf16.msra.mxu0 %v1738
    %2079 = vmatpush.bf16.msra.mxu0 %v1735
    %2080 = vmatpush.bf16.msra.mxu0 %v1732
    %2081 = vmatpush.bf16.msra.mxu0 %v1729
    %2082 = vmatpush.bf16.msra.mxu0 %v1726
    %2083 = vmatpush.bf16.msra.mxu0 %v1723
    %2084 = vmatpush.bf16.msra.mxu0 %v1720
    %2085 = vmatmul.bf16.gmra.mxu0 %v2050
    %v2086 = vpop.f32.mrf.mxu0
    %v2087 = vadd.f32 0.0, %v2086
    %v2088 = vpop.f32.mrf.mxu0
    %2089 = vdwg.mxu0
    %v2090 = vadd.f32 %v2047, %v2061
    %v2091 = vxor.u32 %v2090, 2147483648
    %v2092 = vmul.f32 %v2091, 1.442695
    %v2093 = vpow.pop %v2092
    %v2094 = vadd.f32 %v2093, 1.0
    %v2095 = vrcp.pop %v2094
    %v2096 = vmul.f32 %v2094, %v2095
    %v2097 = vsub.f32 1.0, %v2096
    %v2098 = vmul.f32 %v2095, %v2097
    %v2099 = vadd.f32 %v2095, %v2098
    %vm2100 = vweird.f32 %v2094
    %vm2101 = vweird.f32 %v2095
    %vm2102 = vmor %vm2100, %vm2101
    %v2103 = vsel %vm2102, %v2095, %v2099
    %v2104 = vand.u32 2147483647, %v2094
    %vm2105 = vcmp.eq.f32.partialorder %v2104, 8.507059e+37
    %v2106 = vand.u32 %v2094, 2147483648
    %v2107 = vor.u32 1.1754944e-38, %v2106
    %v2108 = vsel %vm2105, %v2107, %v2103
    %v2109 = vmul.f32 1.0, %v2108
    %v2110 = vadd.f32 %v2048, %v2074
    %v2111 = vxor.u32 %v2110, 2147483648
    %v2112 = vmul.f32 %v2111, 1.442695
    %v2113 = vpow.pop %v2112
    %v2114 = vadd.f32 %v2113, 1.0
    %v2115 = vrcp.pop %v2114
    %v2116 = vmul.f32 %v2114, %v2115
    %v2117 = vsub.f32 1.0, %v2116
    %v2118 = vmul.f32 %v2115, %v2117
    %v2119 = vadd.f32 %v2115, %v2118
    %vm2120 = vweird.f32 %v2114
    %vm2121 = vweird.f32 %v2115
    %vm2122 = vmor %vm2120, %vm2121
    %v2123 = vsel %vm2122, %v2115, %v2119
    %v2124 = vand.u32 2147483647, %v2114
    %vm2125 = vcmp.eq.f32.partialorder %v2124, 8.507059e+37
    %v2126 = vand.u32 %v2114, 2147483648
    %v2127 = vor.u32 1.1754944e-38, %v2126
    %v2128 = vsel %vm2125, %v2127, %v2123
    %v2129 = vmul.f32 1.0, %v2128
    %v2130 = vadd.f32 %v2087, %v1846
    %v2131 = vmul.f32 %v2109, %v2130
    %v2132 = vadd.f32 %v2049, %v2131
    %v2133 = vtanh.pop %v2132
    %v2134 = vsub.f32 1.0, %v2129
    %v2135 = vmul.f32 %v2134, %v2133
    %v2136 = vmul.f32 %v2129, %v2046
    %v2137 = vadd.f32 %v2135, %v2136
    %2138 = vst [vmem:[%s1632] sm:$0xff] %v2137
    %2139 = vst [vmem:[%s919] sm:$0xff] %v2137
    %v2140 = vld [vmem:[%s1632] sm:$0xff]
    %v2141 = vld [vmem:[%s922] sm:$0xff]
    %v2142 = vld [vmem:[%s922 + $0x8] sm:$0xff]
    %v2143 = vld [vmem:[%s922 + $0x10] sm:$0xff]
    %v2144 = vpack.c.bf16 %v2140, %v2140
    %2145 = vmatpush.bf16.msra.mxu0 %v1739
    %2146 = vmatpush.bf16.msra.mxu0 %v1736
    %2147 = vmatpush.bf16.msra.mxu0 %v1733
    %2148 = vmatpush.bf16.msra.mxu0 %v1730
    %2149 = vmatpush.bf16.msra.mxu0 %v1727
    %2150 = vmatpush.bf16.msra.mxu0 %v1724
    %2151 = vmatpush.bf16.msra.mxu0 %v1721
    %2152 = vmatpush.bf16.msra.mxu0 %v1718
    %2153 = vmatmul.bf16.gmra.mxu0 %v2144
    %v2154 = vpop.f32.mrf.mxu0
    %v2155 = vadd.f32 0.0, %v2154
    %v2156 = vpop.f32.mrf.mxu0
    %2157 = vdwg.mxu0
    %2158 = vmatpush.bf16.msra.mxu0 %v1740
    %2159 = vmatpush.bf16.msra.mxu0 %v1737
    %2160 = vmatpush.bf16.msra.mxu0 %v1734
    %2161 = vmatpush.bf16.msra.mxu0 %v1731
    %2162 = vmatpush.bf16.msra.mxu0 %v1728
    %2163 = vmatpush.bf16.msra.mxu0 %v1725
    %2164 = vmatpush.bf16.msra.mxu0 %v1722
    %2165 = vmatpush.bf16.msra.mxu0 %v1719
    %2166 = vmatmul.bf16.gmra.mxu0 %v2144
    %v2167 = vpop.f32.mrf.mxu0
    %v2168 = vadd.f32 0.0, %v2167
    %v2169 = vpop.f32.mrf.mxu0
    %2170 = vdwg.mxu0
    %2171 = vmatpush.bf16.msra.mxu0 %v1741
    %2172 = vmatpush.bf16.msra.mxu0 %v1738
    %2173 = vmatpush.bf16.msra.mxu0 %v1735
    %2174 = vmatpush.bf16.msra.mxu0 %v1732
    %2175 = vmatpush.bf16.msra.mxu0 %v1729
    %2176 = vmatpush.bf16.msra.mxu0 %v1726
    %2177 = vmatpush.bf16.msra.mxu0 %v1723
    %2178 = vmatpush.bf16.msra.mxu0 %v1720
    %2179 = vmatmul.bf16.gmra.mxu0 %v2144
    %v2180 = vpop.f32.mrf.mxu0
    %v2181 = vadd.f32 0.0, %v2180
    %v2182 = vpop.f32.mrf.mxu0
    %2183 = vdwg.mxu0
    %v2184 = vadd.f32 %v2141, %v2155
    %v2185 = vxor.u32 %v2184, 2147483648
    %v2186 = vmul.f32 %v2185, 1.442695
    %v2187 = vpow.pop %v2186
    %v2188 = vadd.f32 %v2187, 1.0
    %v2189 = vrcp.pop %v2188
    %v2190 = vmul.f32 %v2188, %v2189
    %v2191 = vsub.f32 1.0, %v2190
    %v2192 = vmul.f32 %v2189, %v2191
    %v2193 = vadd.f32 %v2189, %v2192
    %vm2194 = vweird.f32 %v2188
    %vm2195 = vweird.f32 %v2189
    %vm2196 = vmor %vm2194, %vm2195
    %v2197 = vsel %vm2196, %v2189, %v2193
    %v2198 = vand.u32 2147483647, %v2188
    %vm2199 = vcmp.eq.f32.partialorder %v2198, 8.507059e+37
    %v2200 = vand.u32 %v2188, 2147483648
    %v2201 = vor.u32 1.1754944e-38, %v2200
    %v2202 = vsel %vm2199, %v2201, %v2197
    %v2203 = vmul.f32 1.0, %v2202
    %v2204 = vadd.f32 %v2142, %v2168
    %v2205 = vxor.u32 %v2204, 2147483648
    %v2206 = vmul.f32 %v2205, 1.442695
    %v2207 = vpow.pop %v2206
    %v2208 = vadd.f32 %v2207, 1.0
    %v2209 = vrcp.pop %v2208
    %v2210 = vmul.f32 %v2208, %v2209
    %v2211 = vsub.f32 1.0, %v2210
    %v2212 = vmul.f32 %v2209, %v2211
    %v2213 = vadd.f32 %v2209, %v2212
    %vm2214 = vweird.f32 %v2208
    %vm2215 = vweird.f32 %v2209
    %vm2216 = vmor %vm2214, %vm2215
    %v2217 = vsel %vm2216, %v2209, %v2213
    %v2218 = vand.u32 2147483647, %v2208
    %vm2219 = vcmp.eq.f32.partialorder %v2218, 8.507059e+37
    %v2220 = vand.u32 %v2208, 2147483648
    %v2221 = vor.u32 1.1754944e-38, %v2220
    %v2222 = vsel %vm2219, %v2221, %v2217
    %v2223 = vmul.f32 1.0, %v2222
    %v2224 = vadd.f32 %v2181, %v1846
    %v2225 = vmul.f32 %v2203, %v2224
    %v2226 = vadd.f32 %v2143, %v2225
    %v2227 = vtanh.pop %v2226
    %v2228 = vsub.f32 1.0, %v2223
    %v2229 = vmul.f32 %v2228, %v2227
    %v2230 = vmul.f32 %v2223, %v2140
    %v2231 = vadd.f32 %v2229, %v2230
    %2232 = vst [vmem:[%s1632] sm:$0xff] %v2231
    %2233 = vst [vmem:[%s1015] sm:$0xff] %v2231
    %v2234 = vld [vmem:[%s1632] sm:$0xff]
    %v2235 = vld [vmem:[%s1018] sm:$0xff]
    %v2236 = vld [vmem:[%s1018 + $0x8] sm:$0xff]
    %v2237 = vld [vmem:[%s1018 + $0x10] sm:$0xff]
    %v2238 = vpack.c.bf16 %v2234, %v2234
    %2239 = vmatpush.bf16.msra.mxu0 %v1739
    %2240 = vmatpush.bf16.msra.mxu0 %v1736
    %2241 = vmatpush.bf16.msra.mxu0 %v1733
    %2242 = vmatpush.bf16.msra.mxu0 %v1730
    %2243 = vmatpush.bf16.msra.mxu0 %v1727
    %2244 = vmatpush.bf16.msra.mxu0 %v1724
    %2245 = vmatpush.bf16.msra.mxu0 %v1721
    %2246 = vmatpush.bf16.msra.mxu0 %v1718
    %2247 = vmatmul.bf16.gmra.mxu0 %v2238
    %v2248 = vpop.f32.mrf.mxu0
    %v2249 = vadd.f32 0.0, %v2248
    %v2250 = vpop.f32.mrf.mxu0
    %2251 = vdwg.mxu0
    %2252 = vmatpush.bf16.msra.mxu0 %v1740
    %2253 = vmatpush.bf16.msra.mxu0 %v1737
    %2254 = vmatpush.bf16.msra.mxu0 %v1734
    %2255 = vmatpush.bf16.msra.mxu0 %v1731
    %2256 = vmatpush.bf16.msra.mxu0 %v1728
    %2257 = vmatpush.bf16.msra.mxu0 %v1725
    %2258 = vmatpush.bf16.msra.mxu0 %v1722
    %2259 = vmatpush.bf16.msra.mxu0 %v1719
    %2260 = vmatmul.bf16.gmra.mxu0 %v2238
    %v2261 = vpop.f32.mrf.mxu0
    %v2262 = vadd.f32 0.0, %v2261
    %v2263 = vpop.f32.mrf.mxu0
    %2264 = vdwg.mxu0
    %2265 = vmatpush.bf16.msra.mxu0 %v1741
    %2266 = vmatpush.bf16.msra.mxu0 %v1738
    %2267 = vmatpush.bf16.msra.mxu0 %v1735
    %2268 = vmatpush.bf16.msra.mxu0 %v1732
    %2269 = vmatpush.bf16.msra.mxu0 %v1729
    %2270 = vmatpush.bf16.msra.mxu0 %v1726
    %2271 = vmatpush.bf16.msra.mxu0 %v1723
    %2272 = vmatpush.bf16.msra.mxu0 %v1720
    %2273 = vmatmul.bf16.gmra.mxu0 %v2238
    %v2274 = vpop.f32.mrf.mxu0
    %v2275 = vadd.f32 0.0, %v2274
    %v2276 = vpop.f32.mrf.mxu0
    %2277 = vdwg.mxu0
    %v2278 = vadd.f32 %v2235, %v2249
    %v2279 = vxor.u32 %v2278, 2147483648
    %v2280 = vmul.f32 %v2279, 1.442695
    %v2281 = vpow.pop %v2280
    %v2282 = vadd.f32 %v2281, 1.0
    %v2283 = vrcp.pop %v2282
    %v2284 = vmul.f32 %v2282, %v2283
    %v2285 = vsub.f32 1.0, %v2284
    %v2286 = vmul.f32 %v2283, %v2285
    %v2287 = vadd.f32 %v2283, %v2286
    %vm2288 = vweird.f32 %v2282
    %vm2289 = vweird.f32 %v2283
    %vm2290 = vmor %vm2288, %vm2289
    %v2291 = vsel %vm2290, %v2283, %v2287
    %v2292 = vand.u32 2147483647, %v2282
    %vm2293 = vcmp.eq.f32.partialorder %v2292, 8.507059e+37
    %v2294 = vand.u32 %v2282, 2147483648
    %v2295 = vor.u32 1.1754944e-38, %v2294
    %v2296 = vsel %vm2293, %v2295, %v2291
    %v2297 = vmul.f32 1.0, %v2296
    %v2298 = vadd.f32 %v2236, %v2262
    %v2299 = vxor.u32 %v2298, 2147483648
    %v2300 = vmul.f32 %v2299, 1.442695
    %v2301 = vpow.pop %v2300
    %v2302 = vadd.f32 %v2301, 1.0
    %v2303 = vrcp.pop %v2302
    %v2304 = vmul.f32 %v2302, %v2303
    %v2305 = vsub.f32 1.0, %v2304
    %v2306 = vmul.f32 %v2303, %v2305
    %v2307 = vadd.f32 %v2303, %v2306
    %vm2308 = vweird.f32 %v2302
    %vm2309 = vweird.f32 %v2303
    %vm2310 = vmor %vm2308, %vm2309
    %v2311 = vsel %vm2310, %v2303, %v2307
    %v2312 = vand.u32 2147483647, %v2302
    %vm2313 = vcmp.eq.f32.partialorder %v2312, 8.507059e+37
    %v2314 = vand.u32 %v2302, 2147483648
    %v2315 = vor.u32 1.1754944e-38, %v2314
    %v2316 = vsel %vm2313, %v2315, %v2311
    %v2317 = vmul.f32 1.0, %v2316
    %v2318 = vadd.f32 %v2275, %v1846
    %v2319 = vmul.f32 %v2297, %v2318
    %v2320 = vadd.f32 %v2237, %v2319
    %v2321 = vtanh.pop %v2320
    %v2322 = vsub.f32 1.0, %v2317
    %v2323 = vmul.f32 %v2322, %v2321
    %v2324 = vmul.f32 %v2317, %v2234
    %v2325 = vadd.f32 %v2323, %v2324
    %2326 = vst [vmem:[%s1632] sm:$0xff] %v2325
    %2327 = vst [vmem:[%s1111] sm:$0xff] %v2325
    %v2328 = vld [vmem:[%s1632] sm:$0xff]
    %v2329 = vld [vmem:[%s1114] sm:$0xff]
    %v2330 = vld [vmem:[%s1114 + $0x8] sm:$0xff]
    %v2331 = vld [vmem:[%s1114 + $0x10] sm:$0xff]
    %v2332 = vpack.c.bf16 %v2328, %v2328
    %2333 = vmatpush.bf16.msra.mxu0 %v1739
    %2334 = vmatpush.bf16.msra.mxu0 %v1736
    %2335 = vmatpush.bf16.msra.mxu0 %v1733
    %2336 = vmatpush.bf16.msra.mxu0 %v1730
    %2337 = vmatpush.bf16.msra.mxu0 %v1727
    %2338 = vmatpush.bf16.msra.mxu0 %v1724
    %2339 = vmatpush.bf16.msra.mxu0 %v1721
    %2340 = vmatpush.bf16.msra.mxu0 %v1718
    %2341 = vmatmul.bf16.gmra.mxu0 %v2332
    %v2342 = vpop.f32.mrf.mxu0
    %v2343 = vadd.f32 0.0, %v2342
    %v2344 = vpop.f32.mrf.mxu0
    %2345 = vdwg.mxu0
    %2346 = vmatpush.bf16.msra.mxu0 %v1740
    %2347 = vmatpush.bf16.msra.mxu0 %v1737
    %2348 = vmatpush.bf16.msra.mxu0 %v1734
    %2349 = vmatpush.bf16.msra.mxu0 %v1731
    %2350 = vmatpush.bf16.msra.mxu0 %v1728
    %2351 = vmatpush.bf16.msra.mxu0 %v1725
    %2352 = vmatpush.bf16.msra.mxu0 %v1722
    %2353 = vmatpush.bf16.msra.mxu0 %v1719
    %2354 = vmatmul.bf16.gmra.mxu0 %v2332
    %v2355 = vpop.f32.mrf.mxu0
    %v2356 = vadd.f32 0.0, %v2355
    %v2357 = vpop.f32.mrf.mxu0
    %2358 = vdwg.mxu0
    %2359 = vmatpush.bf16.msra.mxu0 %v1741
    %2360 = vmatpush.bf16.msra.mxu0 %v1738
    %2361 = vmatpush.bf16.msra.mxu0 %v1735
    %2362 = vmatpush.bf16.msra.mxu0 %v1732
    %2363 = vmatpush.bf16.msra.mxu0 %v1729
    %2364 = vmatpush.bf16.msra.mxu0 %v1726
    %2365 = vmatpush.bf16.msra.mxu0 %v1723
    %2366 = vmatpush.bf16.msra.mxu0 %v1720
    %2367 = vmatmul.bf16.gmra.mxu0 %v2332
    %v2368 = vpop.f32.mrf.mxu0
    %v2369 = vadd.f32 0.0, %v2368
    %v2370 = vpop.f32.mrf.mxu0
    %2371 = vdwg.mxu0
    %v2372 = vadd.f32 %v2329, %v2343
    %v2373 = vxor.u32 %v2372, 2147483648
    %v2374 = vmul.f32 %v2373, 1.442695
    %v2375 = vpow.pop %v2374
    %v2376 = vadd.f32 %v2375, 1.0
    %v2377 = vrcp.pop %v2376
    %v2378 = vmul.f32 %v2376, %v2377
    %v2379 = vsub.f32 1.0, %v2378
    %v2380 = vmul.f32 %v2377, %v2379
    %v2381 = vadd.f32 %v2377, %v2380
    %vm2382 = vweird.f32 %v2376
    %vm2383 = vweird.f32 %v2377
    %vm2384 = vmor %vm2382, %vm2383
    %v2385 = vsel %vm2384, %v2377, %v2381
    %v2386 = vand.u32 2147483647, %v2376
    %vm2387 = vcmp.eq.f32.partialorder %v2386, 8.507059e+37
    %v2388 = vand.u32 %v2376, 2147483648
    %v2389 = vor.u32 1.1754944e-38, %v2388
    %v2390 = vsel %vm2387, %v2389, %v2385
    %v2391 = vmul.f32 1.0, %v2390
    %v2392 = vadd.f32 %v2330, %v2356
    %v2393 = vxor.u32 %v2392, 2147483648
    %v2394 = vmul.f32 %v2393, 1.442695
    %v2395 = vpow.pop %v2394
    %v2396 = vadd.f32 %v2395, 1.0
    %v2397 = vrcp.pop %v2396
    %v2398 = vmul.f32 %v2396, %v2397
    %v2399 = vsub.f32 1.0, %v2398
    %v2400 = vmul.f32 %v2397, %v2399
    %v2401 = vadd.f32 %v2397, %v2400
    %vm2402 = vweird.f32 %v2396
    %vm2403 = vweird.f32 %v2397
    %vm2404 = vmor %vm2402, %vm2403
    %v2405 = vsel %vm2404, %v2397, %v2401
    %v2406 = vand.u32 2147483647, %v2396
    %vm2407 = vcmp.eq.f32.partialorder %v2406, 8.507059e+37
    %v2408 = vand.u32 %v2396, 2147483648
    %v2409 = vor.u32 1.1754944e-38, %v2408
    %v2410 = vsel %vm2407, %v2409, %v2405
    %v2411 = vmul.f32 1.0, %v2410
    %v2412 = vadd.f32 %v2369, %v1846
    %v2413 = vmul.f32 %v2391, %v2412
    %v2414 = vadd.f32 %v2331, %v2413
    %v2415 = vtanh.pop %v2414
    %v2416 = vsub.f32 1.0, %v2411
    %v2417 = vmul.f32 %v2416, %v2415
    %v2418 = vmul.f32 %v2411, %v2328
    %v2419 = vadd.f32 %v2417, %v2418
    %2420 = vst [vmem:[%s1632] sm:$0xff] %v2419
    %2421 = vst [vmem:[%s1207] sm:$0xff] %v2419
    %v2422 = vld [vmem:[%s1632] sm:$0xff]
    %v2423 = vld [vmem:[%s1210] sm:$0xff]
    %v2424 = vld [vmem:[%s1210 + $0x8] sm:$0xff]
    %v2425 = vld [vmem:[%s1210 + $0x10] sm:$0xff]
    %v2426 = vpack.c.bf16 %v2422, %v2422
    %2427 = vmatpush.bf16.msra.mxu0 %v1739
    %2428 = vmatpush.bf16.msra.mxu0 %v1736
    %2429 = vmatpush.bf16.msra.mxu0 %v1733
    %2430 = vmatpush.bf16.msra.mxu0 %v1730
    %2431 = vmatpush.bf16.msra.mxu0 %v1727
    %2432 = vmatpush.bf16.msra.mxu0 %v1724
    %2433 = vmatpush.bf16.msra.mxu0 %v1721
    %2434 = vmatpush.bf16.msra.mxu0 %v1718
    %2435 = vmatmul.bf16.gmra.mxu0 %v2426
    %v2436 = vpop.f32.mrf.mxu0
    %v2437 = vadd.f32 0.0, %v2436
    %v2438 = vpop.f32.mrf.mxu0
    %2439 = vdwg.mxu0
    %2440 = vmatpush.bf16.msra.mxu0 %v1740
    %2441 = vmatpush.bf16.msra.mxu0 %v1737
    %2442 = vmatpush.bf16.msra.mxu0 %v1734
    %2443 = vmatpush.bf16.msra.mxu0 %v1731
    %2444 = vmatpush.bf16.msra.mxu0 %v1728
    %2445 = vmatpush.bf16.msra.mxu0 %v1725
    %2446 = vmatpush.bf16.msra.mxu0 %v1722
    %2447 = vmatpush.bf16.msra.mxu0 %v1719
    %2448 = vmatmul.bf16.gmra.mxu0 %v2426
    %v2449 = vpop.f32.mrf.mxu0
    %v2450 = vadd.f32 0.0, %v2449
    %v2451 = vpop.f32.mrf.mxu0
    %2452 = vdwg.mxu0
    %2453 = vmatpush.bf16.msra.mxu0 %v1741
    %2454 = vmatpush.bf16.msra.mxu0 %v1738
    %2455 = vmatpush.bf16.msra.mxu0 %v1735
    %2456 = vmatpush.bf16.msra.mxu0 %v1732
    %2457 = vmatpush.bf16.msra.mxu0 %v1729
    %2458 = vmatpush.bf16.msra.mxu0 %v1726
    %2459 = vmatpush.bf16.msra.mxu0 %v1723
    %2460 = vmatpush.bf16.msra.mxu0 %v1720
    %2461 = vmatmul.bf16.gmra.mxu0 %v2426
    %v2462 = vpop.f32.mrf.mxu0
    %v2463 = vadd.f32 0.0, %v2462
    %v2464 = vpop.f32.mrf.mxu0
    %2465 = vdwg.mxu0
    %v2466 = vadd.f32 %v2423, %v2437
    %v2467 = vxor.u32 %v2466, 2147483648
    %v2468 = vmul.f32 %v2467, 1.442695
    %v2469 = vpow.pop %v2468
    %v2470 = vadd.f32 %v2469, 1.0
    %v2471 = vrcp.pop %v2470
    %v2472 = vmul.f32 %v2470, %v2471
    %v2473 = vsub.f32 1.0, %v2472
    %v2474 = vmul.f32 %v2471, %v2473
    %v2475 = vadd.f32 %v2471, %v2474
    %vm2476 = vweird.f32 %v2470
    %vm2477 = vweird.f32 %v2471
    %vm2478 = vmor %vm2476, %vm2477
    %v2479 = vsel %vm2478, %v2471, %v2475
    %v2480 = vand.u32 2147483647, %v2470
    %vm2481 = vcmp.eq.f32.partialorder %v2480, 8.507059e+37
    %v2482 = vand.u32 %v2470, 2147483648
    %v2483 = vor.u32 1.1754944e-38, %v2482
    %v2484 = vsel %vm2481, %v2483, %v2479
    %v2485 = vmul.f32 1.0, %v2484
    %v2486 = vadd.f32 %v2424, %v2450
    %v2487 = vxor.u32 %v2486, 2147483648
    %v2488 = vmul.f32 %v2487, 1.442695
    %v2489 = vpow.pop %v2488
    %v2490 = vadd.f32 %v2489, 1.0
    %v2491 = vrcp.pop %v2490
    %v2492 = vmul.f32 %v2490, %v2491
    %v2493 = vsub.f32 1.0, %v2492
    %v2494 = vmul.f32 %v2491, %v2493
    %v2495 = vadd.f32 %v2491, %v2494
    %vm2496 = vweird.f32 %v2490
    %vm2497 = vweird.f32 %v2491
    %vm2498 = vmor %vm2496, %vm2497
    %v2499 = vsel %vm2498, %v2491, %v2495
    %v2500 = vand.u32 2147483647, %v2490
    %vm2501 = vcmp.eq.f32.partialorder %v2500, 8.507059e+37
    %v2502 = vand.u32 %v2490, 2147483648
    %v2503 = vor.u32 1.1754944e-38, %v2502
    %v2504 = vsel %vm2501, %v2503, %v2499
    %v2505 = vmul.f32 1.0, %v2504
    %v2506 = vadd.f32 %v2463, %v1846
    %v2507 = vmul.f32 %v2485, %v2506
    %v2508 = vadd.f32 %v2425, %v2507
    %v2509 = vtanh.pop %v2508
    %v2510 = vsub.f32 1.0, %v2505
    %v2511 = vmul.f32 %v2510, %v2509
    %v2512 = vmul.f32 %v2505, %v2422
    %v2513 = vadd.f32 %v2511, %v2512
    %2514 = vst [vmem:[%s1632] sm:$0xff] %v2513
    %2515 = vst [vmem:[%s1303] sm:$0xff] %v2513
    // Predicated region
    $region50: #{time_gan_module_forward.1} parent=1 // pred_check
      %p2516 = pneg %p78
    $region51: #{time_gan_module_forward.1} parent=1 // pred_check_branch
      %2518 = sbr.rel (%p2516) target = $region53
    $region52: #{time_gan_module_forward.1} parent=1 // pred_region
      %v2519 = vld [vmem:[#allocation2] sm:$0xff]
      %v2520 = vld [vmem:[#allocation2 + $0x8] sm:$0xff]
      %2521 = vst [vmem:[%s9] sm:$0xff] %v2519
      %2522 = vst [vmem:[%s9 + $0x8] sm:$0xff] %v2520
    $region53: #{time_gan_module_forward.1} parent=1 // pred_fallthru
      _
    %v2523 = vld [vmem:[#allocation4] sm:$0xff]
    %v2524 = vld [vmem:[#allocation4 + $0x8] sm:$0xff]
    %v2525 = vld [vmem:[#allocation4 + $0x10] sm:$0xff]
    %v2526 = vld [vmem:[#allocation4 + $0x18] sm:$0xff]
    %v2527 = vld [vmem:[#allocation4 + $0x20] sm:$0xff]
    %v2528 = vld [vmem:[#allocation4 + $0x28] sm:$0xff]
    %v2529 = vld [vmem:[#allocation4 + $0x30] sm:$0xff]
    %v2530 = vld [vmem:[#allocation4 + $0x38] sm:$0xff]
    %v2531 = vpack.c.bf16 %v2524, %v2523
    %v2532 = vpack.c.bf16 %v2526, %v2525
    %v2533 = vpack.c.bf16 %v2528, %v2527
    %v2534 = vpack.c.bf16 %v2530, %v2529
    %v2535 = vld [vmem:[%s6] sm:$0xf]
    %v2536 = vld [vmem:[%s6 + $0x4] sm:$0xf]
    %v2537 = vld [vmem:[%s6 + $0x8] sm:$0xf]
    %v2538 = vld [vmem:[%s6 + $0xc] sm:$0xf]
    %v2539 = vld [vmem:[%s6 + $0x10] sm:$0xf]
    %v2540 = vld [vmem:[%s6 + $0x14] sm:$0xf]
    %v2541 = vld [vmem:[%s6 + $0x18] sm:$0xf]
    %v2542 = vld [vmem:[%s6 + $0x1c] sm:$0xf]
    %v2543 = vld [vmem:[%s6 + $0x20] sm:$0xf]
    %v2544 = vld [vmem:[%s6 + $0x24] sm:$0xf]
    %v2545 = vld [vmem:[%s6 + $0x28] sm:$0xf]
    %v2546 = vld [vmem:[%s6 + $0x2c] sm:$0xf]
    %v2547 = vld [vmem:[%s6 + $0x30] sm:$0xf]
    %v2548 = vld [vmem:[%s6 + $0x34] sm:$0xf]
    %v2549 = vld [vmem:[%s6 + $0x38] sm:$0xf]
    %v2550 = vld [vmem:[%s6 + $0x3c] sm:$0xf]
    %v2551 = vld [vmem:[%s7] sm:$0x1]
    %v2553 = vperm.slane %v2551, 0
    %v2571 = vunpack.c.l.b16 %v2535
    %v2572 = vunpack.c.l.b16 %v2536
    %v2573 = vunpack.c.l.b16 %v2537
    %v2574 = vunpack.c.l.b16 %v2538
    %v2575 = vunpack.c.l.b16 %v2539
    %v2576 = vunpack.c.l.b16 %v2540
    %v2577 = vunpack.c.l.b16 %v2541
    %v2578 = vunpack.c.l.b16 %v2542
    %v2579 = vunpack.c.l.b16 %v2543
    %v2580 = vunpack.c.l.b16 %v2544
    %v2581 = vunpack.c.l.b16 %v2545
    %v2582 = vunpack.c.l.b16 %v2546
    %v2583 = vunpack.c.l.b16 %v2547
    %v2584 = vunpack.c.l.b16 %v2548
    %v2585 = vunpack.c.l.b16 %v2549
    %v2586 = vunpack.c.l.b16 %v2550
    %v2587 = vpack.c.b16 %v2572, %v2571
    %v2588 = vpack.c.b16 %v2574, %v2573
    %v2589 = vpack.c.b16 %v2576, %v2575
    %v2590 = vpack.c.b16 %v2578, %v2577
    %v2591 = vpack.c.b16 %v2580, %v2579
    %v2592 = vpack.c.b16 %v2582, %v2581
    %v2593 = vpack.c.b16 %v2584, %v2583
    %v2594 = vpack.c.b16 %v2586, %v2585
    %2603 = vmatpush.bf16.msra.mxu0 %v2594
    %2604 = vmatpush.bf16.msra.mxu0 %v2593
    %2605 = vmatpush.bf16.msra.mxu0 %v2592
    %2606 = vmatpush.bf16.msra.mxu0 %v2591
    %2607 = vmatpush.bf16.msra.mxu0 %v2590
    %2608 = vmatpush.bf16.msra.mxu0 %v2589
    %2609 = vmatpush.bf16.msra.mxu0 %v2588
    %2610 = vmatpush.bf16.msra.mxu0 %v2587
    %2611 = vmatmul.bf16.gmra.mxu0 %v2531
    %v2612 = vpop.f32.mrf.mxu0
    %v2613 = vadd.f32 %v2553, %v2612
    %v2614 = vpop.f32.mrf.mxu0
    %v2615 = vadd.f32 %v2553, %v2614
    %2616 = vmatmul.bf16.gmra.mxu0 %v2532
    %v2617 = vpop.f32.mrf.mxu0
    %v2618 = vadd.f32 %v2553, %v2617
    %v2619 = vpop.f32.mrf.mxu0
    %v2620 = vadd.f32 %v2553, %v2619
    %2621 = vmatmul.bf16.gmra.mxu0 %v2533
    %v2622 = vpop.f32.mrf.mxu0
    %v2623 = vadd.f32 %v2553, %v2622
    %v2624 = vpop.f32.mrf.mxu0
    %v2625 = vadd.f32 %v2553, %v2624
    %2626 = vmatmul.bf16.gmra.mxu0 %v2534
    %v2627 = vpop.f32.mrf.mxu0
    %v2628 = vadd.f32 %v2553, %v2627
    %v2629 = vpop.f32.mrf.mxu0
    %v2630 = vadd.f32 %v2553, %v2629
    %2631 = vdwg.mxu0
    %v2632 = vxor.u32 %v2613, 2147483648
    %v2633 = vxor.u32 %v2615, 2147483648
    %v2634 = vxor.u32 %v2618, 2147483648
    %v2635 = vxor.u32 %v2620, 2147483648
    %v2636 = vxor.u32 %v2623, 2147483648
    %v2637 = vxor.u32 %v2625, 2147483648
    %v2638 = vxor.u32 %v2628, 2147483648
    %v2639 = vxor.u32 %v2630, 2147483648
    %v2640 = vmul.f32 %v2632, 1.442695
    %v2641 = vpow.pop %v2640
    %v2642 = vmul.f32 %v2633, 1.442695
    %v2643 = vpow.pop %v2642
    %v2644 = vmul.f32 %v2634, 1.442695
    %v2645 = vpow.pop %v2644
    %v2646 = vmul.f32 %v2635, 1.442695
    %v2647 = vpow.pop %v2646
    %v2648 = vmul.f32 %v2636, 1.442695
    %v2649 = vpow.pop %v2648
    %v2650 = vmul.f32 %v2637, 1.442695
    %v2651 = vpow.pop %v2650
    %v2652 = vmul.f32 %v2638, 1.442695
    %v2653 = vpow.pop %v2652
    %v2654 = vmul.f32 %v2639, 1.442695
    %v2655 = vpow.pop %v2654
    %v2656 = vadd.f32 %v2641, 1.0
    %v2657 = vadd.f32 %v2643, 1.0
    %v2658 = vadd.f32 %v2645, 1.0
    %v2659 = vadd.f32 %v2647, 1.0
    %v2660 = vadd.f32 %v2649, 1.0
    %v2661 = vadd.f32 %v2651, 1.0
    %v2662 = vadd.f32 %v2653, 1.0
    %v2663 = vadd.f32 %v2655, 1.0
    %v2664 = vrcp.pop %v2656
    %v2665 = vmul.f32 %v2656, %v2664
    %v2666 = vsub.f32 1.0, %v2665
    %v2667 = vmul.f32 %v2664, %v2666
    %v2668 = vadd.f32 %v2664, %v2667
    %vm2669 = vweird.f32 %v2656
    %vm2670 = vweird.f32 %v2664
    %vm2671 = vmor %vm2669, %vm2670
    %v2672 = vsel %vm2671, %v2664, %v2668
    %v2673 = vand.u32 2147483647, %v2656
    %vm2674 = vcmp.eq.f32.partialorder %v2673, 8.507059e+37
    %v2675 = vand.u32 %v2656, 2147483648
    %v2676 = vor.u32 1.1754944e-38, %v2675
    %v2677 = vsel %vm2674, %v2676, %v2672
    %v2678 = vmul.f32 1.0, %v2677
    %v2679 = vrcp.pop %v2657
    %v2680 = vmul.f32 %v2657, %v2679
    %v2681 = vsub.f32 1.0, %v2680
    %v2682 = vmul.f32 %v2679, %v2681
    %v2683 = vadd.f32 %v2679, %v2682
    %vm2684 = vweird.f32 %v2657
    %vm2685 = vweird.f32 %v2679
    %vm2686 = vmor %vm2684, %vm2685
    %v2687 = vsel %vm2686, %v2679, %v2683
    %v2688 = vand.u32 2147483647, %v2657
    %vm2689 = vcmp.eq.f32.partialorder %v2688, 8.507059e+37
    %v2690 = vand.u32 %v2657, 2147483648
    %v2691 = vor.u32 1.1754944e-38, %v2690
    %v2692 = vsel %vm2689, %v2691, %v2687
    %v2693 = vmul.f32 1.0, %v2692
    %v2694 = vrcp.pop %v2658
    %v2695 = vmul.f32 %v2658, %v2694
    %v2696 = vsub.f32 1.0, %v2695
    %v2697 = vmul.f32 %v2694, %v2696
    %v2698 = vadd.f32 %v2694, %v2697
    %vm2699 = vweird.f32 %v2658
    %vm2700 = vweird.f32 %v2694
    %vm2701 = vmor %vm2699, %vm2700
    %v2702 = vsel %vm2701, %v2694, %v2698
    %v2703 = vand.u32 2147483647, %v2658
    %vm2704 = vcmp.eq.f32.partialorder %v2703, 8.507059e+37
    %v2705 = vand.u32 %v2658, 2147483648
    %v2706 = vor.u32 1.1754944e-38, %v2705
    %v2707 = vsel %vm2704, %v2706, %v2702
    %v2708 = vmul.f32 1.0, %v2707
    %v2709 = vrcp.pop %v2659
    %v2710 = vmul.f32 %v2659, %v2709
    %v2711 = vsub.f32 1.0, %v2710
    %v2712 = vmul.f32 %v2709, %v2711
    %v2713 = vadd.f32 %v2709, %v2712
    %vm2714 = vweird.f32 %v2659
    %vm2715 = vweird.f32 %v2709
    %vm2716 = vmor %vm2714, %vm2715
    %v2717 = vsel %vm2716, %v2709, %v2713
    %v2718 = vand.u32 2147483647, %v2659
    %vm2719 = vcmp.eq.f32.partialorder %v2718, 8.507059e+37
    %v2720 = vand.u32 %v2659, 2147483648
    %v2721 = vor.u32 1.1754944e-38, %v2720
    %v2722 = vsel %vm2719, %v2721, %v2717
    %v2723 = vmul.f32 1.0, %v2722
    %v2724 = vrcp.pop %v2660
    %v2725 = vmul.f32 %v2660, %v2724
    %v2726 = vsub.f32 1.0, %v2725
    %v2727 = vmul.f32 %v2724, %v2726
    %v2728 = vadd.f32 %v2724, %v2727
    %vm2729 = vweird.f32 %v2660
    %vm2730 = vweird.f32 %v2724
    %vm2731 = vmor %vm2729, %vm2730
    %v2732 = vsel %vm2731, %v2724, %v2728
    %v2733 = vand.u32 2147483647, %v2660
    %vm2734 = vcmp.eq.f32.partialorder %v2733, 8.507059e+37
    %v2735 = vand.u32 %v2660, 2147483648
    %v2736 = vor.u32 1.1754944e-38, %v2735
    %v2737 = vsel %vm2734, %v2736, %v2732
    %v2738 = vmul.f32 1.0, %v2737
    %v2739 = vrcp.pop %v2661
    %v2740 = vmul.f32 %v2661, %v2739
    %v2741 = vsub.f32 1.0, %v2740
    %v2742 = vmul.f32 %v2739, %v2741
    %v2743 = vadd.f32 %v2739, %v2742
    %vm2744 = vweird.f32 %v2661
    %vm2745 = vweird.f32 %v2739
    %vm2746 = vmor %vm2744, %vm2745
    %v2747 = vsel %vm2746, %v2739, %v2743
    %v2748 = vand.u32 2147483647, %v2661
    %vm2749 = vcmp.eq.f32.partialorder %v2748, 8.507059e+37
    %v2750 = vand.u32 %v2661, 2147483648
    %v2751 = vor.u32 1.1754944e-38, %v2750
    %v2752 = vsel %vm2749, %v2751, %v2747
    %v2753 = vmul.f32 1.0, %v2752
    %v2754 = vrcp.pop %v2662
    %v2755 = vmul.f32 %v2662, %v2754
    %v2756 = vsub.f32 1.0, %v2755
    %v2757 = vmul.f32 %v2754, %v2756
    %v2758 = vadd.f32 %v2754, %v2757
    %vm2759 = vweird.f32 %v2662
    %vm2760 = vweird.f32 %v2754
    %vm2761 = vmor %vm2759, %vm2760
    %v2762 = vsel %vm2761, %v2754, %v2758
    %v2763 = vand.u32 2147483647, %v2662
    %vm2764 = vcmp.eq.f32.partialorder %v2763, 8.507059e+37
    %v2765 = vand.u32 %v2662, 2147483648
    %v2766 = vor.u32 1.1754944e-38, %v2765
    %v2767 = vsel %vm2764, %v2766, %v2762
    %v2768 = vmul.f32 1.0, %v2767
    %v2769 = vrcp.pop %v2663
    %v2770 = vmul.f32 %v2663, %v2769
    %v2771 = vsub.f32 1.0, %v2770
    %v2772 = vmul.f32 %v2769, %v2771
    %v2773 = vadd.f32 %v2769, %v2772
    %vm2774 = vweird.f32 %v2663
    %vm2775 = vweird.f32 %v2769
    %vm2776 = vmor %vm2774, %vm2775
    %v2777 = vsel %vm2776, %v2769, %v2773
    %v2778 = vand.u32 2147483647, %v2663
    %vm2779 = vcmp.eq.f32.partialorder %v2778, 8.507059e+37
    %v2780 = vand.u32 %v2663, 2147483648
    %v2781 = vor.u32 1.1754944e-38, %v2780
    %v2782 = vsel %vm2779, %v2781, %v2777
    %v2783 = vmul.f32 1.0, %v2782
    %2784 = vst [vmem:[%s8] sm:$0xff] %v2678
    %2785 = vst [vmem:[%s8 + $0x8] sm:$0xff] %v2693
    %2786 = vst [vmem:[%s8 + $0x10] sm:$0xff] %v2708
    %2787 = vst [vmem:[%s8 + $0x18] sm:$0xff] %v2723
    %2788 = vst [vmem:[%s8 + $0x20] sm:$0xff] %v2738
    %2789 = vst [vmem:[%s8 + $0x28] sm:$0xff] %v2753
    %2790 = vst [vmem:[%s8 + $0x30] sm:$0xff] %v2768
    %2791 = vst [vmem:[%s8 + $0x38] sm:$0xff] %v2783
    // Predicated region
    $region54: #{time_gan_module_forward.1} parent=1 // pred_check
      _
    $region55: #{time_gan_module_forward.1} parent=1 // pred_check_branch
      %2793 = sbr.rel (0) target = $region57
    $region56: #{time_gan_module_forward.1} parent=1 // pred_region
      _
    $region57: #{time_gan_module_forward.1} parent=1 // pred_fallthru
      _
    // Predicated region
    $region58: #{time_gan_module_forward.1} parent=1 // pred_check
      _
    $region59: #{time_gan_module_forward.1} parent=1 // pred_check_branch
      %2795 = sbr.rel (0) target = $region61
    $region60: #{time_gan_module_forward.1} parent=1 // pred_region
      _
    $region61: #{time_gan_module_forward.1} parent=1 // pred_fallthru
      _
    // Predicated region
    $region62: #{time_gan_module_forward.1} parent=1 // pred_check
      _
    $region63: #{time_gan_module_forward.1} parent=1 // pred_check_branch
      %2797 = sbr.rel (0) target = $region65
    $region64: #{time_gan_module_forward.1} parent=1 // pred_region
      _
    $region65: #{time_gan_module_forward.1} parent=1 // pred_fallthru
      _
    // Predicated region
    $region66: #{time_gan_module_forward.1} parent=1 // pred_check
      _
    $region67: #{time_gan_module_forward.1} parent=1 // pred_check_branch
      %2799 = sbr.rel (0) target = $region69
    $region68: #{time_gan_module_forward.1} parent=1 // pred_region
      _
    $region69: #{time_gan_module_forward.1} parent=1 // pred_fallthru
      _
    %2800 = vsyncpa [#allocation6], 1
    %2801 = vsyncpa [#allocation8], 1

</llo_original>
